<compile_context>
chip_gen: v7x
topology: tpu7x:2x2x1
jax: 0.10.0
libtpu: 0.0.40
codegen_flags: <defaults>
</compile_context>

<pallas_src>
import numpy as np
import jax
import jax.numpy as jnp
from jax.experimental import pallas as pl
from jax.experimental.pallas import tpu as pltpu


# ----------------------------------------------------------------------------------
# Fused Pallas kernel (QKV proj + rotary + per-head attention + decay + out proj)
# ----------------------------------------------------------------------------------
def make_attn_mixer_kernel(L, C, num_heads, mixer, use_pe):
    hd = C // num_heads

    def kernel(*refs):
        if mixer == "Local":
            (x_ref, wq_ref, wk_ref, wv_ref, bq_ref, bk_ref, bv_ref,
             wp_ref, bp_ref, sin_ref, cos_ref, rot_ref, decay_ref, o_ref) = refs
        else:
            (x_ref, wq_ref, wk_ref, wv_ref, bq_ref, bk_ref, bv_ref,
             wp_ref, bp_ref, sin_ref, cos_ref, rot_ref, o_ref) = refs
            decay_ref = None

        x = x_ref[...]                                           # (L, C) -- one batch element

        # Full-width projections (qk scale already folded into Wq / bq).
        q = jnp.dot(x, wq_ref[...], preferred_element_type=jnp.float32) + bq_ref[...]
        k = jnp.dot(x, wk_ref[...], preferred_element_type=jnp.float32) + bk_ref[...]
        v = jnp.dot(x, wv_ref[...], preferred_element_type=jnp.float32) + bv_ref[...]

        if use_pe:
            # theta_shift(x) = x*cos + rotate_every_two(x)*sin ;  x @ rot == rotate_every_two(x)
            sin = sin_ref[...]                                   # (L, C)  head-tiled
            cos = cos_ref[...]                                   # (L, C)
            rot = rot_ref[...]                                   # (C, C)  block-diag pair swap
            q = q * cos + jnp.dot(q, rot, preferred_element_type=jnp.float32) * sin
            k = k * cos + jnp.dot(k, rot, preferred_element_type=jnp.float32) * sin

        # Per-head attention; heads are contiguous lane groups of width hd.
        ctx = []
        for h in range(num_heads):                               # statically unrolled
            lo, hi = h * hd, (h + 1) * hd
            qh, kh, vh = q[:, lo:hi], k[:, lo:hi], v[:, lo:hi]
            # logits (L, L) = qh @ kh^T (contract over head_dim, no explicit transpose)
            s = jax.lax.dot_general(qh, kh, (((1,), (1,)), ((), ())),
                                    preferred_element_type=jnp.float32)
            s = s - jnp.max(s, axis=-1, keepdims=True)
            e = jnp.exp(s)
            p = e * pl.reciprocal(jnp.sum(e, axis=-1, keepdims=True), approx=True)
            if mixer == "Local":
                # decay applied after softmax, no renormalization (matches the PyTorch module)
                p = p * decay_ref[h]
            ctx.append(jnp.dot(p, vh, preferred_element_type=jnp.float32))   # (L, hd)

        ctx = jnp.concatenate(ctx, axis=-1)                      # (L, C) == concat over heads
        y = jnp.dot(ctx, wp_ref[...], preferred_element_type=jnp.float32) + bp_ref[...]
        o_ref[...] = y.astype(o_ref.dtype)

    return kernel


def attn_mixer_forward(x, params, num_heads, mixer="Global", use_pe=True):
    N, H, W, C = x.shape
    L = H * W
    x3 = x.reshape(N, L, C)               # free reshape; no transposes in the wrapper

    kernel = make_attn_mixer_kernel(L, C, num_heads, mixer, use_pe)

    def rep(shape):                       # replicated (constant-across-grid) operand
        return pl.BlockSpec(shape, lambda b, _n=len(shape): (0,) * _n)

    in_specs = [
        pl.BlockSpec((None, L, C), lambda b: (b, 0, 0)),   # x (one batch per grid step)
        rep((C, C)), rep((C, C)), rep((C, C)),             # Wq, Wk, Wv
        rep((1, C)), rep((1, C)), rep((1, C)),             # bq, bk, bv
        rep((C, C)), rep((1, C)),                          # Wproj, bproj
        rep((L, C)), rep((L, C)),                          # sin, cos (head-tiled)
        rep((C, C)),                                       # rotate_every_two matrix
    ]
    args = [x3, params["w_q"], params["w_k"], params["w_v"],
            params["b_q"], params["b_k"], params["b_v"],
            params["w_proj"], params["b_proj"],
            params["sin_full"], params["cos_full"], params["rot"]]
    if mixer == "Local":
        in_specs.append(rep((num_heads, L, L)))            # precomputed decay buffer
        args.append(params["decay"])

    return pl.pallas_call(
        kernel,
        out_shape=jax.ShapeDtypeStruct((N, L, C), jnp.float32),
        grid=(N,),
        in_specs=in_specs,
        out_specs=pl.BlockSpec((None, L, C), lambda b: (b, 0, 0)),
        compiler_params=pltpu.CompilerParams(dimension_semantics=("parallel",)),
    )(*args)


# ----------------------------------------------------------------------------------
# Parameter / buffer construction (mirrors RetNetRelPos.__init__ + weight pre-splitting)
# ----------------------------------------------------------------------------------
def build_xpos_buffers(num_heads, head_dim, input_shape, mixer, local_type="r2"):
    H, W = input_shape
    L = H * W
    angle = 1.0 / 10000.0 ** np.linspace(0.0, 1.0, head_dim // 2)
    angle = np.repeat(angle, 2)                              # [a0, a0, a1, a1, ...]
    idx = np.arange(L)
    sin = np.sin(idx[:, None] * angle[None, :]).astype(np.float32)   # (L, hd)
    cos = np.cos(idx[:, None] * angle[None, :]).astype(np.float32)
    sin_full = np.tile(sin, (1, num_heads))                  # (L, C) head-tiled for the kernel
    cos_full = np.tile(cos, (1, num_heads))

    decay = None
    if mixer == "Local":
        # r2 local decay: exp(d_h * chebyshev_distance(query_pos, key_pos)), fixed buffer.
        d = np.log(1.0 - 2.0 ** (-5.0 - np.arange(num_heads, dtype=np.float64)))
        hh, ww = np.meshgrid(np.arange(H), np.arange(W), indexing="ij")
        ph, pw = hh.reshape(-1), ww.reshape(-1)
        cheb = np.maximum(np.abs(ph[:, None] - ph[None, :]),
                          np.abs(pw[:, None] - pw[None, :]))
        decay = np.exp(d[:, None, None] * cheb[None]).astype(np.float32)   # (heads, L, L)
        # TODO(synk): local_type 'r1'/'r3' decay variants not wired up; default 'r2' implemented.

    return sin, cos, sin_full, cos_full, decay


def build_rot_matrix(C):
    # x @ rot == rotate_every_two(x):  out[2i] = -x[2i+1], out[2i+1] = x[2i]
    rot = np.zeros((C, C), np.float32)
    for i in range(C // 2):
        rot[2 * i, 2 * i + 1] = 1.0
        rot[2 * i + 1, 2 * i] = -1.0
    return rot


def split_qkv_params(w_qkv, b_qkv, scale):
    """Split the (C, 3C) qkv weights (stored (in, out)) into per-projection (C, C) matrices and
    bake the qk scale into the q projection so the kernel never rescales at runtime."""
    C = w_qkv.shape[0]
    w = np.asarray(w_qkv, np.float32)
    b = np.asarray(b_qkv, np.float32)
    wq = (w[:, 0 * C:1 * C] * scale).astype(np.float32)
    wk = w[:, 1 * C:2 * C].copy()
    wv = w[:, 2 * C:3 * C].copy()
    bq = (b[0 * C:1 * C] * scale).reshape(1, C).astype(np.float32)
    bk = b[1 * C:2 * C].reshape(1, C).copy()
    bv = b[2 * C:3 * C].reshape(1, C).copy()
    return wq, wk, wv, bq, bk, bv


# ----------------------------------------------------------------------------------
# Pure-JAX reference (mirrors the PyTorch forward literally) for verification
# ----------------------------------------------------------------------------------
def _rotate_every_two_ref(x):
    x1 = x[..., ::2]
    x2 = x[..., 1::2]
    return jnp.stack((-x2, x1), axis=-1).reshape(x.shape)


def reference_forward(x, w_qkv, b_qkv, w_proj, b_proj, sin, cos, decay,
                      num_heads, mixer="Global", use_pe=True):
    hi = jax.lax.Precision.HIGHEST
    N, H, W, C = x.shape
    L = H * W
    hd = C // num_heads
    scale = hd ** (-0.5)
    xf = x.reshape(N * L, C)
    qkv = jnp.dot(xf, w_qkv, precision=hi) + b_qkv
    qkv = qkv.reshape(N, L, 3, num_heads, hd).transpose(2, 0, 3, 1, 4)
    q, k, v = qkv[0] * scale, qkv[1], qkv[2]
    if use_pe:
        qr = q * cos + _rotate_every_two_ref(q) * sin
        kr = k * cos + _rotate_every_two_ref(k) * sin
    else:
        qr, kr = q, k
    attn = jnp.einsum("bhqd,bhkd->bhqk", qr, kr, precision=hi)
    attn = jax.nn.softmax(attn, axis=-1)
    if mixer == "Local":
        attn = attn * decay
    out = jnp.einsum("bhqk,bhkd->bhqd", attn, v, precision=hi)
    out = out.transpose(0, 2, 1, 3).reshape(N, L, C)
    return jnp.dot(out, w_proj, precision=hi) + b_proj


# ----------------------------------------------------------------------------------
if __name__ == "__main__":
    # Small config consistent with the module: embed_dims=64, num_heads=8, input_shape=[4, 8]
    N, H, W = 2, 4, 8
    C, num_heads = 64, 8
    hd = C // num_heads
    scale = hd ** (-0.5)

    key = jax.random.PRNGKey(0)
    k1, k2, k3, k4 = jax.random.split(key, 4)
    x = jax.random.normal(k1, (N, H, W, C), jnp.float32)

    # nn.Linear parameters, stored transposed as (in, out). qkv_bias=False -> zero bias.
    w_qkv = jax.random.normal(k2, (C, 3 * C), jnp.float32) * 0.05
    b_qkv = jnp.zeros((3 * C,), jnp.float32)
    w_proj = jax.random.normal(k3, (C, C), jnp.float32) * 0.05
    b_proj = jax.random.normal(k4, (1, C), jnp.float32) * 0.05

    rot = build_rot_matrix(C)
    wq, wk, wv, bq, bk, bv = split_qkv_params(np.asarray(w_qkv), np.asarray(b_qkv), scale)

    for mixer in ("Global", "Local"):
        sin, cos, sin_full, cos_full, decay = build_xpos_buffers(num_heads, hd, (H, W), mixer)
        params = dict(
            w_q=jnp.asarray(wq), w_k=jnp.asarray(wk), w_v=jnp.asarray(wv),
            b_q=jnp.asarray(bq), b_k=jnp.asarray(bk), b_v=jnp.asarray(bv),
            w_proj=w_proj, b_proj=b_proj,
            sin_full=jnp.asarray(sin_full), cos_full=jnp.asarray(cos_full),
            rot=jnp.asarray(rot),
        )
        if mixer == "Local":
            params["decay"] = jnp.asarray(decay)

        y = attn_mixer_forward(x, params, num_heads, mixer=mixer, use_pe=True)
        y = jax.block_until_ready(y)

        decay_ref = None if decay is None else jnp.asarray(decay)[None]   # (1, heads, L, L)
        y_ref = jax.block_until_ready(
            reference_forward(x, w_qkv, b_qkv, w_proj, b_proj,
                              jnp.asarray(sin), jnp.asarray(cos), decay_ref,
                              num_heads, mixer=mixer, use_pe=True)
        )

        assert y.shape == (N, H * W, C)
        assert np.allclose(np.asarray(y), np.asarray(y_ref), rtol=1e-2, atol=1e-2), \
            f"mismatch for mixer={mixer}"

    print("KERNEL_OK")
</pallas_src>

<mosaic_0001>
module attributes {stable_mosaic.version = 11 : i64} {
  func.func @kernel(%arg0: i32, %arg1: memref<1x32x64xf32, #tpu.memory_space<vmem>>, %arg2: memref<64x64xf32, #tpu.memory_space<vmem>>, %arg3: memref<64x64xf32, #tpu.memory_space<vmem>>, %arg4: memref<64x64xf32, #tpu.memory_space<vmem>>, %arg5: memref<1x64xf32, #tpu.memory_space<vmem>>, %arg6: memref<1x64xf32, #tpu.memory_space<vmem>>, %arg7: memref<1x64xf32, #tpu.memory_space<vmem>>, %arg8: memref<64x64xf32, #tpu.memory_space<vmem>>, %arg9: memref<1x64xf32, #tpu.memory_space<vmem>>, %arg10: memref<32x64xf32, #tpu.memory_space<vmem>>, %arg11: memref<32x64xf32, #tpu.memory_space<vmem>>, %arg12: memref<64x64xf32, #tpu.memory_space<vmem>>, %arg13: memref<1x32x64xf32, #tpu.memory_space<vmem>>) attributes {dimension_semantics = [#tpu.dimension_semantics<parallel>], iteration_bounds = array<i64: 2>, scalar_prefetch = 0 : i64, scratch_operands = 0 : i64, tpu.core_type = #tpu.core_type<tc>, window_params = [{transform_indices = @transform_0, window_bounds = array<i64: 1, 32, 64>}, {pipeline_mode = #tpu.pipeline_mode<synchronous>, transform_indices = @transform_1, window_bounds = array<i64: 64, 64>}, {pipeline_mode = #tpu.pipeline_mode<synchronous>, transform_indices = @transform_2, window_bounds = array<i64: 64, 64>}, {pipeline_mode = #tpu.pipeline_mode<synchronous>, transform_indices = @transform_3, window_bounds = array<i64: 64, 64>}, {pipeline_mode = #tpu.pipeline_mode<synchronous>, transform_indices = @transform_4, window_bounds = array<i64: 1, 64>}, {pipeline_mode = #tpu.pipeline_mode<synchronous>, transform_indices = @transform_5, window_bounds = array<i64: 1, 64>}, {pipeline_mode = #tpu.pipeline_mode<synchronous>, transform_indices = @transform_6, window_bounds = array<i64: 1, 64>}, {pipeline_mode = #tpu.pipeline_mode<synchronous>, transform_indices = @transform_7, window_bounds = array<i64: 64, 64>}, {pipeline_mode = #tpu.pipeline_mode<synchronous>, transform_indices = @transform_8, window_bounds = array<i64: 1, 64>}, {pipeline_mode = #tpu.pipeline_mode<synchronous>, transform_indices = @transform_9, window_bounds = array<i64: 32, 64>}, {pipeline_mode = #tpu.pipeline_mode<synchronous>, transform_indices = @transform_10, window_bounds = array<i64: 32, 64>}, {pipeline_mode = #tpu.pipeline_mode<synchronous>, transform_indices = @transform_11, window_bounds = array<i64: 64, 64>}, {transform_indices = @transform_12, window_bounds = array<i64: 1, 32, 64>}]} {
    %c0 = arith.constant 0 : index
    %c0_0 = arith.constant 0 : index
    %c0_1 = arith.constant 0 : index
    %0 = vector.load %arg1[%c0, %c0_0, %c0_1] : memref<1x32x64xf32, #tpu.memory_space<vmem>>, vector<1x32x64xf32>
    %1 = vector.shape_cast %0 : vector<1x32x64xf32> to vector<32x64xf32>
    %c0_2 = arith.constant 0 : index
    %c0_3 = arith.constant 0 : index
    %2 = vector.load %arg2[%c0_2, %c0_3] : memref<64x64xf32, #tpu.memory_space<vmem>>, vector<64x64xf32>
    %cst = arith.constant dense<0.000000e+00> : vector<32x64xf32>
    %3 = tpu.matmul %1, %2, %cst {dimension_numbers = #tpu.dot_dimension_numbers<[1], [0], [0], [1], [0, 0, 1, 1], [], []>} : vector<32x64xf32>, vector<64x64xf32>, vector<32x64xf32> -> vector<32x64xf32>
    %c0_4 = arith.constant 0 : index
    %c0_5 = arith.constant 0 : index
    %4 = vector.load %arg5[%c0_4, %c0_5] : memref<1x64xf32, #tpu.memory_space<vmem>>, vector<1x64xf32>
    %5 = vector.broadcast %4 : vector<1x64xf32> to vector<32x64xf32>
    %6 = arith.addf %3, %5 : vector<32x64xf32>
    %c0_6 = arith.constant 0 : index
    %c0_7 = arith.constant 0 : index
    %7 = vector.load %arg3[%c0_6, %c0_7] : memref<64x64xf32, #tpu.memory_space<vmem>>, vector<64x64xf32>
    %cst_8 = arith.constant dense<0.000000e+00> : vector<32x64xf32>
    %8 = tpu.matmul %1, %7, %cst_8 {dimension_numbers = #tpu.dot_dimension_numbers<[1], [0], [0], [1], [0, 0, 1, 1], [], []>} : vector<32x64xf32>, vector<64x64xf32>, vector<32x64xf32> -> vector<32x64xf32>
    %c0_9 = arith.constant 0 : index
    %c0_10 = arith.constant 0 : index
    %9 = vector.load %arg6[%c0_9, %c0_10] : memref<1x64xf32, #tpu.memory_space<vmem>>, vector<1x64xf32>
    %10 = vector.broadcast %9 : vector<1x64xf32> to vector<32x64xf32>
    %11 = arith.addf %8, %10 : vector<32x64xf32>
    %c0_11 = arith.constant 0 : index
    %c0_12 = arith.constant 0 : index
    %12 = vector.load %arg4[%c0_11, %c0_12] : memref<64x64xf32, #tpu.memory_space<vmem>>, vector<64x64xf32>
    %cst_13 = arith.constant dense<0.000000e+00> : vector<32x64xf32>
    %13 = tpu.matmul %1, %12, %cst_13 {dimension_numbers = #tpu.dot_dimension_numbers<[1], [0], [0], [1], [0, 0, 1, 1], [], []>} : vector<32x64xf32>, vector<64x64xf32>, vector<32x64xf32> -> vector<32x64xf32>
    %c0_14 = arith.constant 0 : index
    %c0_15 = arith.constant 0 : index
    %14 = vector.load %arg7[%c0_14, %c0_15] : memref<1x64xf32, #tpu.memory_space<vmem>>, vector<1x64xf32>
    %15 = vector.broadcast %14 : vector<1x64xf32> to vector<32x64xf32>
    %16 = arith.addf %13, %15 : vector<32x64xf32>
    %c0_16 = arith.constant 0 : index
    %c0_17 = arith.constant 0 : index
    %17 = vector.load %arg10[%c0_16, %c0_17] : memref<32x64xf32, #tpu.memory_space<vmem>>, vector<32x64xf32>
    %c0_18 = arith.constant 0 : index
    %c0_19 = arith.constant 0 : index
    %18 = vector.load %arg11[%c0_18, %c0_19] : memref<32x64xf32, #tpu.memory_space<vmem>>, vector<32x64xf32>
    %c0_20 = arith.constant 0 : index
    %c0_21 = arith.constant 0 : index
    %19 = vector.load %arg12[%c0_20, %c0_21] : memref<64x64xf32, #tpu.memory_space<vmem>>, vector<64x64xf32>
    %20 = arith.mulf %6, %18 : vector<32x64xf32>
    %cst_22 = arith.constant dense<0.000000e+00> : vector<32x64xf32>
    %21 = tpu.matmul %6, %19, %cst_22 {dimension_numbers = #tpu.dot_dimension_numbers<[1], [0], [0], [1], [0, 0, 1, 1], [], []>} : vector<32x64xf32>, vector<64x64xf32>, vector<32x64xf32> -> vector<32x64xf32>
    %22 = arith.mulf %21, %17 : vector<32x64xf32>
    %23 = arith.addf %20, %22 : vector<32x64xf32>
    %24 = arith.mulf %11, %18 : vector<32x64xf32>
    %cst_23 = arith.constant dense<0.000000e+00> : vector<32x64xf32>
    %25 = tpu.matmul %11, %19, %cst_23 {dimension_numbers = #tpu.dot_dimension_numbers<[1], [0], [0], [1], [0, 0, 1, 1], [], []>} : vector<32x64xf32>, vector<64x64xf32>, vector<32x64xf32> -> vector<32x64xf32>
    %26 = arith.mulf %25, %17 : vector<32x64xf32>
    %27 = arith.addf %24, %26 : vector<32x64xf32>
    %28 = vector.extract_strided_slice %23 {offsets = [0, 0], sizes = [32, 8], strides = [1, 1]} : vector<32x64xf32> to vector<32x8xf32>
    %29 = vector.extract_strided_slice %27 {offsets = [0, 0], sizes = [32, 8], strides = [1, 1]} : vector<32x64xf32> to vector<32x8xf32>
    %30 = vector.extract_strided_slice %16 {offsets = [0, 0], sizes = [32, 8], strides = [1, 1]} : vector<32x64xf32> to vector<32x8xf32>
    %cst_24 = arith.constant dense<0.000000e+00> : vector<32x32xf32>
    %31 = tpu.matmul %28, %29, %cst_24 {dimension_numbers = #tpu.dot_dimension_numbers<[1], [1], [0], [0], [0, 0, 1, 0], [], []>} : vector<32x8xf32>, vector<32x8xf32>, vector<32x32xf32> -> vector<32x32xf32>
    %cst_25 = arith.constant dense<0xFF800000> : vector<32xf32>
    %32 = vector.multi_reduction <maximumf>, %31, %cst_25 [1] : vector<32x32xf32> to vector<32xf32>
    %33 = vector.shape_cast %32 : vector<32xf32> to vector<32x1xf32>
    %34 = vector.broadcast %33 : vector<32x1xf32> to vector<32x32xf32>
    %35 = arith.subf %31, %34 : vector<32x32xf32>
    %36 = math.exp %35 : vector<32x32xf32>
    %cst_26 = arith.constant dense<0.000000e+00> : vector<32xf32>
    %37 = vector.multi_reduction <add>, %36, %cst_26 [1] : vector<32x32xf32> to vector<32xf32>
    %38 = vector.shape_cast %37 : vector<32xf32> to vector<32x1xf32>
    %39 = tpu.reciprocal %38 {approx = true} : vector<32x1xf32> -> vector<32x1xf32>
    %40 = vector.broadcast %39 : vector<32x1xf32> to vector<32x32xf32>
    %41 = arith.mulf %36, %40 : vector<32x32xf32>
    %cst_27 = arith.constant dense<0.000000e+00> : vector<32x8xf32>
    %42 = tpu.matmul %41, %30, %cst_27 {dimension_numbers = #tpu.dot_dimension_numbers<[1], [0], [0], [1], [0, 0, 1, 1], [], []>} : vector<32x32xf32>, vector<32x8xf32>, vector<32x8xf32> -> vector<32x8xf32>
    %43 = vector.extract_strided_slice %23 {offsets = [0, 8], sizes = [32, 8], strides = [1, 1]} : vector<32x64xf32> to vector<32x8xf32>
    %44 = vector.extract_strided_slice %27 {offsets = [0, 8], sizes = [32, 8], strides = [1, 1]} : vector<32x64xf32> to vector<32x8xf32>
    %45 = vector.extract_strided_slice %16 {offsets = [0, 8], sizes = [32, 8], strides = [1, 1]} : vector<32x64xf32> to vector<32x8xf32>
    %cst_28 = arith.constant dense<0.000000e+00> : vector<32x32xf32>
    %46 = tpu.matmul %43, %44, %cst_28 {dimension_numbers = #tpu.dot_dimension_numbers<[1], [1], [0], [0], [0, 0, 1, 0], [], []>} : vector<32x8xf32>, vector<32x8xf32>, vector<32x32xf32> -> vector<32x32xf32>
    %cst_29 = arith.constant dense<0xFF800000> : vector<32xf32>
    %47 = vector.multi_reduction <maximumf>, %46, %cst_29 [1] : vector<32x32xf32> to vector<32xf32>
    %48 = vector.shape_cast %47 : vector<32xf32> to vector<32x1xf32>
    %49 = vector.broadcast %48 : vector<32x1xf32> to vector<32x32xf32>
    %50 = arith.subf %46, %49 : vector<32x32xf32>
    %51 = math.exp %50 : vector<32x32xf32>
    %cst_30 = arith.constant dense<0.000000e+00> : vector<32xf32>
    %52 = vector.multi_reduction <add>, %51, %cst_30 [1] : vector<32x32xf32> to vector<32xf32>
    %53 = vector.shape_cast %52 : vector<32xf32> to vector<32x1xf32>
    %54 = tpu.reciprocal %53 {approx = true} : vector<32x1xf32> -> vector<32x1xf32>
    %55 = vector.broadcast %54 : vector<32x1xf32> to vector<32x32xf32>
    %56 = arith.mulf %51, %55 : vector<32x32xf32>
    %cst_31 = arith.constant dense<0.000000e+00> : vector<32x8xf32>
    %57 = tpu.matmul %56, %45, %cst_31 {dimension_numbers = #tpu.dot_dimension_numbers<[1], [0], [0], [1], [0, 0, 1, 1], [], []>} : vector<32x32xf32>, vector<32x8xf32>, vector<32x8xf32> -> vector<32x8xf32>
    %58 = vector.extract_strided_slice %23 {offsets = [0, 16], sizes = [32, 8], strides = [1, 1]} : vector<32x64xf32> to vector<32x8xf32>
    %59 = vector.extract_strided_slice %27 {offsets = [0, 16], sizes = [32, 8], strides = [1, 1]} : vector<32x64xf32> to vector<32x8xf32>
    %60 = vector.extract_strided_slice %16 {offsets = [0, 16], sizes = [32, 8], strides = [1, 1]} : vector<32x64xf32> to vector<32x8xf32>
    %cst_32 = arith.constant dense<0.000000e+00> : vector<32x32xf32>
    %61 = tpu.matmul %58, %59, %cst_32 {dimension_numbers = #tpu.dot_dimension_numbers<[1], [1], [0], [0], [0, 0, 1, 0], [], []>} : vector<32x8xf32>, vector<32x8xf32>, vector<32x32xf32> -> vector<32x32xf32>
    %cst_33 = arith.constant dense<0xFF800000> : vector<32xf32>
    %62 = vector.multi_reduction <maximumf>, %61, %cst_33 [1] : vector<32x32xf32> to vector<32xf32>
    %63 = vector.shape_cast %62 : vector<32xf32> to vector<32x1xf32>
    %64 = vector.broadcast %63 : vector<32x1xf32> to vector<32x32xf32>
    %65 = arith.subf %61, %64 : vector<32x32xf32>
    %66 = math.exp %65 : vector<32x32xf32>
    %cst_34 = arith.constant dense<0.000000e+00> : vector<32xf32>
    %67 = vector.multi_reduction <add>, %66, %cst_34 [1] : vector<32x32xf32> to vector<32xf32>
    %68 = vector.shape_cast %67 : vector<32xf32> to vector<32x1xf32>
    %69 = tpu.reciprocal %68 {approx = true} : vector<32x1xf32> -> vector<32x1xf32>
    %70 = vector.broadcast %69 : vector<32x1xf32> to vector<32x32xf32>
    %71 = arith.mulf %66, %70 : vector<32x32xf32>
    %cst_35 = arith.constant dense<0.000000e+00> : vector<32x8xf32>
    %72 = tpu.matmul %71, %60, %cst_35 {dimension_numbers = #tpu.dot_dimension_numbers<[1], [0], [0], [1], [0, 0, 1, 1], [], []>} : vector<32x32xf32>, vector<32x8xf32>, vector<32x8xf32> -> vector<32x8xf32>
    %73 = vector.extract_strided_slice %23 {offsets = [0, 24], sizes = [32, 8], strides = [1, 1]} : vector<32x64xf32> to vector<32x8xf32>
    %74 = vector.extract_strided_slice %27 {offsets = [0, 24], sizes = [32, 8], strides = [1, 1]} : vector<32x64xf32> to vector<32x8xf32>
    %75 = vector.extract_strided_slice %16 {offsets = [0, 24], sizes = [32, 8], strides = [1, 1]} : vector<32x64xf32> to vector<32x8xf32>
    %cst_36 = arith.constant dense<0.000000e+00> : vector<32x32xf32>
    %76 = tpu.matmul %73, %74, %cst_36 {dimension_numbers = #tpu.dot_dimension_numbers<[1], [1], [0], [0], [0, 0, 1, 0], [], []>} : vector<32x8xf32>, vector<32x8xf32>, vector<32x32xf32> -> vector<32x32xf32>
    %cst_37 = arith.constant dense<0xFF800000> : vector<32xf32>
    %77 = vector.multi_reduction <maximumf>, %76, %cst_37 [1] : vector<32x32xf32> to vector<32xf32>
    %78 = vector.shape_cast %77 : vector<32xf32> to vector<32x1xf32>
    %79 = vector.broadcast %78 : vector<32x1xf32> to vector<32x32xf32>
    %80 = arith.subf %76, %79 : vector<32x32xf32>
    %81 = math.exp %80 : vector<32x32xf32>
    %cst_38 = arith.constant dense<0.000000e+00> : vector<32xf32>
    %82 = vector.multi_reduction <add>, %81, %cst_38 [1] : vector<32x32xf32> to vector<32xf32>
    %83 = vector.shape_cast %82 : vector<32xf32> to vector<32x1xf32>
    %84 = tpu.reciprocal %83 {approx = true} : vector<32x1xf32> -> vector<32x1xf32>
    %85 = vector.broadcast %84 : vector<32x1xf32> to vector<32x32xf32>
    %86 = arith.mulf %81, %85 : vector<32x32xf32>
    %cst_39 = arith.constant dense<0.000000e+00> : vector<32x8xf32>
    %87 = tpu.matmul %86, %75, %cst_39 {dimension_numbers = #tpu.dot_dimension_numbers<[1], [0], [0], [1], [0, 0, 1, 1], [], []>} : vector<32x32xf32>, vector<32x8xf32>, vector<32x8xf32> -> vector<32x8xf32>
    %88 = vector.extract_strided_slice %23 {offsets = [0, 32], sizes = [32, 8], strides = [1, 1]} : vector<32x64xf32> to vector<32x8xf32>
    %89 = vector.extract_strided_slice %27 {offsets = [0, 32], sizes = [32, 8], strides = [1, 1]} : vector<32x64xf32> to vector<32x8xf32>
    %90 = vector.extract_strided_slice %16 {offsets = [0, 32], sizes = [32, 8], strides = [1, 1]} : vector<32x64xf32> to vector<32x8xf32>
    %cst_40 = arith.constant dense<0.000000e+00> : vector<32x32xf32>
    %91 = tpu.matmul %88, %89, %cst_40 {dimension_numbers = #tpu.dot_dimension_numbers<[1], [1], [0], [0], [0, 0, 1, 0], [], []>} : vector<32x8xf32>, vector<32x8xf32>, vector<32x32xf32> -> vector<32x32xf32>
    %cst_41 = arith.constant dense<0xFF800000> : vector<32xf32>
    %92 = vector.multi_reduction <maximumf>, %91, %cst_41 [1] : vector<32x32xf32> to vector<32xf32>
    %93 = vector.shape_cast %92 : vector<32xf32> to vector<32x1xf32>
    %94 = vector.broadcast %93 : vector<32x1xf32> to vector<32x32xf32>
    %95 = arith.subf %91, %94 : vector<32x32xf32>
    %96 = math.exp %95 : vector<32x32xf32>
    %cst_42 = arith.constant dense<0.000000e+00> : vector<32xf32>
    %97 = vector.multi_reduction <add>, %96, %cst_42 [1] : vector<32x32xf32> to vector<32xf32>
    %98 = vector.shape_cast %97 : vector<32xf32> to vector<32x1xf32>
    %99 = tpu.reciprocal %98 {approx = true} : vector<32x1xf32> -> vector<32x1xf32>
    %100 = vector.broadcast %99 : vector<32x1xf32> to vector<32x32xf32>
    %101 = arith.mulf %96, %100 : vector<32x32xf32>
    %cst_43 = arith.constant dense<0.000000e+00> : vector<32x8xf32>
    %102 = tpu.matmul %101, %90, %cst_43 {dimension_numbers = #tpu.dot_dimension_numbers<[1], [0], [0], [1], [0, 0, 1, 1], [], []>} : vector<32x32xf32>, vector<32x8xf32>, vector<32x8xf32> -> vector<32x8xf32>
    %103 = vector.extract_strided_slice %23 {offsets = [0, 40], sizes = [32, 8], strides = [1, 1]} : vector<32x64xf32> to vector<32x8xf32>
    %104 = vector.extract_strided_slice %27 {offsets = [0, 40], sizes = [32, 8], strides = [1, 1]} : vector<32x64xf32> to vector<32x8xf32>
    %105 = vector.extract_strided_slice %16 {offsets = [0, 40], sizes = [32, 8], strides = [1, 1]} : vector<32x64xf32> to vector<32x8xf32>
    %cst_44 = arith.constant dense<0.000000e+00> : vector<32x32xf32>
    %106 = tpu.matmul %103, %104, %cst_44 {dimension_numbers = #tpu.dot_dimension_numbers<[1], [1], [0], [0], [0, 0, 1, 0], [], []>} : vector<32x8xf32>, vector<32x8xf32>, vector<32x32xf32> -> vector<32x32xf32>
    %cst_45 = arith.constant dense<0xFF800000> : vector<32xf32>
    %107 = vector.multi_reduction <maximumf>, %106, %cst_45 [1] : vector<32x32xf32> to vector<32xf32>
    %108 = vector.shape_cast %107 : vector<32xf32> to vector<32x1xf32>
    %109 = vector.broadcast %108 : vector<32x1xf32> to vector<32x32xf32>
    %110 = arith.subf %106, %109 : vector<32x32xf32>
    %111 = math.exp %110 : vector<32x32xf32>
    %cst_46 = arith.constant dense<0.000000e+00> : vector<32xf32>
    %112 = vector.multi_reduction <add>, %111, %cst_46 [1] : vector<32x32xf32> to vector<32xf32>
    %113 = vector.shape_cast %112 : vector<32xf32> to vector<32x1xf32>
    %114 = tpu.reciprocal %113 {approx = true} : vector<32x1xf32> -> vector<32x1xf32>
    %115 = vector.broadcast %114 : vector<32x1xf32> to vector<32x32xf32>
    %116 = arith.mulf %111, %115 : vector<32x32xf32>
    %cst_47 = arith.constant dense<0.000000e+00> : vector<32x8xf32>
    %117 = tpu.matmul %116, %105, %cst_47 {dimension_numbers = #tpu.dot_dimension_numbers<[1], [0], [0], [1], [0, 0, 1, 1], [], []>} : vector<32x32xf32>, vector<32x8xf32>, vector<32x8xf32> -> vector<32x8xf32>
    %118 = vector.extract_strided_slice %23 {offsets = [0, 48], sizes = [32, 8], strides = [1, 1]} : vector<32x64xf32> to vector<32x8xf32>
    %119 = vector.extract_strided_slice %27 {offsets = [0, 48], sizes = [32, 8], strides = [1, 1]} : vector<32x64xf32> to vector<32x8xf32>
    %120 = vector.extract_strided_slice %16 {offsets = [0, 48], sizes = [32, 8], strides = [1, 1]} : vector<32x64xf32> to vector<32x8xf32>
    %cst_48 = arith.constant dense<0.000000e+00> : vector<32x32xf32>
    %121 = tpu.matmul %118, %119, %cst_48 {dimension_numbers = #tpu.dot_dimension_numbers<[1], [1], [0], [0], [0, 0, 1, 0], [], []>} : vector<32x8xf32>, vector<32x8xf32>, vector<32x32xf32> -> vector<32x32xf32>
    %cst_49 = arith.constant dense<0xFF800000> : vector<32xf32>
    %122 = vector.multi_reduction <maximumf>, %121, %cst_49 [1] : vector<32x32xf32> to vector<32xf32>
    %123 = vector.shape_cast %122 : vector<32xf32> to vector<32x1xf32>
    %124 = vector.broadcast %123 : vector<32x1xf32> to vector<32x32xf32>
    %125 = arith.subf %121, %124 : vector<32x32xf32>
    %126 = math.exp %125 : vector<32x32xf32>
    %cst_50 = arith.constant dense<0.000000e+00> : vector<32xf32>
    %127 = vector.multi_reduction <add>, %126, %cst_50 [1] : vector<32x32xf32> to vector<32xf32>
    %128 = vector.shape_cast %127 : vector<32xf32> to vector<32x1xf32>
    %129 = tpu.reciprocal %128 {approx = true} : vector<32x1xf32> -> vector<32x1xf32>
    %130 = vector.broadcast %129 : vector<32x1xf32> to vector<32x32xf32>
    %131 = arith.mulf %126, %130 : vector<32x32xf32>
    %cst_51 = arith.constant dense<0.000000e+00> : vector<32x8xf32>
    %132 = tpu.matmul %131, %120, %cst_51 {dimension_numbers = #tpu.dot_dimension_numbers<[1], [0], [0], [1], [0, 0, 1, 1], [], []>} : vector<32x32xf32>, vector<32x8xf32>, vector<32x8xf32> -> vector<32x8xf32>
    %133 = vector.extract_strided_slice %23 {offsets = [0, 56], sizes = [32, 8], strides = [1, 1]} : vector<32x64xf32> to vector<32x8xf32>
    %134 = vector.extract_strided_slice %27 {offsets = [0, 56], sizes = [32, 8], strides = [1, 1]} : vector<32x64xf32> to vector<32x8xf32>
    %135 = vector.extract_strided_slice %16 {offsets = [0, 56], sizes = [32, 8], strides = [1, 1]} : vector<32x64xf32> to vector<32x8xf32>
    %cst_52 = arith.constant dense<0.000000e+00> : vector<32x32xf32>
    %136 = tpu.matmul %133, %134, %cst_52 {dimension_numbers = #tpu.dot_dimension_numbers<[1], [1], [0], [0], [0, 0, 1, 0], [], []>} : vector<32x8xf32>, vector<32x8xf32>, vector<32x32xf32> -> vector<32x32xf32>
    %cst_53 = arith.constant dense<0xFF800000> : vector<32xf32>
    %137 = vector.multi_reduction <maximumf>, %136, %cst_53 [1] : vector<32x32xf32> to vector<32xf32>
    %138 = vector.shape_cast %137 : vector<32xf32> to vector<32x1xf32>
    %139 = vector.broadcast %138 : vector<32x1xf32> to vector<32x32xf32>
    %140 = arith.subf %136, %139 : vector<32x32xf32>
    %141 = math.exp %140 : vector<32x32xf32>
    %cst_54 = arith.constant dense<0.000000e+00> : vector<32xf32>
    %142 = vector.multi_reduction <add>, %141, %cst_54 [1] : vector<32x32xf32> to vector<32xf32>
    %143 = vector.shape_cast %142 : vector<32xf32> to vector<32x1xf32>
    %144 = tpu.reciprocal %143 {approx = true} : vector<32x1xf32> -> vector<32x1xf32>
    %145 = vector.broadcast %144 : vector<32x1xf32> to vector<32x32xf32>
    %146 = arith.mulf %141, %145 : vector<32x32xf32>
    %cst_55 = arith.constant dense<0.000000e+00> : vector<32x8xf32>
    %147 = tpu.matmul %146, %135, %cst_55 {dimension_numbers = #tpu.dot_dimension_numbers<[1], [0], [0], [1], [0, 0, 1, 1], [], []>} : vector<32x32xf32>, vector<32x8xf32>, vector<32x8xf32> -> vector<32x8xf32>
    %148 = tpu.concatenate %42, %57, %72, %87, %102, %117, %132, %147 in 1 : vector<32x8xf32>, vector<32x8xf32>, vector<32x8xf32>, vector<32x8xf32>, vector<32x8xf32>, vector<32x8xf32>, vector<32x8xf32>, vector<32x8xf32> -> vector<32x64xf32>
    %c0_56 = arith.constant 0 : index
    %c0_57 = arith.constant 0 : index
    %149 = vector.load %arg8[%c0_56, %c0_57] : memref<64x64xf32, #tpu.memory_space<vmem>>, vector<64x64xf32>
    %cst_58 = arith.constant dense<0.000000e+00> : vector<32x64xf32>
    %150 = tpu.matmul %148, %149, %cst_58 {dimension_numbers = #tpu.dot_dimension_numbers<[1], [0], [0], [1], [0, 0, 1, 1], [], []>} : vector<32x64xf32>, vector<64x64xf32>, vector<32x64xf32> -> vector<32x64xf32>
    %c0_59 = arith.constant 0 : index
    %c0_60 = arith.constant 0 : index
    %151 = vector.load %arg9[%c0_59, %c0_60] : memref<1x64xf32, #tpu.memory_space<vmem>>, vector<1x64xf32>
    %152 = vector.broadcast %151 : vector<1x64xf32> to vector<32x64xf32>
    %153 = arith.addf %150, %152 : vector<32x64xf32>
    %c0_61 = arith.constant 0 : index
    %c0_62 = arith.constant 0 : index
    %c0_63 = arith.constant 0 : index
    %154 = vector.load %arg13[%c0_61, %c0_62, %c0_63] : memref<1x32x64xf32, #tpu.memory_space<vmem>>, vector<1x32x64xf32>
    %155 = vector.shape_cast %154 : vector<1x32x64xf32> to vector<32x64xf32>
    %156 = vector.shape_cast %153 : vector<32x64xf32> to vector<1x32x64xf32>
    tpu.vector_store %arg13[%c0_61, %c0_62, %c0_63], %156 {strides = array<i32>} : memref<1x32x64xf32, #tpu.memory_space<vmem>>, vector<1x32x64xf32>,
    return
  }
  func.func @transform_0(%arg0: i32) -> (i32, i32, i32) {
    %c0_i32 = arith.constant 0 : i32
    %c0_i32_0 = arith.constant 0 : i32
    %c0_i32_1 = arith.constant 0 : i32
    return %arg0, %c0_i32, %c0_i32_0 : i32, i32, i32
  }
  func.func @transform_1(%arg0: i32) -> (i32, i32) {
    %c0_i32 = arith.constant 0 : i32
    %c0_i32_0 = arith.constant 0 : i32
    %c0_i32_1 = arith.constant 0 : i32
    return %c0_i32, %c0_i32_0 : i32, i32
  }
  func.func @transform_2(%arg0: i32) -> (i32, i32) {
    %c0_i32 = arith.constant 0 : i32
    %c0_i32_0 = arith.constant 0 : i32
    %c0_i32_1 = arith.constant 0 : i32
    return %c0_i32, %c0_i32_0 : i32, i32
  }
  func.func @transform_3(%arg0: i32) -> (i32, i32) {
    %c0_i32 = arith.constant 0 : i32
    %c0_i32_0 = arith.constant 0 : i32
    %c0_i32_1 = arith.constant 0 : i32
    return %c0_i32, %c0_i32_0 : i32, i32
  }
  func.func @transform_4(%arg0: i32) -> (i32, i32) {
    %c0_i32 = arith.constant 0 : i32
    %c0_i32_0 = arith.constant 0 : i32
    %c0_i32_1 = arith.constant 0 : i32
    return %c0_i32, %c0_i32_0 : i32, i32
  }
  func.func @transform_5(%arg0: i32) -> (i32, i32) {
    %c0_i32 = arith.constant 0 : i32
    %c0_i32_0 = arith.constant 0 : i32
    %c0_i32_1 = arith.constant 0 : i32
    return %c0_i32, %c0_i32_0 : i32, i32
  }
  func.func @transform_6(%arg0: i32) -> (i32, i32) {
    %c0_i32 = arith.constant 0 : i32
    %c0_i32_0 = arith.constant 0 : i32
    %c0_i32_1 = arith.constant 0 : i32
    return %c0_i32, %c0_i32_0 : i32, i32
  }
  func.func @transform_7(%arg0: i32) -> (i32, i32) {
    %c0_i32 = arith.constant 0 : i32
    %c0_i32_0 = arith.constant 0 : i32
    %c0_i32_1 = arith.constant 0 : i32
    return %c0_i32, %c0_i32_0 : i32, i32
  }
  func.func @transform_8(%arg0: i32) -> (i32, i32) {
    %c0_i32 = arith.constant 0 : i32
    %c0_i32_0 = arith.constant 0 : i32
    %c0_i32_1 = arith.constant 0 : i32
    return %c0_i32, %c0_i32_0 : i32, i32
  }
  func.func @transform_9(%arg0: i32) -> (i32, i32) {
    %c0_i32 = arith.constant 0 : i32
    %c0_i32_0 = arith.constant 0 : i32
    %c0_i32_1 = arith.constant 0 : i32
    return %c0_i32, %c0_i32_0 : i32, i32
  }
  func.func @transform_10(%arg0: i32) -> (i32, i32) {
    %c0_i32 = arith.constant 0 : i32
    %c0_i32_0 = arith.constant 0 : i32
    %c0_i32_1 = arith.constant 0 : i32
    return %c0_i32, %c0_i32_0 : i32, i32
  }
  func.func @transform_11(%arg0: i32) -> (i32, i32) {
    %c0_i32 = arith.constant 0 : i32
    %c0_i32_0 = arith.constant 0 : i32
    %c0_i32_1 = arith.constant 0 : i32
    return %c0_i32, %c0_i32_0 : i32, i32
  }
  func.func @transform_12(%arg0: i32) -> (i32, i32, i32) {
    %c0_i32 = arith.constant 0 : i32
    %c0_i32_0 = arith.constant 0 : i32
    %c0_i32_1 = arith.constant 0 : i32
    return %arg0, %c0_i32, %c0_i32_0 : i32, i32, i32
  }
}

</mosaic_0001>

<llo_original>
// kernel: tpu_custom_call.1
$region0: #{tpu_custom_call.1}
  #allocation0 [shape = 'u32[]', space=smem, size = 0x4, offset = 0x4, fixed_abs, tag = 'smem constant byte address 0x4 - core index']
  #allocation1 [shape = 'u32[144,128]{1,0:T(1,128)}', space=vmem, size = 0x12000, scoped, tag = 'internal scratch']
  %s0 = inlined_call_operand.hbm [shape: f32[2,32,64], index: 0, kind: input, shape index: {}]
  %s1 = inlined_call_operand.hbm [shape: f32[64,64], index: 1, kind: input, shape index: {}]
  %s2 = inlined_call_operand.hbm [shape: f32[64,64], index: 2, kind: input, shape index: {}]
  %s3 = inlined_call_operand.hbm [shape: f32[64,64], index: 3, kind: input, shape index: {}]
  %s4 = inlined_call_operand.vmem [shape: f32[1,64], index: 4, kind: input, shape index: {}]
  %s5 = inlined_call_operand.vmem [shape: f32[1,64], index: 5, kind: input, shape index: {}]
  %s6 = inlined_call_operand.hbm [shape: f32[1,64], index: 6, kind: input, shape index: {}]
  %s7 = inlined_call_operand.hbm [shape: f32[64,64], index: 7, kind: input, shape index: {}]
  %s8 = inlined_call_operand.hbm [shape: f32[1,64], index: 8, kind: input, shape index: {}]
  %s9 = inlined_call_operand.vmem [shape: f32[32,64], index: 9, kind: input, shape index: {}]
  %s10 = inlined_call_operand.hbm [shape: f32[32,64], index: 10, kind: input, shape index: {}]
  %s11 = inlined_call_operand.hbm [shape: f32[64,64], index: 11, kind: input, shape index: {}]
  %s12 = inlined_call_operand.hbm [shape: f32[2,32,64], index: 12, kind: output, shape index: {}]
  %s13 = sld [smem:[#allocation0]]
  $region117: #{tpu_custom_call.1} parent=0
    _
  %s15 = ssub.s32 1, %s13
  %s16 = scalar_select 0, %s15, %s13
  $region1: #{tpu_custom_call.1} parent=0
    #allocation2 [shape = 'u8[32768]{0}', space=vmem, size = 0x8000, scoped, tag = 'input window, operand 0']
    #allocation3 [shape = 's32[2]{0}', space=sflag, size = 0x8, scoped, tag = 'scoped memory for tpu_custom_call.1']
    #allocation4 [shape = 's32[2]{0}', space=sflag, size = 0x8, scoped, tag = 'scoped memory for tpu_custom_call.1']
    #allocation5 [shape = 'u8[32768]{0}', space=vmem, size = 0x8000, scoped, tag = 'input window, operand 1, single buffered']
    #allocation6 [shape = 's32[1]{0}', space=sflag, size = 0x4, scoped, tag = 'scoped memory for tpu_custom_call.1']
    #allocation7 [shape = 'u8[32768]{0}', space=vmem, size = 0x8000, scoped, tag = 'input window, operand 2, single buffered']
    #allocation8 [shape = 'u8[32768]{0}', space=vmem, size = 0x8000, scoped, tag = 'input window, operand 3, single buffered']
    #allocation9 [shape = 's32[1]{0}', space=sflag, size = 0x4, scoped, tag = 'scoped memory for tpu_custom_call.1']
    #allocation10 [shape = 'u8[512]{0}', space=vmem, size = 0x400, scoped, tag = 'input window, operand 6, single buffered']
    #allocation11 [shape = 'u8[32768]{0}', space=vmem, size = 0x8000, scoped, tag = 'input window, operand 7, single buffered']
    #allocation12 [shape = 's32[1]{0}', space=sflag, size = 0x4, scoped, tag = 'scoped memory for tpu_custom_call.1']
    #allocation13 [shape = 'u8[512]{0}', space=vmem, size = 0x400, scoped, tag = 'input window, operand 8, single buffered']
    #allocation14 [shape = 'u8[16384]{0}', space=vmem, size = 0x4000, scoped, tag = 'input window, operand 10, single buffered']
    #allocation15 [shape = 's32[1]{0}', space=sflag, size = 0x4, scoped, tag = 'scoped memory for tpu_custom_call.1']
    #allocation16 [shape = 'u8[32768]{0}', space=vmem, size = 0x8000, scoped, tag = 'input window, operand 11, single buffered']
    #allocation17 [shape = 'u8[32768]{0}', space=vmem, size = 0x8000, scoped, tag = 'output window, operand 0']
    %17 = vsyncpa [#allocation3], 0
    %s18 = scalar_lea.sflag [#allocation3], 1
    %19 = vsyncpa %s18, 0
    %20 = vsyncpa [#allocation6], 0
    %21 = vsyncpa [#allocation9], 0
    %22 = vsyncpa [#allocation12], 0
    %23 = vsyncpa [#allocation15], 0
    %24 = vsyncpa [#allocation4], 0
    %s25 = scalar_lea.sflag [#allocation4], 1
    %26 = vsyncpa %s25, 0
    loop: start=0, step=1, limit=4
    $region2: #{tpu_custom_call.1} parent=1 // loop_pre_header
      _
    $region3: #{tpu_custom_call.1} parent=1 // loop_header
      %s28 = sphi 0, %s32
      %p29 = scmp.ge.s32.totalorder %s28, 4
      %s38 = sphi 0, %s40
      %s41 = sphi 0, %s38
      %s42 = sphi 0, %s41
      %s58 = sphi 0, %s42
      %s62 = sphi 0, %s62
      %s64 = sphi 0, %s62
      %s65 = sphi 0, %s64
      %s79 = sphi 0, %s65
      %s83 = sphi 0, %s83
      %s85 = sphi 0, %s83
      %s86 = sphi 0, %s85
      %s100 = sphi 0, %s86
      %s104 = sphi 0, %s104
      %s106 = sphi 0, %s104
      %s107 = sphi 0, %s106
      %s121 = sphi 0, %s107
      %s125 = sphi 0, %s125
      %s127 = sphi 0, %s125
      %s128 = sphi 0, %s127
      %s142 = sphi 0, %s128
      %s146 = sphi 0, %s146
      %s148 = sphi 0, %s146
      %s149 = sphi 0, %s148
      %s163 = sphi 0, %s149
      %s167 = sphi 0, %s167
      %s169 = sphi 0, %s167
      %s170 = sphi 0, %s169
      %s184 = sphi 0, %s170
      %s188 = sphi 0, %s188
      %s190 = sphi 0, %s188
      %s191 = sphi 0, %s190
      %s205 = sphi 0, %s191
      %s209 = sphi 0, %s209
      %s211 = sphi 0, %s209
      %s212 = sphi 0, %s211
      %s226 = sphi 0, %s212
      %s230 = sphi 0, %s230
      %s232 = sphi 0, %s230
      %s233 = sphi 0, %s232
      %s247 = sphi 0, %s233
      %s251 = sphi 0, %s251
      %s253 = sphi 0, %s251
      %s254 = sphi 0, %s253
      %s268 = sphi 0, %s254
      %s272 = sphi 0, %s272
      %s274 = sphi 0, %s272
      %s275 = sphi 0, %s274
      %s289 = sphi 0, %s275
      %s295 = sphi 0, %s297
      %s298 = sphi 0, %s295
      %s299 = sphi 0, %s298
      %s315 = sphi 0, %s299
    $region4: #{tpu_custom_call.1} parent=1 // loop_header_branch
      %31 = sbr.rel (%p29) target = $region8
    $region5: #{tpu_custom_call.1} parent=1 // loop_body
      %s33 = ssub.s32 %s28, 1
      %s34 = ssub.s32 %s28, 2
      %s35 = sadd.s32 %s28, 1
      %s36 = ssub.s32 %s28, %s35
      %p37 = scmp.eq.s32.totalorder %s36, 0
      %s39 = sadd.s32 %s38, 1
      %s40 = scalar_select %p37, %s38, %s39
      %p43 = pneg %p37
      %p44 = scmp.eq.s32.totalorder %s28, 1
      %p45 = por %p43, %p44
      %p46 = scmp.ne.s32.totalorder %s38, %s41
      %p47 = scmp.eq.s32.totalorder %s28, 0
      %p48 = por %p46, %p47
      %p49 = scmp.ne.s32.totalorder %s38, %s41
      %p50 = scmp.eq.s32.totalorder %s33, 1
      %p51 = por %p49, %p50
      %p52 = scmp.ne.s32.totalorder %s41, %s42
      %p53 = scmp.eq.s32.totalorder %s33, 0
      %p54 = por %p52, %p53
      %p55 = scmp.ne.s32.totalorder %s41, %s42
      %p56 = scmp.eq.s32.totalorder %s34, 1
      %p57 = por %p55, %p56
      %p59 = scmp.ne.s32.totalorder %s42, %s58
      %p60 = scmp.eq.s32.totalorder %s34, 0
      %p61 = por %p59, %p60
      %s63 = sadd.s32 %s62, 1
      %p66 = scmp.eq.s32.totalorder %s28, 1
      %p67 = scmp.ne.s32.totalorder %s62, %s64
      %p68 = scmp.eq.s32.totalorder %s28, 0
      %p69 = por %p67, %p68
      %p70 = scmp.ne.s32.totalorder %s62, %s64
      %p71 = scmp.eq.s32.totalorder %s33, 1
      %p72 = por %p70, %p71
      %p73 = scmp.ne.s32.totalorder %s64, %s65
      %p74 = scmp.eq.s32.totalorder %s33, 0
      %p75 = por %p73, %p74
      %p76 = scmp.ne.s32.totalorder %s64, %s65
      %p77 = scmp.eq.s32.totalorder %s34, 1
      %p78 = por %p76, %p77
      %p80 = scmp.ne.s32.totalorder %s65, %s79
      %p81 = scmp.eq.s32.totalorder %s34, 0
      %p82 = por %p80, %p81
      %s84 = sadd.s32 %s83, 1
      %p87 = scmp.eq.s32.totalorder %s28, 1
      %p88 = scmp.ne.s32.totalorder %s83, %s85
      %p89 = scmp.eq.s32.totalorder %s28, 0
      %p90 = por %p88, %p89
      %p91 = scmp.ne.s32.totalorder %s83, %s85
      %p92 = scmp.eq.s32.totalorder %s33, 1
      %p93 = por %p91, %p92
      %p94 = scmp.ne.s32.totalorder %s85, %s86
      %p95 = scmp.eq.s32.totalorder %s33, 0
      %p96 = por %p94, %p95
      %p97 = scmp.ne.s32.totalorder %s85, %s86
      %p98 = scmp.eq.s32.totalorder %s34, 1
      %p99 = por %p97, %p98
      %p101 = scmp.ne.s32.totalorder %s86, %s100
      %p102 = scmp.eq.s32.totalorder %s34, 0
      %p103 = por %p101, %p102
      %s105 = sadd.s32 %s104, 1
      %p108 = scmp.eq.s32.totalorder %s28, 1
      %p109 = scmp.ne.s32.totalorder %s104, %s106
      %p110 = scmp.eq.s32.totalorder %s28, 0
      %p111 = por %p109, %p110
      %p112 = scmp.ne.s32.totalorder %s104, %s106
      %p113 = scmp.eq.s32.totalorder %s33, 1
      %p114 = por %p112, %p113
      %p115 = scmp.ne.s32.totalorder %s106, %s107
      %p116 = scmp.eq.s32.totalorder %s33, 0
      %p117 = por %p115, %p116
      %p118 = scmp.ne.s32.totalorder %s106, %s107
      %p119 = scmp.eq.s32.totalorder %s34, 1
      %p120 = por %p118, %p119
      %p122 = scmp.ne.s32.totalorder %s107, %s121
      %p123 = scmp.eq.s32.totalorder %s34, 0
      %p124 = por %p122, %p123
      %s126 = sadd.s32 %s125, 1
      %p129 = scmp.eq.s32.totalorder %s28, 1
      %p130 = scmp.ne.s32.totalorder %s125, %s127
      %p131 = scmp.eq.s32.totalorder %s28, 0
      %p132 = por %p130, %p131
      %p133 = scmp.ne.s32.totalorder %s125, %s127
      %p134 = scmp.eq.s32.totalorder %s33, 1
      %p135 = por %p133, %p134
      %p136 = scmp.ne.s32.totalorder %s127, %s128
      %p137 = scmp.eq.s32.totalorder %s33, 0
      %p138 = por %p136, %p137
      %p139 = scmp.ne.s32.totalorder %s127, %s128
      %p140 = scmp.eq.s32.totalorder %s34, 1
      %p141 = por %p139, %p140
      %p143 = scmp.ne.s32.totalorder %s128, %s142
      %p144 = scmp.eq.s32.totalorder %s34, 0
      %p145 = por %p143, %p144
      %s147 = sadd.s32 %s146, 1
      %p150 = scmp.eq.s32.totalorder %s28, 1
      %p151 = scmp.ne.s32.totalorder %s146, %s148
      %p152 = scmp.eq.s32.totalorder %s28, 0
      %p153 = por %p151, %p152
      %p154 = scmp.ne.s32.totalorder %s146, %s148
      %p155 = scmp.eq.s32.totalorder %s33, 1
      %p156 = por %p154, %p155
      %p157 = scmp.ne.s32.totalorder %s148, %s149
      %p158 = scmp.eq.s32.totalorder %s33, 0
      %p159 = por %p157, %p158
      %p160 = scmp.ne.s32.totalorder %s148, %s149
      %p161 = scmp.eq.s32.totalorder %s34, 1
      %p162 = por %p160, %p161
      %p164 = scmp.ne.s32.totalorder %s149, %s163
      %p165 = scmp.eq.s32.totalorder %s34, 0
      %p166 = por %p164, %p165
      %s168 = sadd.s32 %s167, 1
      %p171 = scmp.eq.s32.totalorder %s28, 1
      %p172 = scmp.ne.s32.totalorder %s167, %s169
      %p173 = scmp.eq.s32.totalorder %s28, 0
      %p174 = por %p172, %p173
      %p175 = scmp.ne.s32.totalorder %s167, %s169
      %p176 = scmp.eq.s32.totalorder %s33, 1
      %p177 = por %p175, %p176
      %p178 = scmp.ne.s32.totalorder %s169, %s170
      %p179 = scmp.eq.s32.totalorder %s33, 0
      %p180 = por %p178, %p179
      %p181 = scmp.ne.s32.totalorder %s169, %s170
      %p182 = scmp.eq.s32.totalorder %s34, 1
      %p183 = por %p181, %p182
      %p185 = scmp.ne.s32.totalorder %s170, %s184
      %p186 = scmp.eq.s32.totalorder %s34, 0
      %p187 = por %p185, %p186
      %s189 = sadd.s32 %s188, 1
      %p192 = scmp.eq.s32.totalorder %s28, 1
      %p193 = scmp.ne.s32.totalorder %s188, %s190
      %p194 = scmp.eq.s32.totalorder %s28, 0
      %p195 = por %p193, %p194
      %p196 = scmp.ne.s32.totalorder %s188, %s190
      %p197 = scmp.eq.s32.totalorder %s33, 1
      %p198 = por %p196, %p197
      %p199 = scmp.ne.s32.totalorder %s190, %s191
      %p200 = scmp.eq.s32.totalorder %s33, 0
      %p201 = por %p199, %p200
      %p202 = scmp.ne.s32.totalorder %s190, %s191
      %p203 = scmp.eq.s32.totalorder %s34, 1
      %p204 = por %p202, %p203
      %p206 = scmp.ne.s32.totalorder %s191, %s205
      %p207 = scmp.eq.s32.totalorder %s34, 0
      %p208 = por %p206, %p207
      %s210 = sadd.s32 %s209, 1
      %p213 = scmp.eq.s32.totalorder %s28, 1
      %p214 = scmp.ne.s32.totalorder %s209, %s211
      %p215 = scmp.eq.s32.totalorder %s28, 0
      %p216 = por %p214, %p215
      %p217 = scmp.ne.s32.totalorder %s209, %s211
      %p218 = scmp.eq.s32.totalorder %s33, 1
      %p219 = por %p217, %p218
      %p220 = scmp.ne.s32.totalorder %s211, %s212
      %p221 = scmp.eq.s32.totalorder %s33, 0
      %p222 = por %p220, %p221
      %p223 = scmp.ne.s32.totalorder %s211, %s212
      %p224 = scmp.eq.s32.totalorder %s34, 1
      %p225 = por %p223, %p224
      %p227 = scmp.ne.s32.totalorder %s212, %s226
      %p228 = scmp.eq.s32.totalorder %s34, 0
      %p229 = por %p227, %p228
      %s231 = sadd.s32 %s230, 1
      %p234 = scmp.eq.s32.totalorder %s28, 1
      %p235 = scmp.ne.s32.totalorder %s230, %s232
      %p236 = scmp.eq.s32.totalorder %s28, 0
      %p237 = por %p235, %p236
      %p238 = scmp.ne.s32.totalorder %s230, %s232
      %p239 = scmp.eq.s32.totalorder %s33, 1
      %p240 = por %p238, %p239
      %p241 = scmp.ne.s32.totalorder %s232, %s233
      %p242 = scmp.eq.s32.totalorder %s33, 0
      %p243 = por %p241, %p242
      %p244 = scmp.ne.s32.totalorder %s232, %s233
      %p245 = scmp.eq.s32.totalorder %s34, 1
      %p246 = por %p244, %p245
      %p248 = scmp.ne.s32.totalorder %s233, %s247
      %p249 = scmp.eq.s32.totalorder %s34, 0
      %p250 = por %p248, %p249
      %s252 = sadd.s32 %s251, 1
      %p255 = scmp.eq.s32.totalorder %s28, 1
      %p256 = scmp.ne.s32.totalorder %s251, %s253
      %p257 = scmp.eq.s32.totalorder %s28, 0
      %p258 = por %p256, %p257
      %p259 = scmp.ne.s32.totalorder %s251, %s253
      %p260 = scmp.eq.s32.totalorder %s33, 1
      %p261 = por %p259, %p260
      %p262 = scmp.ne.s32.totalorder %s253, %s254
      %p263 = scmp.eq.s32.totalorder %s33, 0
      %p264 = por %p262, %p263
      %p265 = scmp.ne.s32.totalorder %s253, %s254
      %p266 = scmp.eq.s32.totalorder %s34, 1
      %p267 = por %p265, %p266
      %p269 = scmp.ne.s32.totalorder %s254, %s268
      %p270 = scmp.eq.s32.totalorder %s34, 0
      %p271 = por %p269, %p270
      %s273 = sadd.s32 %s272, 1
      %p276 = scmp.eq.s32.totalorder %s28, 1
      %p277 = scmp.ne.s32.totalorder %s272, %s274
      %p278 = scmp.eq.s32.totalorder %s28, 0
      %p279 = por %p277, %p278
      %p280 = scmp.ne.s32.totalorder %s272, %s274
      %p281 = scmp.eq.s32.totalorder %s33, 1
      %p282 = por %p280, %p281
      %p283 = scmp.ne.s32.totalorder %s274, %s275
      %p284 = scmp.eq.s32.totalorder %s33, 0
      %p285 = por %p283, %p284
      %p286 = scmp.ne.s32.totalorder %s274, %s275
      %p287 = scmp.eq.s32.totalorder %s34, 1
      %p288 = por %p286, %p287
      %p290 = scmp.ne.s32.totalorder %s275, %s289
      %p291 = scmp.eq.s32.totalorder %s34, 0
      %p292 = por %p290, %p291
      %s293 = ssub.s32 %s28, %s35
      %p294 = scmp.eq.s32.totalorder %s293, 0
      %s296 = sadd.s32 %s295, 1
      %s297 = scalar_select %p294, %s295, %s296
      %p300 = pneg %p294
      %p301 = scmp.eq.s32.totalorder %s28, 1
      %p302 = por %p300, %p301
      %p303 = scmp.ne.s32.totalorder %s295, %s298
      %p304 = scmp.eq.s32.totalorder %s28, 0
      %p305 = por %p303, %p304
      %p306 = scmp.ne.s32.totalorder %s295, %s298
      %p307 = scmp.eq.s32.totalorder %s33, 1
      %p308 = por %p306, %p307
      %p309 = scmp.ne.s32.totalorder %s298, %s299
      %p310 = scmp.eq.s32.totalorder %s33, 0
      %p311 = por %p309, %p310
      %p312 = scmp.ne.s32.totalorder %s298, %s299
      %p313 = scmp.eq.s32.totalorder %s34, 1
      %p314 = por %p312, %p313
      %p316 = scmp.ne.s32.totalorder %s299, %s315
      %p317 = scmp.eq.s32.totalorder %s34, 0
      %p318 = por %p316, %p317
      %p319 = scmp.le.s32.totalorder 1, %s28
      %p320 = scmp.lt.s32.totalorder %s28, 3
      %p321 = pnand %p319, %p320
      %p322 = pneg %p321
      // Predicated region
      $region9: #{tpu_custom_call.1} parent=5 // pred_check
        _
      $region10: #{tpu_custom_call.1} parent=5 // pred_check_branch
        %324 = sbr.rel (%p321) target = $region12
      $region11: #{tpu_custom_call.1} parent=5 // pred_region
        %s325 = ssub.s32 %s28, 1
        // Predicated region
        $region13: #{tpu_custom_call.1} parent=11 // pred_check
          %p326 = pneg %p75
        $region14: #{tpu_custom_call.1} parent=11 // pred_check_branch
          %328 = sbr.rel (%p326) target = $region16
        $region15: #{tpu_custom_call.1} parent=11 // pred_region
          %s330 = ssub.s32 1024, 1024
          %331 = vsyncadd [#allocation6], %s330
          %s332 = sshll.u32 [#allocation5], 4
          %s333 = int_to_ptr.vmem [resolvable:$true] %s332
          %338 = dma.hbm_to_vmem [thread:$0]  %s1, 1024, %s333, [#allocation6], 128, 128, 8
        $region16: #{tpu_custom_call.1} parent=11 // pred_fallthru
          _
        // Predicated region
        $region17: #{tpu_custom_call.1} parent=11 // pred_check
          %p339 = pneg %p96
        $region18: #{tpu_custom_call.1} parent=11 // pred_check_branch
          %341 = sbr.rel (%p339) target = $region20
        $region19: #{tpu_custom_call.1} parent=11 // pred_region
          %s343 = ssub.s32 1024, 1024
          %344 = vsyncadd [#allocation6], %s343
          %s345 = sshll.u32 [#allocation7], 4
          %s346 = int_to_ptr.vmem [resolvable:$true] %s345
          %351 = dma.hbm_to_vmem [thread:$0]  %s2, 1024, %s346, [#allocation6], 128, 128, 8
        $region20: #{tpu_custom_call.1} parent=11 // pred_fallthru
          _
        // Predicated region
        $region21: #{tpu_custom_call.1} parent=11 // pred_check
          %p352 = pneg %p117
        $region22: #{tpu_custom_call.1} parent=11 // pred_check_branch
          %354 = sbr.rel (%p352) target = $region24
        $region23: #{tpu_custom_call.1} parent=11 // pred_region
          %s356 = ssub.s32 1024, 1024
          %357 = vsyncadd [#allocation9], %s356
          %s358 = sshll.u32 [#allocation8], 4
          %s359 = int_to_ptr.vmem [resolvable:$true] %s358
          %364 = dma.hbm_to_vmem [thread:$0]  %s3, 1024, %s359, [#allocation9], 128, 128, 8
        $region24: #{tpu_custom_call.1} parent=11 // pred_fallthru
          _
        // Predicated region
        $region25: #{tpu_custom_call.1} parent=11 // pred_check
          %p365 = pneg %p138
        $region26: #{tpu_custom_call.1} parent=11 // pred_check_branch
          %367 = sbr.rel (%p365) target = $region28
        $region27: #{tpu_custom_call.1} parent=11 // pred_region
          _
        $region28: #{tpu_custom_call.1} parent=11 // pred_fallthru
          _
        // Predicated region
        $region29: #{tpu_custom_call.1} parent=11 // pred_check
          %p368 = pneg %p159
        $region30: #{tpu_custom_call.1} parent=11 // pred_check_branch
          %370 = sbr.rel (%p368) target = $region32
        $region31: #{tpu_custom_call.1} parent=11 // pred_region
          _
        $region32: #{tpu_custom_call.1} parent=11 // pred_fallthru
          _
        // Predicated region
        $region33: #{tpu_custom_call.1} parent=11 // pred_check
          %p371 = pneg %p180
        $region34: #{tpu_custom_call.1} parent=11 // pred_check_branch
          %373 = sbr.rel (%p371) target = $region36
        $region35: #{tpu_custom_call.1} parent=11 // pred_region
          %s375 = ssub.s32 16, 16
          %376 = vsyncadd [#allocation9], %s375
          %s378 = sshll.u32 [#allocation10], 4
          %s379 = int_to_ptr.vmem [resolvable:$true] %s378
          %381 = dma.hbm_to_vmem [thread:$0]  %s6, 16, %s379, [#allocation9]
        $region36: #{tpu_custom_call.1} parent=11 // pred_fallthru
          _
        // Predicated region
        $region37: #{tpu_custom_call.1} parent=11 // pred_check
          %p382 = pneg %p201
        $region38: #{tpu_custom_call.1} parent=11 // pred_check_branch
          %384 = sbr.rel (%p382) target = $region40
        $region39: #{tpu_custom_call.1} parent=11 // pred_region
          %s386 = ssub.s32 1024, 1024
          %387 = vsyncadd [#allocation12], %s386
          %s388 = sshll.u32 [#allocation11], 4
          %s389 = int_to_ptr.vmem [resolvable:$true] %s388
          %394 = dma.hbm_to_vmem [thread:$0]  %s7, 1024, %s389, [#allocation12], 128, 128, 8
        $region40: #{tpu_custom_call.1} parent=11 // pred_fallthru
          _
        // Predicated region
        $region41: #{tpu_custom_call.1} parent=11 // pred_check
          %p395 = pneg %p222
        $region42: #{tpu_custom_call.1} parent=11 // pred_check_branch
          %397 = sbr.rel (%p395) target = $region44
        $region43: #{tpu_custom_call.1} parent=11 // pred_region
          %s399 = ssub.s32 16, 16
          %400 = vsyncadd [#allocation12], %s399
          %s402 = sshll.u32 [#allocation13], 4
          %s403 = int_to_ptr.vmem [resolvable:$true] %s402
          %405 = dma.hbm_to_vmem [thread:$0]  %s8, 16, %s403, [#allocation12]
        $region44: #{tpu_custom_call.1} parent=11 // pred_fallthru
          _
        // Predicated region
        $region45: #{tpu_custom_call.1} parent=11 // pred_check
          %p406 = pneg %p243
        $region46: #{tpu_custom_call.1} parent=11 // pred_check_branch
          %408 = sbr.rel (%p406) target = $region48
        $region47: #{tpu_custom_call.1} parent=11 // pred_region
          _
        $region48: #{tpu_custom_call.1} parent=11 // pred_fallthru
          _
        // Predicated region
        $region49: #{tpu_custom_call.1} parent=11 // pred_check
          %p409 = pneg %p264
        $region50: #{tpu_custom_call.1} parent=11 // pred_check_branch
          %411 = sbr.rel (%p409) target = $region52
        $region51: #{tpu_custom_call.1} parent=11 // pred_region
          %s413 = ssub.s32 512, 512
          %414 = vsyncadd [#allocation15], %s413
          %s415 = sshll.u32 [#allocation14], 4
          %s416 = int_to_ptr.vmem [resolvable:$true] %s415
          %421 = dma.hbm_to_vmem [thread:$0]  %s10, 512, %s416, [#allocation15], 128, 128, 8
        $region52: #{tpu_custom_call.1} parent=11 // pred_fallthru
          _
        // Predicated region
        $region53: #{tpu_custom_call.1} parent=11 // pred_check
          %p422 = pneg %p285
        $region54: #{tpu_custom_call.1} parent=11 // pred_check_branch
          %424 = sbr.rel (%p422) target = $region56
        $region55: #{tpu_custom_call.1} parent=11 // pred_region
          %s426 = ssub.s32 1024, 1024
          %427 = vsyncadd [#allocation15], %s426
          %s428 = sshll.u32 [#allocation16], 4
          %s429 = int_to_ptr.vmem [resolvable:$true] %s428
          %434 = dma.hbm_to_vmem [thread:$0]  %s11, 1024, %s429, [#allocation15], 128, 128, 8
        $region56: #{tpu_custom_call.1} parent=11 // pred_fallthru
          _
      $region12: #{tpu_custom_call.1} parent=5 // pred_fallthru
        _
      %p435 = scmp.lt.s32.totalorder %s28, 2
      // Predicated region
      $region57: #{tpu_custom_call.1} parent=5 // pred_check
        %p436 = pneg %p435
      $region58: #{tpu_custom_call.1} parent=5 // pred_check_branch
        %438 = sbr.rel (%p436) target = $region60
      $region59: #{tpu_custom_call.1} parent=5 // pred_region
        // Predicated region
        $region61: #{tpu_custom_call.1} parent=59 // pred_check
          %p439 = pneg %p48
        $region62: #{tpu_custom_call.1} parent=59 // pred_check_branch
          %441 = sbr.rel (%p439) target = $region64
        $region63: #{tpu_custom_call.1} parent=59 // pred_region
          %s442 = sand.u32 %s38, 1
          %s443 = scalar_lea.sflag [#allocation3], %s442
          %s444 = sand.u32 %s38, 1
          %s445 = smul.addr %s444, 32
          %s446 = scalar_lea.vmem [#allocation2], %s445
          %s448 = ssub.s32 512, 512
          %449 = vsyncadd %s443, %s448
          %s450 = smul.addr %s28, 4
          %s451 = smul.addr %s450, 128
          %s452 = scalar_lea.hbm %s0, %s451
          %s453 = sshll.u32 %s446, 4
          %s454 = int_to_ptr.vmem [resolvable:$true] %s453
          %459 = dma.hbm_to_vmem [thread:$0]  %s452, 512, %s454, %s443, 128, 128, 8
        $region64: #{tpu_custom_call.1} parent=59 // pred_fallthru
          _
      $region60: #{tpu_custom_call.1} parent=5 // pred_fallthru
        _
      %p460 = scmp.le.s32.totalorder 1, %s28
      %p461 = scmp.lt.s32.totalorder %s28, 3
      %p462 = pnand %p460, %p461
      %p463 = pneg %p462
      // Predicated region
      $region65: #{tpu_custom_call.1} parent=5 // pred_check
        _
      $region66: #{tpu_custom_call.1} parent=5 // pred_check_branch
        %465 = sbr.rel (%p462) target = $region68
      $region67: #{tpu_custom_call.1} parent=5 // pred_region
        %s466 = ssub.s32 %s28, 1
        %s467 = sand.u32 %s41, 1
        %s468 = scalar_lea.sflag [#allocation3], %s467
        %s469 = sand.u32 %s41, 1
        %s470 = smul.addr %s469, 32
        %s471 = scalar_lea.vmem [#allocation2], %s470
        // Predicated region
        $region69: #{tpu_custom_call.1} parent=67 // pred_check
          %p472 = pneg %p54
        $region70: #{tpu_custom_call.1} parent=67 // pred_check_branch
          %474 = sbr.rel (%p472) target = $region72
        $region71: #{tpu_custom_call.1} parent=67 // pred_region
          %475 = dma.done %s468, 512
        $region72: #{tpu_custom_call.1} parent=67 // pred_fallthru
          _
        // Predicated region
        $region73: #{tpu_custom_call.1} parent=67 // pred_check
          %p476 = pneg %p75
        $region74: #{tpu_custom_call.1} parent=67 // pred_check_branch
          %478 = sbr.rel (%p476) target = $region76
        $region75: #{tpu_custom_call.1} parent=67 // pred_region
          %479 = dma.done [#allocation6], 1024
        $region76: #{tpu_custom_call.1} parent=67 // pred_fallthru
          _
        // Predicated region
        $region77: #{tpu_custom_call.1} parent=67 // pred_check
          %p480 = pneg %p96
        $region78: #{tpu_custom_call.1} parent=67 // pred_check_branch
          %482 = sbr.rel (%p480) target = $region80
        $region79: #{tpu_custom_call.1} parent=67 // pred_region
          %483 = dma.done [#allocation6], 1024
        $region80: #{tpu_custom_call.1} parent=67 // pred_fallthru
          _
        // Predicated region
        $region81: #{tpu_custom_call.1} parent=67 // pred_check
          %p484 = pneg %p117
        $region82: #{tpu_custom_call.1} parent=67 // pred_check_branch
          %486 = sbr.rel (%p484) target = $region84
        $region83: #{tpu_custom_call.1} parent=67 // pred_region
          %487 = dma.done [#allocation9], 1024
        $region84: #{tpu_custom_call.1} parent=67 // pred_fallthru
          _
        // Predicated region
        $region85: #{tpu_custom_call.1} parent=67 // pred_check
          %p488 = pneg %p180
        $region86: #{tpu_custom_call.1} parent=67 // pred_check_branch
          %490 = sbr.rel (%p488) target = $region88
        $region87: #{tpu_custom_call.1} parent=67 // pred_region
          %491 = dma.done [#allocation9], 16
        $region88: #{tpu_custom_call.1} parent=67 // pred_fallthru
          _
        // Predicated region
        $region89: #{tpu_custom_call.1} parent=67 // pred_check
          %p492 = pneg %p201
        $region90: #{tpu_custom_call.1} parent=67 // pred_check_branch
          %494 = sbr.rel (%p492) target = $region92
        $region91: #{tpu_custom_call.1} parent=67 // pred_region
          %495 = dma.done [#allocation12], 1024
        $region92: #{tpu_custom_call.1} parent=67 // pred_fallthru
          _
        // Predicated region
        $region93: #{tpu_custom_call.1} parent=67 // pred_check
          %p496 = pneg %p222
        $region94: #{tpu_custom_call.1} parent=67 // pred_check_branch
          %498 = sbr.rel (%p496) target = $region96
        $region95: #{tpu_custom_call.1} parent=67 // pred_region
          %499 = dma.done [#allocation12], 16
        $region96: #{tpu_custom_call.1} parent=67 // pred_fallthru
          _
        // Predicated region
        $region97: #{tpu_custom_call.1} parent=67 // pred_check
          %p500 = pneg %p264
        $region98: #{tpu_custom_call.1} parent=67 // pred_check_branch
          %502 = sbr.rel (%p500) target = $region100
        $region99: #{tpu_custom_call.1} parent=67 // pred_region
          %503 = dma.done [#allocation15], 512
        $region100: #{tpu_custom_call.1} parent=67 // pred_fallthru
          _
        // Predicated region
        $region101: #{tpu_custom_call.1} parent=67 // pred_check
          %p504 = pneg %p285
        $region102: #{tpu_custom_call.1} parent=67 // pred_check_branch
          %506 = sbr.rel (%p504) target = $region104
        $region103: #{tpu_custom_call.1} parent=67 // pred_region
          %507 = dma.done [#allocation15], 1024
        $region104: #{tpu_custom_call.1} parent=67 // pred_fallthru
          _
        %s508 = sand.u32 %s41, 1
        %s509 = scalar_lea.sflag [#allocation3], %s508
        %s510 = sand.u32 %s41, 1
        %s511 = smul.addr %s510, 32
        %s512 = scalar_lea.vmem [#allocation2], %s511
        %p513 = pneg %p54
        %p514 = pneg %p51
        %p515 = pneg %p75
        %p516 = pneg %p72
        %p517 = pneg %p96
        %p518 = pneg %p93
        %p519 = pneg %p117
        %p520 = pneg %p114
        %p521 = pneg %p138
        %p522 = pneg %p135
        %p523 = pneg %p159
        %p524 = pneg %p156
        %p525 = pneg %p180
        %p526 = pneg %p177
        %p527 = pneg %p201
        %p528 = pneg %p198
        %p529 = pneg %p222
        %p530 = pneg %p219
        %p531 = pneg %p243
        %p532 = pneg %p240
        %p533 = pneg %p264
        %p534 = pneg %p261
        %p535 = pneg %p285
        %p536 = pneg %p282
        %p537 = pneg %p311
        %p538 = pneg %p308
        %s539 = sand.u32 %s298, 1
        %s540 = scalar_lea.sflag [#allocation4], %s539
        %s541 = sand.u32 %s298, 1
        %s542 = smul.addr %s541, 32
        %s543 = scalar_lea.vmem [#allocation17], %s542
        %v544 = vld [vmem:[%s471] sm:$0xff]
        %v545 = vld [vmem:[%s471 + $0x8] sm:$0xff]
        %v546 = vld [vmem:[%s471 + $0x10] sm:$0xff]
        %v547 = vld [vmem:[%s471 + $0x18] sm:$0xff]
        %v548 = vld [vmem:[#allocation5] sm:$0xff]
        %v549 = vld [vmem:[#allocation5 + $0x8] sm:$0xff]
        %v550 = vld [vmem:[#allocation5 + $0x10] sm:$0xff]
        %v551 = vld [vmem:[#allocation5 + $0x18] sm:$0xff]
        %v552 = vld [vmem:[#allocation5 + $0x20] sm:$0xff]
        %v553 = vld [vmem:[#allocation5 + $0x28] sm:$0xff]
        %v554 = vld [vmem:[#allocation5 + $0x30] sm:$0xff]
        %v555 = vld [vmem:[#allocation5 + $0x38] sm:$0xff]
        %v556 = vld [vmem:[%s4] sm:$0x1]
        %v558 = vlaneseq
        %v559 = vshrl.u32 %v558, 7
        %v560 = vsub.s32 0, %v559
        %v561 = vrot.slane %v556, %v560
        %vm563 = vcmask 523264
        %v565 = vsel %vm563, %v544, 0
        %v568 = vsel %vm563, %v545, 0
        %v571 = vsel %vm563, %v546, 0
        %v574 = vsel %vm563, %v547, 0
        %576 = vmatprep.subr.mxu0 0.0
        %577 = vmatpush1.msra.mxu0 %v548
        %578 = vmatprep.subr.mxu0 0.0
        %579 = vmatpush1.msra.mxu0 %v549
        %580 = vmatprep.subr.mxu0 0.0
        %581 = vmatpush1.msra.mxu0 %v550
        %582 = vmatprep.subr.mxu0 0.0
        %583 = vmatpush1.msra.mxu0 %v551
        %584 = vmatprep.subr.mxu0 0.0
        %585 = vmatpush1.msra.mxu0 %v552
        %586 = vmatprep.subr.mxu0 0.0
        %587 = vmatpush1.msra.mxu0 %v553
        %588 = vmatprep.subr.mxu0 0.0
        %589 = vmatpush1.msra.mxu0 %v554
        %590 = vmatprep.subr.mxu0 0.0
        %591 = vmatpush1.msra.mxu0 %v555
        %592 = vmatprep.subr.mxu0 0.0
        %593 = vmatpush1.msra.mxu0 0.0
        %594 = vmatprep.subr.mxu0 0.0
        %595 = vmatpush1.msra.mxu0 0.0
        %596 = vmatprep.subr.mxu0 0.0
        %597 = vmatpush1.msra.mxu0 0.0
        %598 = vmatprep.subr.mxu0 0.0
        %599 = vmatpush1.msra.mxu0 0.0
        %600 = vmatprep.subr.mxu0 0.0
        %601 = vmatpush1.msra.mxu0 0.0
        %602 = vmatprep.subr.mxu0 0.0
        %603 = vmatpush1.msra.mxu0 0.0
        %604 = vmatprep.subr.mxu0 0.0
        %605 = vmatpush1.msra.mxu0 0.0
        %606 = vmatprep.subr.mxu0 0.0
        %607 = vmatpush1.msra.mxu0 0.0
        %608 = vmatprep.subr.mxu0 0.0
        %609 = vmatpush1.msra.mxu0 0.0
        %610 = vmatprep.subr.mxu0 0.0
        %611 = vmatpush1.msra.mxu0 0.0
        %612 = vmatprep.subr.mxu0 0.0
        %613 = vmatpush1.msra.mxu0 0.0
        %614 = vmatprep.subr.mxu0 0.0
        %615 = vmatpush1.msra.mxu0 0.0
        %616 = vmatprep.subr.mxu0 0.0
        %617 = vmatpush1.msra.mxu0 0.0
        %618 = vmatprep.subr.mxu0 0.0
        %619 = vmatpush1.msra.mxu0 0.0
        %620 = vmatprep.subr.mxu0 0.0
        %621 = vmatpush1.msra.mxu0 0.0
        %622 = vmatprep.subr.mxu0 0.0
        %623 = vmatpush1.msra.mxu0 0.0
        %624 = vmatprep.subr.mxu0 0.0
        %625 = vmatpush1.msra.mxu0 0.0
        %626 = vmatprep.subr.mxu0 0.0
        %627 = vmatpush1.msra.mxu0 0.0
        %628 = vmatprep.subr.mxu0 0.0
        %629 = vmatpush1.msra.mxu0 0.0
        %630 = vmatprep.subr.mxu0 0.0
        %631 = vmatpush1.msra.mxu0 0.0
        %632 = vmatprep.subr.mxu0 0.0
        %633 = vmatpush1.msra.mxu0 0.0
        %634 = vmatprep.subr.mxu0 0.0
        %635 = vmatpush1.msra.mxu0 0.0
        %636 = vmatprep.subr.mxu0 0.0
        %637 = vmatpush1.msra.mxu0 0.0
        %638 = vmatprep.subr.mxu0 0.0
        %639 = vmatpush1.msra.mxu0 0.0
        %640 = vmatprep.mubr.f32.mxu0 0.0
        %641 = vmatmul.mubr.f32.gmra.mrb[0].mxu0 %v565
        %v642 = vpop.f32.mrb[0].mxu0
        %v643 = vadd.f32 %v561, %v642
        %v644 = vpop.f32.mrb[0].mxu0
        %645 = vmatprep.mubr.f32.mxu0 0.0
        %646 = vmatmul.mubr.f32.gmra.mrb[0].mxu0 %v568
        %v647 = vpop.f32.mrb[0].mxu0
        %v648 = vadd.f32 %v561, %v647
        %v649 = vpop.f32.mrb[0].mxu0
        %650 = vmatprep.mubr.f32.mxu0 0.0
        %651 = vmatmul.mubr.f32.gmra.mrb[0].mxu0 %v571
        %v652 = vpop.f32.mrb[0].mxu0
        %v653 = vadd.f32 %v561, %v652
        %v654 = vpop.f32.mrb[0].mxu0
        %655 = vmatprep.mubr.f32.mxu0 0.0
        %656 = vmatmul.mubr.f32.gmra.mrb[0].mxu0 %v574
        %v657 = vpop.f32.mrb[0].mxu0
        %v658 = vadd.f32 %v561, %v657
        %v659 = vpop.f32.mrb[0].mxu0
        %660 = vdwg.mxu0
        %v661 = vld [vmem:[#allocation7] sm:$0xff]
        %v662 = vld [vmem:[#allocation7 + $0x8] sm:$0xff]
        %v663 = vld [vmem:[#allocation7 + $0x10] sm:$0xff]
        %v664 = vld [vmem:[#allocation7 + $0x18] sm:$0xff]
        %v665 = vld [vmem:[#allocation7 + $0x20] sm:$0xff]
        %v666 = vld [vmem:[#allocation7 + $0x28] sm:$0xff]
        %v667 = vld [vmem:[#allocation7 + $0x30] sm:$0xff]
        %v668 = vld [vmem:[#allocation7 + $0x38] sm:$0xff]
        %v669 = vld [vmem:[%s5] sm:$0x1]
        %v671 = vlaneseq
        %v672 = vshrl.u32 %v671, 7
        %v673 = vsub.s32 0, %v672
        %v674 = vrot.slane %v669, %v673
        %676 = vmatprep.subr.mxu0 0.0
        %677 = vmatpush1.msra.mxu0 %v661
        %678 = vmatprep.subr.mxu0 0.0
        %679 = vmatpush1.msra.mxu0 %v662
        %680 = vmatprep.subr.mxu0 0.0
        %681 = vmatpush1.msra.mxu0 %v663
        %682 = vmatprep.subr.mxu0 0.0
        %683 = vmatpush1.msra.mxu0 %v664
        %684 = vmatprep.subr.mxu0 0.0
        %685 = vmatpush1.msra.mxu0 %v665
        %686 = vmatprep.subr.mxu0 0.0
        %687 = vmatpush1.msra.mxu0 %v666
        %688 = vmatprep.subr.mxu0 0.0
        %689 = vmatpush1.msra.mxu0 %v667
        %690 = vmatprep.subr.mxu0 0.0
        %691 = vmatpush1.msra.mxu0 %v668
        %692 = vmatprep.subr.mxu0 0.0
        %693 = vmatpush1.msra.mxu0 0.0
        %694 = vmatprep.subr.mxu0 0.0
        %695 = vmatpush1.msra.mxu0 0.0
        %696 = vmatprep.subr.mxu0 0.0
        %697 = vmatpush1.msra.mxu0 0.0
        %698 = vmatprep.subr.mxu0 0.0
        %699 = vmatpush1.msra.mxu0 0.0
        %700 = vmatprep.subr.mxu0 0.0
        %701 = vmatpush1.msra.mxu0 0.0
        %702 = vmatprep.subr.mxu0 0.0
        %703 = vmatpush1.msra.mxu0 0.0
        %704 = vmatprep.subr.mxu0 0.0
        %705 = vmatpush1.msra.mxu0 0.0
        %706 = vmatprep.subr.mxu0 0.0
        %707 = vmatpush1.msra.mxu0 0.0
        %708 = vmatprep.subr.mxu0 0.0
        %709 = vmatpush1.msra.mxu0 0.0
        %710 = vmatprep.subr.mxu0 0.0
        %711 = vmatpush1.msra.mxu0 0.0
        %712 = vmatprep.subr.mxu0 0.0
        %713 = vmatpush1.msra.mxu0 0.0
        %714 = vmatprep.subr.mxu0 0.0
        %715 = vmatpush1.msra.mxu0 0.0
        %716 = vmatprep.subr.mxu0 0.0
        %717 = vmatpush1.msra.mxu0 0.0
        %718 = vmatprep.subr.mxu0 0.0
        %719 = vmatpush1.msra.mxu0 0.0
        %720 = vmatprep.subr.mxu0 0.0
        %721 = vmatpush1.msra.mxu0 0.0
        %722 = vmatprep.subr.mxu0 0.0
        %723 = vmatpush1.msra.mxu0 0.0
        %724 = vmatprep.subr.mxu0 0.0
        %725 = vmatpush1.msra.mxu0 0.0
        %726 = vmatprep.subr.mxu0 0.0
        %727 = vmatpush1.msra.mxu0 0.0
        %728 = vmatprep.subr.mxu0 0.0
        %729 = vmatpush1.msra.mxu0 0.0
        %730 = vmatprep.subr.mxu0 0.0
        %731 = vmatpush1.msra.mxu0 0.0
        %732 = vmatprep.subr.mxu0 0.0
        %733 = vmatpush1.msra.mxu0 0.0
        %734 = vmatprep.subr.mxu0 0.0
        %735 = vmatpush1.msra.mxu0 0.0
        %736 = vmatprep.subr.mxu0 0.0
        %737 = vmatpush1.msra.mxu0 0.0
        %738 = vmatprep.subr.mxu0 0.0
        %739 = vmatpush1.msra.mxu0 0.0
        %740 = vmatprep.mubr.f32.mxu0 0.0
        %741 = vmatmul.mubr.f32.gmra.mrb[0].mxu0 %v565
        %v742 = vpop.f32.mrb[0].mxu0
        %v743 = vadd.f32 %v674, %v742
        %v744 = vpop.f32.mrb[0].mxu0
        %745 = vmatprep.mubr.f32.mxu0 0.0
        %746 = vmatmul.mubr.f32.gmra.mrb[0].mxu0 %v568
        %v747 = vpop.f32.mrb[0].mxu0
        %v748 = vadd.f32 %v674, %v747
        %v749 = vpop.f32.mrb[0].mxu0
        %750 = vmatprep.mubr.f32.mxu0 0.0
        %751 = vmatmul.mubr.f32.gmra.mrb[0].mxu0 %v571
        %v752 = vpop.f32.mrb[0].mxu0
        %v753 = vadd.f32 %v674, %v752
        %v754 = vpop.f32.mrb[0].mxu0
        %755 = vmatprep.mubr.f32.mxu0 0.0
        %756 = vmatmul.mubr.f32.gmra.mrb[0].mxu0 %v574
        %v757 = vpop.f32.mrb[0].mxu0
        %v758 = vadd.f32 %v674, %v757
        %v759 = vpop.f32.mrb[0].mxu0
        %760 = vdwg.mxu0
        %v761 = vld [vmem:[#allocation8] sm:$0xff]
        %v762 = vld [vmem:[#allocation8 + $0x8] sm:$0xff]
        %v763 = vld [vmem:[#allocation8 + $0x10] sm:$0xff]
        %v764 = vld [vmem:[#allocation8 + $0x18] sm:$0xff]
        %v765 = vld [vmem:[#allocation8 + $0x20] sm:$0xff]
        %v766 = vld [vmem:[#allocation8 + $0x28] sm:$0xff]
        %v767 = vld [vmem:[#allocation8 + $0x30] sm:$0xff]
        %v768 = vld [vmem:[#allocation8 + $0x38] sm:$0xff]
        %v769 = vld [vmem:[#allocation10] sm:$0x1]
        %v771 = vlaneseq
        %v772 = vshrl.u32 %v771, 7
        %v773 = vsub.s32 0, %v772
        %v774 = vrot.slane %v769, %v773
        %776 = vmatprep.subr.mxu0 0.0
        %777 = vmatpush1.msra.mxu0 %v761
        %778 = vmatprep.subr.mxu0 0.0
        %779 = vmatpush1.msra.mxu0 %v762
        %780 = vmatprep.subr.mxu0 0.0
        %781 = vmatpush1.msra.mxu0 %v763
        %782 = vmatprep.subr.mxu0 0.0
        %783 = vmatpush1.msra.mxu0 %v764
        %784 = vmatprep.subr.mxu0 0.0
        %785 = vmatpush1.msra.mxu0 %v765
        %786 = vmatprep.subr.mxu0 0.0
        %787 = vmatpush1.msra.mxu0 %v766
        %788 = vmatprep.subr.mxu0 0.0
        %789 = vmatpush1.msra.mxu0 %v767
        %790 = vmatprep.subr.mxu0 0.0
        %791 = vmatpush1.msra.mxu0 %v768
        %792 = vmatprep.subr.mxu0 0.0
        %793 = vmatpush1.msra.mxu0 0.0
        %794 = vmatprep.subr.mxu0 0.0
        %795 = vmatpush1.msra.mxu0 0.0
        %796 = vmatprep.subr.mxu0 0.0
        %797 = vmatpush1.msra.mxu0 0.0
        %798 = vmatprep.subr.mxu0 0.0
        %799 = vmatpush1.msra.mxu0 0.0
        %800 = vmatprep.subr.mxu0 0.0
        %801 = vmatpush1.msra.mxu0 0.0
        %802 = vmatprep.subr.mxu0 0.0
        %803 = vmatpush1.msra.mxu0 0.0
        %804 = vmatprep.subr.mxu0 0.0
        %805 = vmatpush1.msra.mxu0 0.0
        %806 = vmatprep.subr.mxu0 0.0
        %807 = vmatpush1.msra.mxu0 0.0
        %808 = vmatprep.subr.mxu0 0.0
        %809 = vmatpush1.msra.mxu0 0.0
        %810 = vmatprep.subr.mxu0 0.0
        %811 = vmatpush1.msra.mxu0 0.0
        %812 = vmatprep.subr.mxu0 0.0
        %813 = vmatpush1.msra.mxu0 0.0
        %814 = vmatprep.subr.mxu0 0.0
        %815 = vmatpush1.msra.mxu0 0.0
        %816 = vmatprep.subr.mxu0 0.0
        %817 = vmatpush1.msra.mxu0 0.0
        %818 = vmatprep.subr.mxu0 0.0
        %819 = vmatpush1.msra.mxu0 0.0
        %820 = vmatprep.subr.mxu0 0.0
        %821 = vmatpush1.msra.mxu0 0.0
        %822 = vmatprep.subr.mxu0 0.0
        %823 = vmatpush1.msra.mxu0 0.0
        %824 = vmatprep.subr.mxu0 0.0
        %825 = vmatpush1.msra.mxu0 0.0
        %826 = vmatprep.subr.mxu0 0.0
        %827 = vmatpush1.msra.mxu0 0.0
        %828 = vmatprep.subr.mxu0 0.0
        %829 = vmatpush1.msra.mxu0 0.0
        %830 = vmatprep.subr.mxu0 0.0
        %831 = vmatpush1.msra.mxu0 0.0
        %832 = vmatprep.subr.mxu0 0.0
        %833 = vmatpush1.msra.mxu0 0.0
        %834 = vmatprep.subr.mxu0 0.0
        %835 = vmatpush1.msra.mxu0 0.0
        %836 = vmatprep.subr.mxu0 0.0
        %837 = vmatpush1.msra.mxu0 0.0
        %838 = vmatprep.subr.mxu0 0.0
        %839 = vmatpush1.msra.mxu0 0.0
        %840 = vmatprep.mubr.f32.mxu0 0.0
        %841 = vmatmul.mubr.f32.gmra.mrb[0].mxu0 %v565
        %v842 = vpop.f32.mrb[0].mxu0
        %v843 = vadd.f32 %v774, %v842
        %v844 = vpop.f32.mrb[0].mxu0
        %845 = vmatprep.mubr.f32.mxu0 0.0
        %846 = vmatmul.mubr.f32.gmra.mrb[0].mxu0 %v568
        %v847 = vpop.f32.mrb[0].mxu0
        %v848 = vadd.f32 %v774, %v847
        %v849 = vpop.f32.mrb[0].mxu0
        %850 = vmatprep.mubr.f32.mxu0 0.0
        %851 = vmatmul.mubr.f32.gmra.mrb[0].mxu0 %v571
        %v852 = vpop.f32.mrb[0].mxu0
        %v853 = vadd.f32 %v774, %v852
        %v854 = vpop.f32.mrb[0].mxu0
        %855 = vmatprep.mubr.f32.mxu0 0.0
        %856 = vmatmul.mubr.f32.gmra.mrb[0].mxu0 %v574
        %v857 = vpop.f32.mrb[0].mxu0
        %v858 = vadd.f32 %v774, %v857
        %v859 = vpop.f32.mrb[0].mxu0
        %860 = vdwg.mxu0
        %v861 = vld [vmem:[%s9] sm:$0xff]
        %v862 = vld [vmem:[%s9 + $0x8] sm:$0xff]
        %v863 = vld [vmem:[%s9 + $0x10] sm:$0xff]
        %v864 = vld [vmem:[%s9 + $0x18] sm:$0xff]
        %v865 = vld [vmem:[#allocation14] sm:$0xff]
        %v866 = vld [vmem:[#allocation14 + $0x8] sm:$0xff]
        %v867 = vld [vmem:[#allocation14 + $0x10] sm:$0xff]
        %v868 = vld [vmem:[#allocation14 + $0x18] sm:$0xff]
        %v869 = vld [vmem:[#allocation16] sm:$0xff]
        %v870 = vld [vmem:[#allocation16 + $0x8] sm:$0xff]
        %v871 = vld [vmem:[#allocation16 + $0x10] sm:$0xff]
        %v872 = vld [vmem:[#allocation16 + $0x18] sm:$0xff]
        %v873 = vld [vmem:[#allocation16 + $0x20] sm:$0xff]
        %v874 = vld [vmem:[#allocation16 + $0x28] sm:$0xff]
        %v875 = vld [vmem:[#allocation16 + $0x30] sm:$0xff]
        %v876 = vld [vmem:[#allocation16 + $0x38] sm:$0xff]
        %v877 = vmul.f32 %v643, %v865
        %v878 = vmul.f32 %v648, %v866
        %v879 = vmul.f32 %v653, %v867
        %v880 = vmul.f32 %v658, %v868
        %v882 = vsel %vm563, %v643, 0
        %v885 = vsel %vm563, %v648, 0
        %v888 = vsel %vm563, %v653, 0
        %v891 = vsel %vm563, %v658, 0
        %893 = vmatprep.subr.mxu0 0.0
        %894 = vmatpush1.msra.mxu0 %v869
        %895 = vmatprep.subr.mxu0 0.0
        %896 = vmatpush1.msra.mxu0 %v870
        %897 = vmatprep.subr.mxu0 0.0
        %898 = vmatpush1.msra.mxu0 %v871
        %899 = vmatprep.subr.mxu0 0.0
        %900 = vmatpush1.msra.mxu0 %v872
        %901 = vmatprep.subr.mxu0 0.0
        %902 = vmatpush1.msra.mxu0 %v873
        %903 = vmatprep.subr.mxu0 0.0
        %904 = vmatpush1.msra.mxu0 %v874
        %905 = vmatprep.subr.mxu0 0.0
        %906 = vmatpush1.msra.mxu0 %v875
        %907 = vmatprep.subr.mxu0 0.0
        %908 = vmatpush1.msra.mxu0 %v876
        %909 = vmatprep.subr.mxu0 0.0
        %910 = vmatpush1.msra.mxu0 0.0
        %911 = vmatprep.subr.mxu0 0.0
        %912 = vmatpush1.msra.mxu0 0.0
        %913 = vmatprep.subr.mxu0 0.0
        %914 = vmatpush1.msra.mxu0 0.0
        %915 = vmatprep.subr.mxu0 0.0
        %916 = vmatpush1.msra.mxu0 0.0
        %917 = vmatprep.subr.mxu0 0.0
        %918 = vmatpush1.msra.mxu0 0.0
        %919 = vmatprep.subr.mxu0 0.0
        %920 = vmatpush1.msra.mxu0 0.0
        %921 = vmatprep.subr.mxu0 0.0
        %922 = vmatpush1.msra.mxu0 0.0
        %923 = vmatprep.subr.mxu0 0.0
        %924 = vmatpush1.msra.mxu0 0.0
        %925 = vmatprep.subr.mxu0 0.0
        %926 = vmatpush1.msra.mxu0 0.0
        %927 = vmatprep.subr.mxu0 0.0
        %928 = vmatpush1.msra.mxu0 0.0
        %929 = vmatprep.subr.mxu0 0.0
        %930 = vmatpush1.msra.mxu0 0.0
        %931 = vmatprep.subr.mxu0 0.0
        %932 = vmatpush1.msra.mxu0 0.0
        %933 = vmatprep.subr.mxu0 0.0
        %934 = vmatpush1.msra.mxu0 0.0
        %935 = vmatprep.subr.mxu0 0.0
        %936 = vmatpush1.msra.mxu0 0.0
        %937 = vmatprep.subr.mxu0 0.0
        %938 = vmatpush1.msra.mxu0 0.0
        %939 = vmatprep.subr.mxu0 0.0
        %940 = vmatpush1.msra.mxu0 0.0
        %941 = vmatprep.subr.mxu0 0.0
        %942 = vmatpush1.msra.mxu0 0.0
        %943 = vmatprep.subr.mxu0 0.0
        %944 = vmatpush1.msra.mxu0 0.0
        %945 = vmatprep.subr.mxu0 0.0
        %946 = vmatpush1.msra.mxu0 0.0
        %947 = vmatprep.subr.mxu0 0.0
        %948 = vmatpush1.msra.mxu0 0.0
        %949 = vmatprep.subr.mxu0 0.0
        %950 = vmatpush1.msra.mxu0 0.0
        %951 = vmatprep.subr.mxu0 0.0
        %952 = vmatpush1.msra.mxu0 0.0
        %953 = vmatprep.subr.mxu0 0.0
        %954 = vmatpush1.msra.mxu0 0.0
        %955 = vmatprep.subr.mxu0 0.0
        %956 = vmatpush1.msra.mxu0 0.0
        %957 = vmatprep.mubr.f32.mxu0 0.0
        %958 = vmatmul.mubr.f32.gmra.mrb[0].mxu0 %v882
        %v959 = vpop.f32.mrb[0].mxu0
        %v960 = vadd.f32 0.0, %v959
        %v961 = vpop.f32.mrb[0].mxu0
        %962 = vmatprep.mubr.f32.mxu0 0.0
        %963 = vmatmul.mubr.f32.gmra.mrb[0].mxu0 %v885
        %v964 = vpop.f32.mrb[0].mxu0
        %v965 = vadd.f32 0.0, %v964
        %v966 = vpop.f32.mrb[0].mxu0
        %967 = vmatprep.mubr.f32.mxu0 0.0
        %968 = vmatmul.mubr.f32.gmra.mrb[0].mxu0 %v888
        %v969 = vpop.f32.mrb[0].mxu0
        %v970 = vadd.f32 0.0, %v969
        %v971 = vpop.f32.mrb[0].mxu0
        %972 = vmatprep.mubr.f32.mxu0 0.0
        %973 = vmatmul.mubr.f32.gmra.mrb[0].mxu0 %v891
        %v974 = vpop.f32.mrb[0].mxu0
        %v975 = vadd.f32 0.0, %v974
        %v976 = vpop.f32.mrb[0].mxu0
        %977 = vdwg.mxu0
        %v978 = vmul.f32 %v960, %v861
        %v979 = vmul.f32 %v965, %v862
        %v980 = vmul.f32 %v970, %v863
        %v981 = vmul.f32 %v975, %v864
        %v982 = vadd.f32 %v877, %v978
        %v983 = vadd.f32 %v878, %v979
        %v984 = vadd.f32 %v879, %v980
        %v985 = vadd.f32 %v880, %v981
        %v986 = vmul.f32 %v743, %v865
        %v987 = vmul.f32 %v748, %v866
        %v988 = vmul.f32 %v753, %v867
        %v989 = vmul.f32 %v758, %v868
        %v991 = vsel %vm563, %v743, 0
        %v994 = vsel %vm563, %v748, 0
        %v997 = vsel %vm563, %v753, 0
        %v1000 = vsel %vm563, %v758, 0
        %1002 = vmatprep.subr.mxu0 0.0
        %1003 = vmatpush1.msra.mxu0 %v869
        %1004 = vmatprep.subr.mxu0 0.0
        %1005 = vmatpush1.msra.mxu0 %v870
        %1006 = vmatprep.subr.mxu0 0.0
        %1007 = vmatpush1.msra.mxu0 %v871
        %1008 = vmatprep.subr.mxu0 0.0
        %1009 = vmatpush1.msra.mxu0 %v872
        %1010 = vmatprep.subr.mxu0 0.0
        %1011 = vmatpush1.msra.mxu0 %v873
        %1012 = vmatprep.subr.mxu0 0.0
        %1013 = vmatpush1.msra.mxu0 %v874
        %1014 = vmatprep.subr.mxu0 0.0
        %1015 = vmatpush1.msra.mxu0 %v875
        %1016 = vmatprep.subr.mxu0 0.0
        %1017 = vmatpush1.msra.mxu0 %v876
        %1018 = vmatprep.subr.mxu0 0.0
        %1019 = vmatpush1.msra.mxu0 0.0
        %1020 = vmatprep.subr.mxu0 0.0
        %1021 = vmatpush1.msra.mxu0 0.0
        %1022 = vmatprep.subr.mxu0 0.0
        %1023 = vmatpush1.msra.mxu0 0.0
        %1024 = vmatprep.subr.mxu0 0.0
        %1025 = vmatpush1.msra.mxu0 0.0
        %1026 = vmatprep.subr.mxu0 0.0
        %1027 = vmatpush1.msra.mxu0 0.0
        %1028 = vmatprep.subr.mxu0 0.0
        %1029 = vmatpush1.msra.mxu0 0.0
        %1030 = vmatprep.subr.mxu0 0.0
        %1031 = vmatpush1.msra.mxu0 0.0
        %1032 = vmatprep.subr.mxu0 0.0
        %1033 = vmatpush1.msra.mxu0 0.0
        %1034 = vmatprep.subr.mxu0 0.0
        %1035 = vmatpush1.msra.mxu0 0.0
        %1036 = vmatprep.subr.mxu0 0.0
        %1037 = vmatpush1.msra.mxu0 0.0
        %1038 = vmatprep.subr.mxu0 0.0
        %1039 = vmatpush1.msra.mxu0 0.0
        %1040 = vmatprep.subr.mxu0 0.0
        %1041 = vmatpush1.msra.mxu0 0.0
        %1042 = vmatprep.subr.mxu0 0.0
        %1043 = vmatpush1.msra.mxu0 0.0
        %1044 = vmatprep.subr.mxu0 0.0
        %1045 = vmatpush1.msra.mxu0 0.0
        %1046 = vmatprep.subr.mxu0 0.0
        %1047 = vmatpush1.msra.mxu0 0.0
        %1048 = vmatprep.subr.mxu0 0.0
        %1049 = vmatpush1.msra.mxu0 0.0
        %1050 = vmatprep.subr.mxu0 0.0
        %1051 = vmatpush1.msra.mxu0 0.0
        %1052 = vmatprep.subr.mxu0 0.0
        %1053 = vmatpush1.msra.mxu0 0.0
        %1054 = vmatprep.subr.mxu0 0.0
        %1055 = vmatpush1.msra.mxu0 0.0
        %1056 = vmatprep.subr.mxu0 0.0
        %1057 = vmatpush1.msra.mxu0 0.0
        %1058 = vmatprep.subr.mxu0 0.0
        %1059 = vmatpush1.msra.mxu0 0.0
        %1060 = vmatprep.subr.mxu0 0.0
        %1061 = vmatpush1.msra.mxu0 0.0
        %1062 = vmatprep.subr.mxu0 0.0
        %1063 = vmatpush1.msra.mxu0 0.0
        %1064 = vmatprep.subr.mxu0 0.0
        %1065 = vmatpush1.msra.mxu0 0.0
        %1066 = vmatprep.mubr.f32.mxu0 0.0
        %1067 = vmatmul.mubr.f32.gmra.mrb[0].mxu0 %v991
        %v1068 = vpop.f32.mrb[0].mxu0
        %v1069 = vadd.f32 0.0, %v1068
        %v1070 = vpop.f32.mrb[0].mxu0
        %1071 = vmatprep.mubr.f32.mxu0 0.0
        %1072 = vmatmul.mubr.f32.gmra.mrb[0].mxu0 %v994
        %v1073 = vpop.f32.mrb[0].mxu0
        %v1074 = vadd.f32 0.0, %v1073
        %v1075 = vpop.f32.mrb[0].mxu0
        %1076 = vmatprep.mubr.f32.mxu0 0.0
        %1077 = vmatmul.mubr.f32.gmra.mrb[0].mxu0 %v997
        %v1078 = vpop.f32.mrb[0].mxu0
        %v1079 = vadd.f32 0.0, %v1078
        %v1080 = vpop.f32.mrb[0].mxu0
        %1081 = vmatprep.mubr.f32.mxu0 0.0
        %1082 = vmatmul.mubr.f32.gmra.mrb[0].mxu0 %v1000
        %v1083 = vpop.f32.mrb[0].mxu0
        %v1084 = vadd.f32 0.0, %v1083
        %v1085 = vpop.f32.mrb[0].mxu0
        %1086 = vdwg.mxu0
        %v1087 = vmul.f32 %v1069, %v861
        %v1088 = vmul.f32 %v1074, %v862
        %v1089 = vmul.f32 %v1079, %v863
        %v1090 = vmul.f32 %v1084, %v864
        %v1091 = vadd.f32 %v986, %v1087
        %v1092 = vadd.f32 %v987, %v1088
        %v1093 = vadd.f32 %v988, %v1089
        %v1094 = vadd.f32 %v989, %v1090
        %vm1095 = vcmask 64512
        %v1097 = vsel %vm1095, %v982, 0
        %v1100 = vsel %vm1095, %v983, 0
        %v1103 = vsel %vm1095, %v984, 0
        %v1106 = vsel %vm1095, %v985, 0
        %v1109 = vsel %vm1095, %v1091, 0
        %v1112 = vsel %vm1095, %v1092, 0
        %v1115 = vsel %vm1095, %v1093, 0
        %v1118 = vsel %vm1095, %v1094, 0
        %1120 = vmatprep.subr.mxu0 0.0
        %1121 = vmatpush1.xpose.msra.mxu0 %v1109
        %1122 = vmatprep.subr.mxu0 0.0
        %1123 = vmatpush1.xpose.msra.mxu0 %v1112
        %1124 = vmatprep.subr.mxu0 0.0
        %1125 = vmatpush1.xpose.msra.mxu0 %v1115
        %1126 = vmatprep.subr.mxu0 0.0
        %1127 = vmatpush1.xpose.msra.mxu0 %v1118
        %1128 = vmatprep.subr.mxu0 0.0
        %1129 = vmatpush1.xpose.msra.mxu0 0.0
        %1130 = vmatprep.subr.mxu0 0.0
        %1131 = vmatpush1.xpose.msra.mxu0 0.0
        %1132 = vmatprep.subr.mxu0 0.0
        %1133 = vmatpush1.xpose.msra.mxu0 0.0
        %1134 = vmatprep.subr.mxu0 0.0
        %1135 = vmatpush1.xpose.msra.mxu0 0.0
        %1136 = vmatprep.subr.mxu0 0.0
        %1137 = vmatpush1.xpose.msra.mxu0 0.0
        %1138 = vmatprep.subr.mxu0 0.0
        %1139 = vmatpush1.xpose.msra.mxu0 0.0
        %1140 = vmatprep.subr.mxu0 0.0
        %1141 = vmatpush1.xpose.msra.mxu0 0.0
        %1142 = vmatprep.subr.mxu0 0.0
        %1143 = vmatpush1.xpose.msra.mxu0 0.0
        %1144 = vmatprep.subr.mxu0 0.0
        %1145 = vmatpush1.xpose.msra.mxu0 0.0
        %1146 = vmatprep.subr.mxu0 0.0
        %1147 = vmatpush1.xpose.msra.mxu0 0.0
        %1148 = vmatprep.subr.mxu0 0.0
        %1149 = vmatpush1.xpose.msra.mxu0 0.0
        %1150 = vmatprep.subr.mxu0 0.0
        %1151 = vmatpush1.xpose.msra.mxu0 0.0
        %1152 = vmatprep.subr.mxu0 0.0
        %1153 = vmatpush1.xpose.msra.mxu0 0.0
        %1154 = vmatprep.subr.mxu0 0.0
        %1155 = vmatpush1.xpose.msra.mxu0 0.0
        %1156 = vmatprep.subr.mxu0 0.0
        %1157 = vmatpush1.xpose.msra.mxu0 0.0
        %1158 = vmatprep.subr.mxu0 0.0
        %1159 = vmatpush1.xpose.msra.mxu0 0.0
        %1160 = vmatprep.subr.mxu0 0.0
        %1161 = vmatpush1.xpose.msra.mxu0 0.0
        %1162 = vmatprep.subr.mxu0 0.0
        %1163 = vmatpush1.xpose.msra.mxu0 0.0
        %1164 = vmatprep.subr.mxu0 0.0
        %1165 = vmatpush1.xpose.msra.mxu0 0.0
        %1166 = vmatprep.subr.mxu0 0.0
        %1167 = vmatpush1.xpose.msra.mxu0 0.0
        %1168 = vmatprep.subr.mxu0 0.0
        %1169 = vmatpush1.xpose.msra.mxu0 0.0
        %1170 = vmatprep.subr.mxu0 0.0
        %1171 = vmatpush1.xpose.msra.mxu0 0.0
        %1172 = vmatprep.subr.mxu0 0.0
        %1173 = vmatpush1.xpose.msra.mxu0 0.0
        %1174 = vmatprep.subr.mxu0 0.0
        %1175 = vmatpush1.xpose.msra.mxu0 0.0
        %1176 = vmatprep.subr.mxu0 0.0
        %1177 = vmatpush1.xpose.msra.mxu0 0.0
        %1178 = vmatprep.subr.mxu0 0.0
        %1179 = vmatpush1.xpose.msra.mxu0 0.0
        %1180 = vmatprep.subr.mxu0 0.0
        %1181 = vmatpush1.xpose.msra.mxu0 0.0
        %1182 = vmatprep.subr.mxu0 0.0
        %1183 = vmatpush1.xpose.msra.mxu0 0.0
        %1184 = vmatprep.mubr.f32.mxu0 0.0
        %1185 = vmatmul.mubr.f32.gmra.mrb[0].mxu0 %v1097
        %v1186 = vpop.f32.mrb[0].mxu0
        %v1187 = vadd.f32 0.0, %v1186
        %v1188 = vpop.f32.mrb[0].mxu0
        %1189 = vmatprep.mubr.f32.mxu0 0.0
        %1190 = vmatmul.mubr.f32.gmra.mrb[0].mxu0 %v1100
        %v1191 = vpop.f32.mrb[0].mxu0
        %v1192 = vadd.f32 0.0, %v1191
        %v1193 = vpop.f32.mrb[0].mxu0
        %1194 = vmatprep.mubr.f32.mxu0 0.0
        %1195 = vmatmul.mubr.f32.gmra.mrb[0].mxu0 %v1103
        %v1196 = vpop.f32.mrb[0].mxu0
        %v1197 = vadd.f32 0.0, %v1196
        %v1198 = vpop.f32.mrb[0].mxu0
        %1199 = vmatprep.mubr.f32.mxu0 0.0
        %1200 = vmatmul.mubr.f32.gmra.mrb[0].mxu0 %v1106
        %v1201 = vpop.f32.mrb[0].mxu0
        %v1202 = vadd.f32 0.0, %v1201
        %v1203 = vpop.f32.mrb[0].mxu0
        %1204 = vdwg.mxu0
        %vm1205 = vcmask 261120
        %v1206 = vsel %vm1205, %v1187, -inf
        %1207 = vmax.xlane.f32.xlu0 %v1206
        %v1208 = vpop.xlane.xlu0 %1207
        %v1209 = vsel %vm1205, %v1192, -inf
        %1210 = vmax.xlane.f32.xlu0 %v1209
        %v1211 = vpop.xlane.xlu0 %1210
        %v1212 = vsel %vm1205, %v1197, -inf
        %1213 = vmax.xlane.f32.xlu0 %v1212
        %v1214 = vpop.xlane.xlu0 %1213
        %v1215 = vsel %vm1205, %v1202, -inf
        %1216 = vmax.xlane.f32.xlu0 %v1215
        %v1217 = vpop.xlane.xlu0 %1216
        %v1218 = vsub.f32 %v1187, %v1208
        %v1219 = vsub.f32 %v1192, %v1211
        %v1220 = vsub.f32 %v1197, %v1214
        %v1221 = vsub.f32 %v1202, %v1217
        %v1222 = vmul.f32 %v1218, 1.442695
        %v1223 = vpow.pop %v1222
        %v1224 = vmul.f32 %v1219, 1.442695
        %v1225 = vpow.pop %v1224
        %v1226 = vmul.f32 %v1220, 1.442695
        %v1227 = vpow.pop %v1226
        %v1228 = vmul.f32 %v1221, 1.442695
        %v1229 = vpow.pop %v1228
        %v1230 = vsel %vm1205, %v1223, 0.0
        %1231 = vadd.xlane.f32.xlu0 %v1230
        %v1232 = vpop.xlane.xlu0 %1231
        %v1233 = vsel %vm1205, %v1225, 0.0
        %1234 = vadd.xlane.f32.xlu0 %v1233
        %v1235 = vpop.xlane.xlu0 %1234
        %v1236 = vsel %vm1205, %v1227, 0.0
        %1237 = vadd.xlane.f32.xlu0 %v1236
        %v1238 = vpop.xlane.xlu0 %1237
        %v1239 = vsel %vm1205, %v1229, 0.0
        %1240 = vadd.xlane.f32.xlu0 %v1239
        %v1241 = vpop.xlane.xlu0 %1240
        %v1242 = vrcp.pop %v1232
        %v1243 = vrcp.pop %v1235
        %v1244 = vrcp.pop %v1238
        %v1245 = vrcp.pop %v1241
        %v1246 = vmul.f32 %v1223, %v1242
        %v1247 = vmul.f32 %v1225, %v1243
        %v1248 = vmul.f32 %v1227, %v1244
        %v1249 = vmul.f32 %v1229, %v1245
        %v1251 = vsel %vm1205, %v1246, 0
        %v1254 = vsel %vm1205, %v1247, 0
        %v1257 = vsel %vm1205, %v1248, 0
        %v1260 = vsel %vm1205, %v1249, 0
        %1262 = vmatprep.subr.mxu0 0.0
        %1263 = vmatpush1.msra.mxu0 %v843
        %1264 = vmatprep.subr.mxu0 0.0
        %1265 = vmatpush1.msra.mxu0 %v848
        %1266 = vmatprep.subr.mxu0 0.0
        %1267 = vmatpush1.msra.mxu0 %v853
        %1268 = vmatprep.subr.mxu0 0.0
        %1269 = vmatpush1.msra.mxu0 %v858
        %1270 = vmatprep.subr.mxu0 0.0
        %1271 = vmatpush1.msra.mxu0 0.0
        %1272 = vmatprep.subr.mxu0 0.0
        %1273 = vmatpush1.msra.mxu0 0.0
        %1274 = vmatprep.subr.mxu0 0.0
        %1275 = vmatpush1.msra.mxu0 0.0
        %1276 = vmatprep.subr.mxu0 0.0
        %1277 = vmatpush1.msra.mxu0 0.0
        %1278 = vmatprep.subr.mxu0 0.0
        %1279 = vmatpush1.msra.mxu0 0.0
        %1280 = vmatprep.subr.mxu0 0.0
        %1281 = vmatpush1.msra.mxu0 0.0
        %1282 = vmatprep.subr.mxu0 0.0
        %1283 = vmatpush1.msra.mxu0 0.0
        %1284 = vmatprep.subr.mxu0 0.0
        %1285 = vmatpush1.msra.mxu0 0.0
        %1286 = vmatprep.subr.mxu0 0.0
        %1287 = vmatpush1.msra.mxu0 0.0
        %1288 = vmatprep.subr.mxu0 0.0
        %1289 = vmatpush1.msra.mxu0 0.0
        %1290 = vmatprep.subr.mxu0 0.0
        %1291 = vmatpush1.msra.mxu0 0.0
        %1292 = vmatprep.subr.mxu0 0.0
        %1293 = vmatpush1.msra.mxu0 0.0
        %1294 = vmatprep.subr.mxu0 0.0
        %1295 = vmatpush1.msra.mxu0 0.0
        %1296 = vmatprep.subr.mxu0 0.0
        %1297 = vmatpush1.msra.mxu0 0.0
        %1298 = vmatprep.subr.mxu0 0.0
        %1299 = vmatpush1.msra.mxu0 0.0
        %1300 = vmatprep.subr.mxu0 0.0
        %1301 = vmatpush1.msra.mxu0 0.0
        %1302 = vmatprep.subr.mxu0 0.0
        %1303 = vmatpush1.msra.mxu0 0.0
        %1304 = vmatprep.subr.mxu0 0.0
        %1305 = vmatpush1.msra.mxu0 0.0
        %1306 = vmatprep.subr.mxu0 0.0
        %1307 = vmatpush1.msra.mxu0 0.0
        %1308 = vmatprep.subr.mxu0 0.0
        %1309 = vmatpush1.msra.mxu0 0.0
        %1310 = vmatprep.subr.mxu0 0.0
        %1311 = vmatpush1.msra.mxu0 0.0
        %1312 = vmatprep.subr.mxu0 0.0
        %1313 = vmatpush1.msra.mxu0 0.0
        %1314 = vmatprep.subr.mxu0 0.0
        %1315 = vmatpush1.msra.mxu0 0.0
        %1316 = vmatprep.subr.mxu0 0.0
        %1317 = vmatpush1.msra.mxu0 0.0
        %1318 = vmatprep.subr.mxu0 0.0
        %1319 = vmatpush1.msra.mxu0 0.0
        %1320 = vmatprep.subr.mxu0 0.0
        %1321 = vmatpush1.msra.mxu0 0.0
        %1322 = vmatprep.subr.mxu0 0.0
        %1323 = vmatpush1.msra.mxu0 0.0
        %1324 = vmatprep.subr.mxu0 0.0
        %1325 = vmatpush1.msra.mxu0 0.0
        %1326 = vmatprep.mubr.f32.mxu0 0.0
        %1327 = vmatmul.mubr.f32.gmra.mrb[0].mxu0 %v1251
        %v1328 = vpop.f32.mrb[0].mxu0
        %v1329 = vadd.f32 0.0, %v1328
        %v1330 = vpop.f32.mrb[0].mxu0
        %1331 = vmatprep.mubr.f32.mxu0 0.0
        %1332 = vmatmul.mubr.f32.gmra.mrb[0].mxu0 %v1254
        %v1333 = vpop.f32.mrb[0].mxu0
        %v1334 = vadd.f32 0.0, %v1333
        %v1335 = vpop.f32.mrb[0].mxu0
        %1336 = vmatprep.mubr.f32.mxu0 0.0
        %1337 = vmatmul.mubr.f32.gmra.mrb[0].mxu0 %v1257
        %v1338 = vpop.f32.mrb[0].mxu0
        %v1339 = vadd.f32 0.0, %v1338
        %v1340 = vpop.f32.mrb[0].mxu0
        %1341 = vmatprep.mubr.f32.mxu0 0.0
        %1342 = vmatmul.mubr.f32.gmra.mrb[0].mxu0 %v1260
        %v1343 = vpop.f32.mrb[0].mxu0
        %v1344 = vadd.f32 0.0, %v1343
        %v1345 = vpop.f32.mrb[0].mxu0
        %1346 = vdwg.mxu0
        %1347 = vrot.lane.b32.xlu0 %v982, 120
        %v1348 = vpop.permute.xlu0 %1347
        %1349 = vrot.lane.b32.xlu0 %v983, 120
        %v1350 = vpop.permute.xlu0 %1349
        %1351 = vrot.lane.b32.xlu0 %v984, 120
        %v1352 = vpop.permute.xlu0 %1351
        %1353 = vrot.lane.b32.xlu0 %v985, 120
        %v1354 = vpop.permute.xlu0 %1353
        %1355 = vrot.lane.b32.xlu0 %v1091, 120
        %v1356 = vpop.permute.xlu0 %1355
        %1357 = vrot.lane.b32.xlu0 %v1092, 120
        %v1358 = vpop.permute.xlu0 %1357
        %1359 = vrot.lane.b32.xlu0 %v1093, 120
        %v1360 = vpop.permute.xlu0 %1359
        %1361 = vrot.lane.b32.xlu0 %v1094, 120
        %v1362 = vpop.permute.xlu0 %1361
        %v1363 = vsel %vm1095, %v1348, 0
        %v1365 = vsel %vm1095, %v1350, 0
        %v1367 = vsel %vm1095, %v1352, 0
        %v1369 = vsel %vm1095, %v1354, 0
        %v1371 = vsel %vm1095, %v1356, 0
        %v1373 = vsel %vm1095, %v1358, 0
        %v1375 = vsel %vm1095, %v1360, 0
        %v1377 = vsel %vm1095, %v1362, 0
        %1379 = vmatprep.subr.mxu0 0.0
        %1380 = vmatpush1.xpose.msra.mxu0 %v1371
        %1381 = vmatprep.subr.mxu0 0.0
        %1382 = vmatpush1.xpose.msra.mxu0 %v1373
        %1383 = vmatprep.subr.mxu0 0.0
        %1384 = vmatpush1.xpose.msra.mxu0 %v1375
        %1385 = vmatprep.subr.mxu0 0.0
        %1386 = vmatpush1.xpose.msra.mxu0 %v1377
        %1387 = vmatprep.subr.mxu0 0.0
        %1388 = vmatpush1.xpose.msra.mxu0 0.0
        %1389 = vmatprep.subr.mxu0 0.0
        %1390 = vmatpush1.xpose.msra.mxu0 0.0
        %1391 = vmatprep.subr.mxu0 0.0
        %1392 = vmatpush1.xpose.msra.mxu0 0.0
        %1393 = vmatprep.subr.mxu0 0.0
        %1394 = vmatpush1.xpose.msra.mxu0 0.0
        %1395 = vmatprep.subr.mxu0 0.0
        %1396 = vmatpush1.xpose.msra.mxu0 0.0
        %1397 = vmatprep.subr.mxu0 0.0
        %1398 = vmatpush1.xpose.msra.mxu0 0.0
        %1399 = vmatprep.subr.mxu0 0.0
        %1400 = vmatpush1.xpose.msra.mxu0 0.0
        %1401 = vmatprep.subr.mxu0 0.0
        %1402 = vmatpush1.xpose.msra.mxu0 0.0
        %1403 = vmatprep.subr.mxu0 0.0
        %1404 = vmatpush1.xpose.msra.mxu0 0.0
        %1405 = vmatprep.subr.mxu0 0.0
        %1406 = vmatpush1.xpose.msra.mxu0 0.0
        %1407 = vmatprep.subr.mxu0 0.0
        %1408 = vmatpush1.xpose.msra.mxu0 0.0
        %1409 = vmatprep.subr.mxu0 0.0
        %1410 = vmatpush1.xpose.msra.mxu0 0.0
        %1411 = vmatprep.subr.mxu0 0.0
        %1412 = vmatpush1.xpose.msra.mxu0 0.0
        %1413 = vmatprep.subr.mxu0 0.0
        %1414 = vmatpush1.xpose.msra.mxu0 0.0
        %1415 = vmatprep.subr.mxu0 0.0
        %1416 = vmatpush1.xpose.msra.mxu0 0.0
        %1417 = vmatprep.subr.mxu0 0.0
        %1418 = vmatpush1.xpose.msra.mxu0 0.0
        %1419 = vmatprep.subr.mxu0 0.0
        %1420 = vmatpush1.xpose.msra.mxu0 0.0
        %1421 = vmatprep.subr.mxu0 0.0
        %1422 = vmatpush1.xpose.msra.mxu0 0.0
        %1423 = vmatprep.subr.mxu0 0.0
        %1424 = vmatpush1.xpose.msra.mxu0 0.0
        %1425 = vmatprep.subr.mxu0 0.0
        %1426 = vmatpush1.xpose.msra.mxu0 0.0
        %1427 = vmatprep.subr.mxu0 0.0
        %1428 = vmatpush1.xpose.msra.mxu0 0.0
        %1429 = vmatprep.subr.mxu0 0.0
        %1430 = vmatpush1.xpose.msra.mxu0 0.0
        %1431 = vmatprep.subr.mxu0 0.0
        %1432 = vmatpush1.xpose.msra.mxu0 0.0
        %1433 = vmatprep.subr.mxu0 0.0
        %1434 = vmatpush1.xpose.msra.mxu0 0.0
        %1435 = vmatprep.subr.mxu0 0.0
        %1436 = vmatpush1.xpose.msra.mxu0 0.0
        %1437 = vmatprep.subr.mxu0 0.0
        %1438 = vmatpush1.xpose.msra.mxu0 0.0
        %1439 = vmatprep.subr.mxu0 0.0
        %1440 = vmatpush1.xpose.msra.mxu0 0.0
        %1441 = vmatprep.subr.mxu0 0.0
        %1442 = vmatpush1.xpose.msra.mxu0 0.0
        %1443 = vmatprep.mubr.f32.mxu0 0.0
        %1444 = vmatmul.mubr.f32.gmra.mrb[0].mxu0 %v1363
        %v1445 = vpop.f32.mrb[0].mxu0
        %v1446 = vadd.f32 0.0, %v1445
        %v1447 = vpop.f32.mrb[0].mxu0
        %1448 = vmatprep.mubr.f32.mxu0 0.0
        %1449 = vmatmul.mubr.f32.gmra.mrb[0].mxu0 %v1365
        %v1450 = vpop.f32.mrb[0].mxu0
        %v1451 = vadd.f32 0.0, %v1450
        %v1452 = vpop.f32.mrb[0].mxu0
        %1453 = vmatprep.mubr.f32.mxu0 0.0
        %1454 = vmatmul.mubr.f32.gmra.mrb[0].mxu0 %v1367
        %v1455 = vpop.f32.mrb[0].mxu0
        %v1456 = vadd.f32 0.0, %v1455
        %v1457 = vpop.f32.mrb[0].mxu0
        %1458 = vmatprep.mubr.f32.mxu0 0.0
        %1459 = vmatmul.mubr.f32.gmra.mrb[0].mxu0 %v1369
        %v1460 = vpop.f32.mrb[0].mxu0
        %v1461 = vadd.f32 0.0, %v1460
        %v1462 = vpop.f32.mrb[0].mxu0
        %1463 = vdwg.mxu0
        %v1464 = vsel %vm1205, %v1446, -inf
        %1465 = vmax.xlane.f32.xlu0 %v1464
        %v1466 = vpop.xlane.xlu0 %1465
        %v1467 = vsel %vm1205, %v1451, -inf
        %1468 = vmax.xlane.f32.xlu0 %v1467
        %v1469 = vpop.xlane.xlu0 %1468
        %v1470 = vsel %vm1205, %v1456, -inf
        %1471 = vmax.xlane.f32.xlu0 %v1470
        %v1472 = vpop.xlane.xlu0 %1471
        %v1473 = vsel %vm1205, %v1461, -inf
        %1474 = vmax.xlane.f32.xlu0 %v1473
        %v1475 = vpop.xlane.xlu0 %1474
        %v1476 = vsub.f32 %v1446, %v1466
        %v1477 = vsub.f32 %v1451, %v1469
        %v1478 = vsub.f32 %v1456, %v1472
        %v1479 = vsub.f32 %v1461, %v1475
        %v1480 = vmul.f32 %v1476, 1.442695
        %v1481 = vpow.pop %v1480
        %v1482 = vmul.f32 %v1477, 1.442695
        %v1483 = vpow.pop %v1482
        %v1484 = vmul.f32 %v1478, 1.442695
        %v1485 = vpow.pop %v1484
        %v1486 = vmul.f32 %v1479, 1.442695
        %v1487 = vpow.pop %v1486
        %v1488 = vsel %vm1205, %v1481, 0.0
        %1489 = vadd.xlane.f32.xlu0 %v1488
        %v1490 = vpop.xlane.xlu0 %1489
        %v1491 = vsel %vm1205, %v1483, 0.0
        %1492 = vadd.xlane.f32.xlu0 %v1491
        %v1493 = vpop.xlane.xlu0 %1492
        %v1494 = vsel %vm1205, %v1485, 0.0
        %1495 = vadd.xlane.f32.xlu0 %v1494
        %v1496 = vpop.xlane.xlu0 %1495
        %v1497 = vsel %vm1205, %v1487, 0.0
        %1498 = vadd.xlane.f32.xlu0 %v1497
        %v1499 = vpop.xlane.xlu0 %1498
        %v1500 = vrcp.pop %v1490
        %v1501 = vrcp.pop %v1493
        %v1502 = vrcp.pop %v1496
        %v1503 = vrcp.pop %v1499
        %v1504 = vmul.f32 %v1481, %v1500
        %v1505 = vmul.f32 %v1483, %v1501
        %v1506 = vmul.f32 %v1485, %v1502
        %v1507 = vmul.f32 %v1487, %v1503
        %1512 = vrot.lane.b32.xlu0 %v843, 120
        %v1513 = vpop.permute.xlu0 %1512
        %1514 = vrot.lane.b32.xlu0 %v848, 120
        %v1515 = vpop.permute.xlu0 %1514
        %1516 = vrot.lane.b32.xlu0 %v853, 120
        %v1517 = vpop.permute.xlu0 %1516
        %1518 = vrot.lane.b32.xlu0 %v858, 120
        %v1519 = vpop.permute.xlu0 %1518
        %v1525 = vsel %vm1205, %v1504, 0
        %v1528 = vsel %vm1205, %v1505, 0
        %v1531 = vsel %vm1205, %v1506, 0
        %v1534 = vsel %vm1205, %v1507, 0
        %1536 = vmatprep.subr.mxu0 0.0
        %1537 = vmatpush1.msra.mxu0 %v1513
        %1538 = vmatprep.subr.mxu0 0.0
        %1539 = vmatpush1.msra.mxu0 %v1515
        %1540 = vmatprep.subr.mxu0 0.0
        %1541 = vmatpush1.msra.mxu0 %v1517
        %1542 = vmatprep.subr.mxu0 0.0
        %1543 = vmatpush1.msra.mxu0 %v1519
        %1544 = vmatprep.subr.mxu0 0.0
        %1545 = vmatpush1.msra.mxu0 0.0
        %1546 = vmatprep.subr.mxu0 0.0
        %1547 = vmatpush1.msra.mxu0 0.0
        %1548 = vmatprep.subr.mxu0 0.0
        %1549 = vmatpush1.msra.mxu0 0.0
        %1550 = vmatprep.subr.mxu0 0.0
        %1551 = vmatpush1.msra.mxu0 0.0
        %1552 = vmatprep.subr.mxu0 0.0
        %1553 = vmatpush1.msra.mxu0 0.0
        %1554 = vmatprep.subr.mxu0 0.0
        %1555 = vmatpush1.msra.mxu0 0.0
        %1556 = vmatprep.subr.mxu0 0.0
        %1557 = vmatpush1.msra.mxu0 0.0
        %1558 = vmatprep.subr.mxu0 0.0
        %1559 = vmatpush1.msra.mxu0 0.0
        %1560 = vmatprep.subr.mxu0 0.0
        %1561 = vmatpush1.msra.mxu0 0.0
        %1562 = vmatprep.subr.mxu0 0.0
        %1563 = vmatpush1.msra.mxu0 0.0
        %1564 = vmatprep.subr.mxu0 0.0
        %1565 = vmatpush1.msra.mxu0 0.0
        %1566 = vmatprep.subr.mxu0 0.0
        %1567 = vmatpush1.msra.mxu0 0.0
        %1568 = vmatprep.subr.mxu0 0.0
        %1569 = vmatpush1.msra.mxu0 0.0
        %1570 = vmatprep.subr.mxu0 0.0
        %1571 = vmatpush1.msra.mxu0 0.0
        %1572 = vmatprep.subr.mxu0 0.0
        %1573 = vmatpush1.msra.mxu0 0.0
        %1574 = vmatprep.subr.mxu0 0.0
        %1575 = vmatpush1.msra.mxu0 0.0
        %1576 = vmatprep.subr.mxu0 0.0
        %1577 = vmatpush1.msra.mxu0 0.0
        %1578 = vmatprep.subr.mxu0 0.0
        %1579 = vmatpush1.msra.mxu0 0.0
        %1580 = vmatprep.subr.mxu0 0.0
        %1581 = vmatpush1.msra.mxu0 0.0
        %1582 = vmatprep.subr.mxu0 0.0
        %1583 = vmatpush1.msra.mxu0 0.0
        %1584 = vmatprep.subr.mxu0 0.0
        %1585 = vmatpush1.msra.mxu0 0.0
        %1586 = vmatprep.subr.mxu0 0.0
        %1587 = vmatpush1.msra.mxu0 0.0
        %1588 = vmatprep.subr.mxu0 0.0
        %1589 = vmatpush1.msra.mxu0 0.0
        %1590 = vmatprep.subr.mxu0 0.0
        %1591 = vmatpush1.msra.mxu0 0.0
        %1592 = vmatprep.subr.mxu0 0.0
        %1593 = vmatpush1.msra.mxu0 0.0
        %1594 = vmatprep.subr.mxu0 0.0
        %1595 = vmatpush1.msra.mxu0 0.0
        %1596 = vmatprep.subr.mxu0 0.0
        %1597 = vmatpush1.msra.mxu0 0.0
        %1598 = vmatprep.subr.mxu0 0.0
        %1599 = vmatpush1.msra.mxu0 0.0
        %1600 = vmatprep.mubr.f32.mxu0 0.0
        %1601 = vmatmul.mubr.f32.gmra.mrb[0].mxu0 %v1525
        %v1602 = vpop.f32.mrb[0].mxu0
        %v1603 = vadd.f32 0.0, %v1602
        %v1604 = vpop.f32.mrb[0].mxu0
        %1605 = vmatprep.mubr.f32.mxu0 0.0
        %1606 = vmatmul.mubr.f32.gmra.mrb[0].mxu0 %v1528
        %v1607 = vpop.f32.mrb[0].mxu0
        %v1608 = vadd.f32 0.0, %v1607
        %v1609 = vpop.f32.mrb[0].mxu0
        %1610 = vmatprep.mubr.f32.mxu0 0.0
        %1611 = vmatmul.mubr.f32.gmra.mrb[0].mxu0 %v1531
        %v1612 = vpop.f32.mrb[0].mxu0
        %v1613 = vadd.f32 0.0, %v1612
        %v1614 = vpop.f32.mrb[0].mxu0
        %1615 = vmatprep.mubr.f32.mxu0 0.0
        %1616 = vmatmul.mubr.f32.gmra.mrb[0].mxu0 %v1534
        %v1617 = vpop.f32.mrb[0].mxu0
        %v1618 = vadd.f32 0.0, %v1617
        %v1619 = vpop.f32.mrb[0].mxu0
        %1620 = vdwg.mxu0
        %1621 = vrot.lane.b32.xlu0 %v982, 112
        %v1622 = vpop.permute.xlu0 %1621
        %1623 = vrot.lane.b32.xlu0 %v983, 112
        %v1624 = vpop.permute.xlu0 %1623
        %1625 = vrot.lane.b32.xlu0 %v984, 112
        %v1626 = vpop.permute.xlu0 %1625
        %1627 = vrot.lane.b32.xlu0 %v985, 112
        %v1628 = vpop.permute.xlu0 %1627
        %1629 = vrot.lane.b32.xlu0 %v1091, 112
        %v1630 = vpop.permute.xlu0 %1629
        %1631 = vrot.lane.b32.xlu0 %v1092, 112
        %v1632 = vpop.permute.xlu0 %1631
        %1633 = vrot.lane.b32.xlu0 %v1093, 112
        %v1634 = vpop.permute.xlu0 %1633
        %1635 = vrot.lane.b32.xlu0 %v1094, 112
        %v1636 = vpop.permute.xlu0 %1635
        %v1637 = vsel %vm1095, %v1622, 0
        %v1639 = vsel %vm1095, %v1624, 0
        %v1641 = vsel %vm1095, %v1626, 0
        %v1643 = vsel %vm1095, %v1628, 0
        %v1645 = vsel %vm1095, %v1630, 0
        %v1647 = vsel %vm1095, %v1632, 0
        %v1649 = vsel %vm1095, %v1634, 0
        %v1651 = vsel %vm1095, %v1636, 0
        %1653 = vmatprep.subr.mxu0 0.0
        %1654 = vmatpush1.xpose.msra.mxu0 %v1645
        %1655 = vmatprep.subr.mxu0 0.0
        %1656 = vmatpush1.xpose.msra.mxu0 %v1647
        %1657 = vmatprep.subr.mxu0 0.0
        %1658 = vmatpush1.xpose.msra.mxu0 %v1649
        %1659 = vmatprep.subr.mxu0 0.0
        %1660 = vmatpush1.xpose.msra.mxu0 %v1651
        %1661 = vmatprep.subr.mxu0 0.0
        %1662 = vmatpush1.xpose.msra.mxu0 0.0
        %1663 = vmatprep.subr.mxu0 0.0
        %1664 = vmatpush1.xpose.msra.mxu0 0.0
        %1665 = vmatprep.subr.mxu0 0.0
        %1666 = vmatpush1.xpose.msra.mxu0 0.0
        %1667 = vmatprep.subr.mxu0 0.0
        %1668 = vmatpush1.xpose.msra.mxu0 0.0
        %1669 = vmatprep.subr.mxu0 0.0
        %1670 = vmatpush1.xpose.msra.mxu0 0.0
        %1671 = vmatprep.subr.mxu0 0.0
        %1672 = vmatpush1.xpose.msra.mxu0 0.0
        %1673 = vmatprep.subr.mxu0 0.0
        %1674 = vmatpush1.xpose.msra.mxu0 0.0
        %1675 = vmatprep.subr.mxu0 0.0
        %1676 = vmatpush1.xpose.msra.mxu0 0.0
        %1677 = vmatprep.subr.mxu0 0.0
        %1678 = vmatpush1.xpose.msra.mxu0 0.0
        %1679 = vmatprep.subr.mxu0 0.0
        %1680 = vmatpush1.xpose.msra.mxu0 0.0
        %1681 = vmatprep.subr.mxu0 0.0
        %1682 = vmatpush1.xpose.msra.mxu0 0.0
        %1683 = vmatprep.subr.mxu0 0.0
        %1684 = vmatpush1.xpose.msra.mxu0 0.0
        %1685 = vmatprep.subr.mxu0 0.0
        %1686 = vmatpush1.xpose.msra.mxu0 0.0
        %1687 = vmatprep.subr.mxu0 0.0
        %1688 = vmatpush1.xpose.msra.mxu0 0.0
        %1689 = vmatprep.subr.mxu0 0.0
        %1690 = vmatpush1.xpose.msra.mxu0 0.0
        %1691 = vmatprep.subr.mxu0 0.0
        %1692 = vmatpush1.xpose.msra.mxu0 0.0
        %1693 = vmatprep.subr.mxu0 0.0
        %1694 = vmatpush1.xpose.msra.mxu0 0.0
        %1695 = vmatprep.subr.mxu0 0.0
        %1696 = vmatpush1.xpose.msra.mxu0 0.0
        %1697 = vmatprep.subr.mxu0 0.0
        %1698 = vmatpush1.xpose.msra.mxu0 0.0
        %1699 = vmatprep.subr.mxu0 0.0
        %1700 = vmatpush1.xpose.msra.mxu0 0.0
        %1701 = vmatprep.subr.mxu0 0.0
        %1702 = vmatpush1.xpose.msra.mxu0 0.0
        %1703 = vmatprep.subr.mxu0 0.0
        %1704 = vmatpush1.xpose.msra.mxu0 0.0
        %1705 = vmatprep.subr.mxu0 0.0
        %1706 = vmatpush1.xpose.msra.mxu0 0.0
        %1707 = vmatprep.subr.mxu0 0.0
        %1708 = vmatpush1.xpose.msra.mxu0 0.0
        %1709 = vmatprep.subr.mxu0 0.0
        %1710 = vmatpush1.xpose.msra.mxu0 0.0
        %1711 = vmatprep.subr.mxu0 0.0
        %1712 = vmatpush1.xpose.msra.mxu0 0.0
        %1713 = vmatprep.subr.mxu0 0.0
        %1714 = vmatpush1.xpose.msra.mxu0 0.0
        %1715 = vmatprep.subr.mxu0 0.0
        %1716 = vmatpush1.xpose.msra.mxu0 0.0
        %1717 = vmatprep.mubr.f32.mxu0 0.0
        %1718 = vmatmul.mubr.f32.gmra.mrb[0].mxu0 %v1637
        %v1719 = vpop.f32.mrb[0].mxu0
        %v1720 = vadd.f32 0.0, %v1719
        %v1721 = vpop.f32.mrb[0].mxu0
        %1722 = vmatprep.mubr.f32.mxu0 0.0
        %1723 = vmatmul.mubr.f32.gmra.mrb[0].mxu0 %v1639
        %v1724 = vpop.f32.mrb[0].mxu0
        %v1725 = vadd.f32 0.0, %v1724
        %v1726 = vpop.f32.mrb[0].mxu0
        %1727 = vmatprep.mubr.f32.mxu0 0.0
        %1728 = vmatmul.mubr.f32.gmra.mrb[0].mxu0 %v1641
        %v1729 = vpop.f32.mrb[0].mxu0
        %v1730 = vadd.f32 0.0, %v1729
        %v1731 = vpop.f32.mrb[0].mxu0
        %1732 = vmatprep.mubr.f32.mxu0 0.0
        %1733 = vmatmul.mubr.f32.gmra.mrb[0].mxu0 %v1643
        %v1734 = vpop.f32.mrb[0].mxu0
        %v1735 = vadd.f32 0.0, %v1734
        %v1736 = vpop.f32.mrb[0].mxu0
        %1737 = vdwg.mxu0
        %v1738 = vsel %vm1205, %v1720, -inf
        %1739 = vmax.xlane.f32.xlu0 %v1738
        %v1740 = vpop.xlane.xlu0 %1739
        %v1741 = vsel %vm1205, %v1725, -inf
        %1742 = vmax.xlane.f32.xlu0 %v1741
        %v1743 = vpop.xlane.xlu0 %1742
        %v1744 = vsel %vm1205, %v1730, -inf
        %1745 = vmax.xlane.f32.xlu0 %v1744
        %v1746 = vpop.xlane.xlu0 %1745
        %v1747 = vsel %vm1205, %v1735, -inf
        %1748 = vmax.xlane.f32.xlu0 %v1747
        %v1749 = vpop.xlane.xlu0 %1748
        %v1750 = vsub.f32 %v1720, %v1740
        %v1751 = vsub.f32 %v1725, %v1743
        %v1752 = vsub.f32 %v1730, %v1746
        %v1753 = vsub.f32 %v1735, %v1749
        %v1754 = vmul.f32 %v1750, 1.442695
        %v1755 = vpow.pop %v1754
        %v1756 = vmul.f32 %v1751, 1.442695
        %v1757 = vpow.pop %v1756
        %v1758 = vmul.f32 %v1752, 1.442695
        %v1759 = vpow.pop %v1758
        %v1760 = vmul.f32 %v1753, 1.442695
        %v1761 = vpow.pop %v1760
        %v1762 = vsel %vm1205, %v1755, 0.0
        %1763 = vadd.xlane.f32.xlu0 %v1762
        %v1764 = vpop.xlane.xlu0 %1763
        %v1765 = vsel %vm1205, %v1757, 0.0
        %1766 = vadd.xlane.f32.xlu0 %v1765
        %v1767 = vpop.xlane.xlu0 %1766
        %v1768 = vsel %vm1205, %v1759, 0.0
        %1769 = vadd.xlane.f32.xlu0 %v1768
        %v1770 = vpop.xlane.xlu0 %1769
        %v1771 = vsel %vm1205, %v1761, 0.0
        %1772 = vadd.xlane.f32.xlu0 %v1771
        %v1773 = vpop.xlane.xlu0 %1772
        %v1774 = vrcp.pop %v1764
        %v1775 = vrcp.pop %v1767
        %v1776 = vrcp.pop %v1770
        %v1777 = vrcp.pop %v1773
        %v1778 = vmul.f32 %v1755, %v1774
        %v1779 = vmul.f32 %v1757, %v1775
        %v1780 = vmul.f32 %v1759, %v1776
        %v1781 = vmul.f32 %v1761, %v1777
        %1782 = vrot.lane.b32.xlu0 %v843, 112
        %v1783 = vpop.permute.xlu0 %1782
        %1784 = vrot.lane.b32.xlu0 %v848, 112
        %v1785 = vpop.permute.xlu0 %1784
        %1786 = vrot.lane.b32.xlu0 %v853, 112
        %v1787 = vpop.permute.xlu0 %1786
        %1788 = vrot.lane.b32.xlu0 %v858, 112
        %v1789 = vpop.permute.xlu0 %1788
        %v1795 = vsel %vm1205, %v1778, 0
        %v1798 = vsel %vm1205, %v1779, 0
        %v1801 = vsel %vm1205, %v1780, 0
        %v1804 = vsel %vm1205, %v1781, 0
        %1806 = vmatprep.subr.mxu0 0.0
        %1807 = vmatpush1.msra.mxu0 %v1783
        %1808 = vmatprep.subr.mxu0 0.0
        %1809 = vmatpush1.msra.mxu0 %v1785
        %1810 = vmatprep.subr.mxu0 0.0
        %1811 = vmatpush1.msra.mxu0 %v1787
        %1812 = vmatprep.subr.mxu0 0.0
        %1813 = vmatpush1.msra.mxu0 %v1789
        %1814 = vmatprep.subr.mxu0 0.0
        %1815 = vmatpush1.msra.mxu0 0.0
        %1816 = vmatprep.subr.mxu0 0.0
        %1817 = vmatpush1.msra.mxu0 0.0
        %1818 = vmatprep.subr.mxu0 0.0
        %1819 = vmatpush1.msra.mxu0 0.0
        %1820 = vmatprep.subr.mxu0 0.0
        %1821 = vmatpush1.msra.mxu0 0.0
        %1822 = vmatprep.subr.mxu0 0.0
        %1823 = vmatpush1.msra.mxu0 0.0
        %1824 = vmatprep.subr.mxu0 0.0
        %1825 = vmatpush1.msra.mxu0 0.0
        %1826 = vmatprep.subr.mxu0 0.0
        %1827 = vmatpush1.msra.mxu0 0.0
        %1828 = vmatprep.subr.mxu0 0.0
        %1829 = vmatpush1.msra.mxu0 0.0
        %1830 = vmatprep.subr.mxu0 0.0
        %1831 = vmatpush1.msra.mxu0 0.0
        %1832 = vmatprep.subr.mxu0 0.0
        %1833 = vmatpush1.msra.mxu0 0.0
        %1834 = vmatprep.subr.mxu0 0.0
        %1835 = vmatpush1.msra.mxu0 0.0
        %1836 = vmatprep.subr.mxu0 0.0
        %1837 = vmatpush1.msra.mxu0 0.0
        %1838 = vmatprep.subr.mxu0 0.0
        %1839 = vmatpush1.msra.mxu0 0.0
        %1840 = vmatprep.subr.mxu0 0.0
        %1841 = vmatpush1.msra.mxu0 0.0
        %1842 = vmatprep.subr.mxu0 0.0
        %1843 = vmatpush1.msra.mxu0 0.0
        %1844 = vmatprep.subr.mxu0 0.0
        %1845 = vmatpush1.msra.mxu0 0.0
        %1846 = vmatprep.subr.mxu0 0.0
        %1847 = vmatpush1.msra.mxu0 0.0
        %1848 = vmatprep.subr.mxu0 0.0
        %1849 = vmatpush1.msra.mxu0 0.0
        %1850 = vmatprep.subr.mxu0 0.0
        %1851 = vmatpush1.msra.mxu0 0.0
        %1852 = vmatprep.subr.mxu0 0.0
        %1853 = vmatpush1.msra.mxu0 0.0
        %1854 = vmatprep.subr.mxu0 0.0
        %1855 = vmatpush1.msra.mxu0 0.0
        %1856 = vmatprep.subr.mxu0 0.0
        %1857 = vmatpush1.msra.mxu0 0.0
        %1858 = vmatprep.subr.mxu0 0.0
        %1859 = vmatpush1.msra.mxu0 0.0
        %1860 = vmatprep.subr.mxu0 0.0
        %1861 = vmatpush1.msra.mxu0 0.0
        %1862 = vmatprep.subr.mxu0 0.0
        %1863 = vmatpush1.msra.mxu0 0.0
        %1864 = vmatprep.subr.mxu0 0.0
        %1865 = vmatpush1.msra.mxu0 0.0
        %1866 = vmatprep.subr.mxu0 0.0
        %1867 = vmatpush1.msra.mxu0 0.0
        %1868 = vmatprep.subr.mxu0 0.0
        %1869 = vmatpush1.msra.mxu0 0.0
        %1870 = vmatprep.mubr.f32.mxu0 0.0
        %1871 = vmatmul.mubr.f32.gmra.mrb[0].mxu0 %v1795
        %v1872 = vpop.f32.mrb[0].mxu0
        %v1873 = vadd.f32 0.0, %v1872
        %v1874 = vpop.f32.mrb[0].mxu0
        %1875 = vmatprep.mubr.f32.mxu0 0.0
        %1876 = vmatmul.mubr.f32.gmra.mrb[0].mxu0 %v1798
        %v1877 = vpop.f32.mrb[0].mxu0
        %v1878 = vadd.f32 0.0, %v1877
        %v1879 = vpop.f32.mrb[0].mxu0
        %1880 = vmatprep.mubr.f32.mxu0 0.0
        %1881 = vmatmul.mubr.f32.gmra.mrb[0].mxu0 %v1801
        %v1882 = vpop.f32.mrb[0].mxu0
        %v1883 = vadd.f32 0.0, %v1882
        %v1884 = vpop.f32.mrb[0].mxu0
        %1885 = vmatprep.mubr.f32.mxu0 0.0
        %1886 = vmatmul.mubr.f32.gmra.mrb[0].mxu0 %v1804
        %v1887 = vpop.f32.mrb[0].mxu0
        %v1888 = vadd.f32 0.0, %v1887
        %v1889 = vpop.f32.mrb[0].mxu0
        %1890 = vdwg.mxu0
        %1891 = vrot.lane.b32.xlu0 %v982, 104
        %v1892 = vpop.permute.xlu0 %1891
        %1893 = vrot.lane.b32.xlu0 %v983, 104
        %v1894 = vpop.permute.xlu0 %1893
        %1895 = vrot.lane.b32.xlu0 %v984, 104
        %v1896 = vpop.permute.xlu0 %1895
        %1897 = vrot.lane.b32.xlu0 %v985, 104
        %v1898 = vpop.permute.xlu0 %1897
        %1899 = vrot.lane.b32.xlu0 %v1091, 104
        %v1900 = vpop.permute.xlu0 %1899
        %1901 = vrot.lane.b32.xlu0 %v1092, 104
        %v1902 = vpop.permute.xlu0 %1901
        %1903 = vrot.lane.b32.xlu0 %v1093, 104
        %v1904 = vpop.permute.xlu0 %1903
        %1905 = vrot.lane.b32.xlu0 %v1094, 104
        %v1906 = vpop.permute.xlu0 %1905
        %v1907 = vsel %vm1095, %v1892, 0
        %v1909 = vsel %vm1095, %v1894, 0
        %v1911 = vsel %vm1095, %v1896, 0
        %v1913 = vsel %vm1095, %v1898, 0
        %v1915 = vsel %vm1095, %v1900, 0
        %v1917 = vsel %vm1095, %v1902, 0
        %v1919 = vsel %vm1095, %v1904, 0
        %v1921 = vsel %vm1095, %v1906, 0
        %1923 = vmatprep.subr.mxu0 0.0
        %1924 = vmatpush1.xpose.msra.mxu0 %v1915
        %1925 = vmatprep.subr.mxu0 0.0
        %1926 = vmatpush1.xpose.msra.mxu0 %v1917
        %1927 = vmatprep.subr.mxu0 0.0
        %1928 = vmatpush1.xpose.msra.mxu0 %v1919
        %1929 = vmatprep.subr.mxu0 0.0
        %1930 = vmatpush1.xpose.msra.mxu0 %v1921
        %1931 = vmatprep.subr.mxu0 0.0
        %1932 = vmatpush1.xpose.msra.mxu0 0.0
        %1933 = vmatprep.subr.mxu0 0.0
        %1934 = vmatpush1.xpose.msra.mxu0 0.0
        %1935 = vmatprep.subr.mxu0 0.0
        %1936 = vmatpush1.xpose.msra.mxu0 0.0
        %1937 = vmatprep.subr.mxu0 0.0
        %1938 = vmatpush1.xpose.msra.mxu0 0.0
        %1939 = vmatprep.subr.mxu0 0.0
        %1940 = vmatpush1.xpose.msra.mxu0 0.0
        %1941 = vmatprep.subr.mxu0 0.0
        %1942 = vmatpush1.xpose.msra.mxu0 0.0
        %1943 = vmatprep.subr.mxu0 0.0
        %1944 = vmatpush1.xpose.msra.mxu0 0.0
        %1945 = vmatprep.subr.mxu0 0.0
        %1946 = vmatpush1.xpose.msra.mxu0 0.0
        %1947 = vmatprep.subr.mxu0 0.0
        %1948 = vmatpush1.xpose.msra.mxu0 0.0
        %1949 = vmatprep.subr.mxu0 0.0
        %1950 = vmatpush1.xpose.msra.mxu0 0.0
        %1951 = vmatprep.subr.mxu0 0.0
        %1952 = vmatpush1.xpose.msra.mxu0 0.0
        %1953 = vmatprep.subr.mxu0 0.0
        %1954 = vmatpush1.xpose.msra.mxu0 0.0
        %1955 = vmatprep.subr.mxu0 0.0
        %1956 = vmatpush1.xpose.msra.mxu0 0.0
        %1957 = vmatprep.subr.mxu0 0.0
        %1958 = vmatpush1.xpose.msra.mxu0 0.0
        %1959 = vmatprep.subr.mxu0 0.0
        %1960 = vmatpush1.xpose.msra.mxu0 0.0
        %1961 = vmatprep.subr.mxu0 0.0
        %1962 = vmatpush1.xpose.msra.mxu0 0.0
        %1963 = vmatprep.subr.mxu0 0.0
        %1964 = vmatpush1.xpose.msra.mxu0 0.0
        %1965 = vmatprep.subr.mxu0 0.0
        %1966 = vmatpush1.xpose.msra.mxu0 0.0
        %1967 = vmatprep.subr.mxu0 0.0
        %1968 = vmatpush1.xpose.msra.mxu0 0.0
        %1969 = vmatprep.subr.mxu0 0.0
        %1970 = vmatpush1.xpose.msra.mxu0 0.0
        %1971 = vmatprep.subr.mxu0 0.0
        %1972 = vmatpush1.xpose.msra.mxu0 0.0
        %1973 = vmatprep.subr.mxu0 0.0
        %1974 = vmatpush1.xpose.msra.mxu0 0.0
        %1975 = vmatprep.subr.mxu0 0.0
        %1976 = vmatpush1.xpose.msra.mxu0 0.0
        %1977 = vmatprep.subr.mxu0 0.0
        %1978 = vmatpush1.xpose.msra.mxu0 0.0
        %1979 = vmatprep.subr.mxu0 0.0
        %1980 = vmatpush1.xpose.msra.mxu0 0.0
        %1981 = vmatprep.subr.mxu0 0.0
        %1982 = vmatpush1.xpose.msra.mxu0 0.0
        %1983 = vmatprep.subr.mxu0 0.0
        %1984 = vmatpush1.xpose.msra.mxu0 0.0
        %1985 = vmatprep.subr.mxu0 0.0
        %1986 = vmatpush1.xpose.msra.mxu0 0.0
        %1987 = vmatprep.mubr.f32.mxu0 0.0
        %1988 = vmatmul.mubr.f32.gmra.mrb[0].mxu0 %v1907
        %v1989 = vpop.f32.mrb[0].mxu0
        %v1990 = vadd.f32 0.0, %v1989
        %v1991 = vpop.f32.mrb[0].mxu0
        %1992 = vmatprep.mubr.f32.mxu0 0.0
        %1993 = vmatmul.mubr.f32.gmra.mrb[0].mxu0 %v1909
        %v1994 = vpop.f32.mrb[0].mxu0
        %v1995 = vadd.f32 0.0, %v1994
        %v1996 = vpop.f32.mrb[0].mxu0
        %1997 = vmatprep.mubr.f32.mxu0 0.0
        %1998 = vmatmul.mubr.f32.gmra.mrb[0].mxu0 %v1911
        %v1999 = vpop.f32.mrb[0].mxu0
        %v2000 = vadd.f32 0.0, %v1999
        %v2001 = vpop.f32.mrb[0].mxu0
        %2002 = vmatprep.mubr.f32.mxu0 0.0
        %2003 = vmatmul.mubr.f32.gmra.mrb[0].mxu0 %v1913
        %v2004 = vpop.f32.mrb[0].mxu0
        %v2005 = vadd.f32 0.0, %v2004
        %v2006 = vpop.f32.mrb[0].mxu0
        %2007 = vdwg.mxu0
        %v2008 = vsel %vm1205, %v1990, -inf
        %2009 = vmax.xlane.f32.xlu0 %v2008
        %v2010 = vpop.xlane.xlu0 %2009
        %v2011 = vsel %vm1205, %v1995, -inf
        %2012 = vmax.xlane.f32.xlu0 %v2011
        %v2013 = vpop.xlane.xlu0 %2012
        %v2014 = vsel %vm1205, %v2000, -inf
        %2015 = vmax.xlane.f32.xlu0 %v2014
        %v2016 = vpop.xlane.xlu0 %2015
        %v2017 = vsel %vm1205, %v2005, -inf
        %2018 = vmax.xlane.f32.xlu0 %v2017
        %v2019 = vpop.xlane.xlu0 %2018
        %v2020 = vsub.f32 %v1990, %v2010
        %v2021 = vsub.f32 %v1995, %v2013
        %v2022 = vsub.f32 %v2000, %v2016
        %v2023 = vsub.f32 %v2005, %v2019
        %v2024 = vmul.f32 %v2020, 1.442695
        %v2025 = vpow.pop %v2024
        %v2026 = vmul.f32 %v2021, 1.442695
        %v2027 = vpow.pop %v2026
        %v2028 = vmul.f32 %v2022, 1.442695
        %v2029 = vpow.pop %v2028
        %v2030 = vmul.f32 %v2023, 1.442695
        %v2031 = vpow.pop %v2030
        %v2032 = vsel %vm1205, %v2025, 0.0
        %2033 = vadd.xlane.f32.xlu0 %v2032
        %v2034 = vpop.xlane.xlu0 %2033
        %v2035 = vsel %vm1205, %v2027, 0.0
        %2036 = vadd.xlane.f32.xlu0 %v2035
        %v2037 = vpop.xlane.xlu0 %2036
        %v2038 = vsel %vm1205, %v2029, 0.0
        %2039 = vadd.xlane.f32.xlu0 %v2038
        %v2040 = vpop.xlane.xlu0 %2039
        %v2041 = vsel %vm1205, %v2031, 0.0
        %2042 = vadd.xlane.f32.xlu0 %v2041
        %v2043 = vpop.xlane.xlu0 %2042
        %v2044 = vrcp.pop %v2034
        %v2045 = vrcp.pop %v2037
        %v2046 = vrcp.pop %v2040
        %v2047 = vrcp.pop %v2043
        %v2048 = vmul.f32 %v2025, %v2044
        %v2049 = vmul.f32 %v2027, %v2045
        %v2050 = vmul.f32 %v2029, %v2046
        %v2051 = vmul.f32 %v2031, %v2047
        %2052 = vrot.lane.b32.xlu0 %v843, 104
        %v2053 = vpop.permute.xlu0 %2052
        %2054 = vrot.lane.b32.xlu0 %v848, 104
        %v2055 = vpop.permute.xlu0 %2054
        %2056 = vrot.lane.b32.xlu0 %v853, 104
        %v2057 = vpop.permute.xlu0 %2056
        %2058 = vrot.lane.b32.xlu0 %v858, 104
        %v2059 = vpop.permute.xlu0 %2058
        %v2065 = vsel %vm1205, %v2048, 0
        %v2068 = vsel %vm1205, %v2049, 0
        %v2071 = vsel %vm1205, %v2050, 0
        %v2074 = vsel %vm1205, %v2051, 0
        %2076 = vmatprep.subr.mxu0 0.0
        %2077 = vmatpush1.msra.mxu0 %v2053
        %2078 = vmatprep.subr.mxu0 0.0
        %2079 = vmatpush1.msra.mxu0 %v2055
        %2080 = vmatprep.subr.mxu0 0.0
        %2081 = vmatpush1.msra.mxu0 %v2057
        %2082 = vmatprep.subr.mxu0 0.0
        %2083 = vmatpush1.msra.mxu0 %v2059
        %2084 = vmatprep.subr.mxu0 0.0
        %2085 = vmatpush1.msra.mxu0 0.0
        %2086 = vmatprep.subr.mxu0 0.0
        %2087 = vmatpush1.msra.mxu0 0.0
        %2088 = vmatprep.subr.mxu0 0.0
        %2089 = vmatpush1.msra.mxu0 0.0
        %2090 = vmatprep.subr.mxu0 0.0
        %2091 = vmatpush1.msra.mxu0 0.0
        %2092 = vmatprep.subr.mxu0 0.0
        %2093 = vmatpush1.msra.mxu0 0.0
        %2094 = vmatprep.subr.mxu0 0.0
        %2095 = vmatpush1.msra.mxu0 0.0
        %2096 = vmatprep.subr.mxu0 0.0
        %2097 = vmatpush1.msra.mxu0 0.0
        %2098 = vmatprep.subr.mxu0 0.0
        %2099 = vmatpush1.msra.mxu0 0.0
        %2100 = vmatprep.subr.mxu0 0.0
        %2101 = vmatpush1.msra.mxu0 0.0
        %2102 = vmatprep.subr.mxu0 0.0
        %2103 = vmatpush1.msra.mxu0 0.0
        %2104 = vmatprep.subr.mxu0 0.0
        %2105 = vmatpush1.msra.mxu0 0.0
        %2106 = vmatprep.subr.mxu0 0.0
        %2107 = vmatpush1.msra.mxu0 0.0
        %2108 = vmatprep.subr.mxu0 0.0
        %2109 = vmatpush1.msra.mxu0 0.0
        %2110 = vmatprep.subr.mxu0 0.0
        %2111 = vmatpush1.msra.mxu0 0.0
        %2112 = vmatprep.subr.mxu0 0.0
        %2113 = vmatpush1.msra.mxu0 0.0
        %2114 = vmatprep.subr.mxu0 0.0
        %2115 = vmatpush1.msra.mxu0 0.0
        %2116 = vmatprep.subr.mxu0 0.0
        %2117 = vmatpush1.msra.mxu0 0.0
        %2118 = vmatprep.subr.mxu0 0.0
        %2119 = vmatpush1.msra.mxu0 0.0
        %2120 = vmatprep.subr.mxu0 0.0
        %2121 = vmatpush1.msra.mxu0 0.0
        %2122 = vmatprep.subr.mxu0 0.0
        %2123 = vmatpush1.msra.mxu0 0.0
        %2124 = vmatprep.subr.mxu0 0.0
        %2125 = vmatpush1.msra.mxu0 0.0
        %2126 = vmatprep.subr.mxu0 0.0
        %2127 = vmatpush1.msra.mxu0 0.0
        %2128 = vmatprep.subr.mxu0 0.0
        %2129 = vmatpush1.msra.mxu0 0.0
        %2130 = vmatprep.subr.mxu0 0.0
        %2131 = vmatpush1.msra.mxu0 0.0
        %2132 = vmatprep.subr.mxu0 0.0
        %2133 = vmatpush1.msra.mxu0 0.0
        %2134 = vmatprep.subr.mxu0 0.0
        %2135 = vmatpush1.msra.mxu0 0.0
        %2136 = vmatprep.subr.mxu0 0.0
        %2137 = vmatpush1.msra.mxu0 0.0
        %2138 = vmatprep.subr.mxu0 0.0
        %2139 = vmatpush1.msra.mxu0 0.0
        %2140 = vmatprep.mubr.f32.mxu0 0.0
        %2141 = vmatmul.mubr.f32.gmra.mrb[0].mxu0 %v2065
        %v2142 = vpop.f32.mrb[0].mxu0
        %v2143 = vadd.f32 0.0, %v2142
        %v2144 = vpop.f32.mrb[0].mxu0
        %2145 = vmatprep.mubr.f32.mxu0 0.0
        %2146 = vmatmul.mubr.f32.gmra.mrb[0].mxu0 %v2068
        %v2147 = vpop.f32.mrb[0].mxu0
        %v2148 = vadd.f32 0.0, %v2147
        %v2149 = vpop.f32.mrb[0].mxu0
        %2150 = vmatprep.mubr.f32.mxu0 0.0
        %2151 = vmatmul.mubr.f32.gmra.mrb[0].mxu0 %v2071
        %v2152 = vpop.f32.mrb[0].mxu0
        %v2153 = vadd.f32 0.0, %v2152
        %v2154 = vpop.f32.mrb[0].mxu0
        %2155 = vmatprep.mubr.f32.mxu0 0.0
        %2156 = vmatmul.mubr.f32.gmra.mrb[0].mxu0 %v2074
        %v2157 = vpop.f32.mrb[0].mxu0
        %v2158 = vadd.f32 0.0, %v2157
        %v2159 = vpop.f32.mrb[0].mxu0
        %2160 = vdwg.mxu0
        %2161 = vrot.lane.b32.xlu0 %v982, 96
        %v2162 = vpop.permute.xlu0 %2161
        %2163 = vrot.lane.b32.xlu0 %v983, 96
        %v2164 = vpop.permute.xlu0 %2163
        %2165 = vrot.lane.b32.xlu0 %v984, 96
        %v2166 = vpop.permute.xlu0 %2165
        %2167 = vrot.lane.b32.xlu0 %v985, 96
        %v2168 = vpop.permute.xlu0 %2167
        %2169 = vrot.lane.b32.xlu0 %v1091, 96
        %v2170 = vpop.permute.xlu0 %2169
        %2171 = vrot.lane.b32.xlu0 %v1092, 96
        %v2172 = vpop.permute.xlu0 %2171
        %2173 = vrot.lane.b32.xlu0 %v1093, 96
        %v2174 = vpop.permute.xlu0 %2173
        %2175 = vrot.lane.b32.xlu0 %v1094, 96
        %v2176 = vpop.permute.xlu0 %2175
        %v2177 = vsel %vm1095, %v2162, 0
        %v2179 = vsel %vm1095, %v2164, 0
        %v2181 = vsel %vm1095, %v2166, 0
        %v2183 = vsel %vm1095, %v2168, 0
        %v2185 = vsel %vm1095, %v2170, 0
        %v2187 = vsel %vm1095, %v2172, 0
        %v2189 = vsel %vm1095, %v2174, 0
        %v2191 = vsel %vm1095, %v2176, 0
        %2193 = vmatprep.subr.mxu0 0.0
        %2194 = vmatpush1.xpose.msra.mxu0 %v2185
        %2195 = vmatprep.subr.mxu0 0.0
        %2196 = vmatpush1.xpose.msra.mxu0 %v2187
        %2197 = vmatprep.subr.mxu0 0.0
        %2198 = vmatpush1.xpose.msra.mxu0 %v2189
        %2199 = vmatprep.subr.mxu0 0.0
        %2200 = vmatpush1.xpose.msra.mxu0 %v2191
        %2201 = vmatprep.subr.mxu0 0.0
        %2202 = vmatpush1.xpose.msra.mxu0 0.0
        %2203 = vmatprep.subr.mxu0 0.0
        %2204 = vmatpush1.xpose.msra.mxu0 0.0
        %2205 = vmatprep.subr.mxu0 0.0
        %2206 = vmatpush1.xpose.msra.mxu0 0.0
        %2207 = vmatprep.subr.mxu0 0.0
        %2208 = vmatpush1.xpose.msra.mxu0 0.0
        %2209 = vmatprep.subr.mxu0 0.0
        %2210 = vmatpush1.xpose.msra.mxu0 0.0
        %2211 = vmatprep.subr.mxu0 0.0
        %2212 = vmatpush1.xpose.msra.mxu0 0.0
        %2213 = vmatprep.subr.mxu0 0.0
        %2214 = vmatpush1.xpose.msra.mxu0 0.0
        %2215 = vmatprep.subr.mxu0 0.0
        %2216 = vmatpush1.xpose.msra.mxu0 0.0
        %2217 = vmatprep.subr.mxu0 0.0
        %2218 = vmatpush1.xpose.msra.mxu0 0.0
        %2219 = vmatprep.subr.mxu0 0.0
        %2220 = vmatpush1.xpose.msra.mxu0 0.0
        %2221 = vmatprep.subr.mxu0 0.0
        %2222 = vmatpush1.xpose.msra.mxu0 0.0
        %2223 = vmatprep.subr.mxu0 0.0
        %2224 = vmatpush1.xpose.msra.mxu0 0.0
        %2225 = vmatprep.subr.mxu0 0.0
        %2226 = vmatpush1.xpose.msra.mxu0 0.0
        %2227 = vmatprep.subr.mxu0 0.0
        %2228 = vmatpush1.xpose.msra.mxu0 0.0
        %2229 = vmatprep.subr.mxu0 0.0
        %2230 = vmatpush1.xpose.msra.mxu0 0.0
        %2231 = vmatprep.subr.mxu0 0.0
        %2232 = vmatpush1.xpose.msra.mxu0 0.0
        %2233 = vmatprep.subr.mxu0 0.0
        %2234 = vmatpush1.xpose.msra.mxu0 0.0
        %2235 = vmatprep.subr.mxu0 0.0
        %2236 = vmatpush1.xpose.msra.mxu0 0.0
        %2237 = vmatprep.subr.mxu0 0.0
        %2238 = vmatpush1.xpose.msra.mxu0 0.0
        %2239 = vmatprep.subr.mxu0 0.0
        %2240 = vmatpush1.xpose.msra.mxu0 0.0
        %2241 = vmatprep.subr.mxu0 0.0
        %2242 = vmatpush1.xpose.msra.mxu0 0.0
        %2243 = vmatprep.subr.mxu0 0.0
        %2244 = vmatpush1.xpose.msra.mxu0 0.0
        %2245 = vmatprep.subr.mxu0 0.0
        %2246 = vmatpush1.xpose.msra.mxu0 0.0
        %2247 = vmatprep.subr.mxu0 0.0
        %2248 = vmatpush1.xpose.msra.mxu0 0.0
        %2249 = vmatprep.subr.mxu0 0.0
        %2250 = vmatpush1.xpose.msra.mxu0 0.0
        %2251 = vmatprep.subr.mxu0 0.0
        %2252 = vmatpush1.xpose.msra.mxu0 0.0
        %2253 = vmatprep.subr.mxu0 0.0
        %2254 = vmatpush1.xpose.msra.mxu0 0.0
        %2255 = vmatprep.subr.mxu0 0.0
        %2256 = vmatpush1.xpose.msra.mxu0 0.0
        %2257 = vmatprep.mubr.f32.mxu0 0.0
        %2258 = vmatmul.mubr.f32.gmra.mrb[0].mxu0 %v2177
        %v2259 = vpop.f32.mrb[0].mxu0
        %v2260 = vadd.f32 0.0, %v2259
        %v2261 = vpop.f32.mrb[0].mxu0
        %2262 = vmatprep.mubr.f32.mxu0 0.0
        %2263 = vmatmul.mubr.f32.gmra.mrb[0].mxu0 %v2179
        %v2264 = vpop.f32.mrb[0].mxu0
        %v2265 = vadd.f32 0.0, %v2264
        %v2266 = vpop.f32.mrb[0].mxu0
        %2267 = vmatprep.mubr.f32.mxu0 0.0
        %2268 = vmatmul.mubr.f32.gmra.mrb[0].mxu0 %v2181
        %v2269 = vpop.f32.mrb[0].mxu0
        %v2270 = vadd.f32 0.0, %v2269
        %v2271 = vpop.f32.mrb[0].mxu0
        %2272 = vmatprep.mubr.f32.mxu0 0.0
        %2273 = vmatmul.mubr.f32.gmra.mrb[0].mxu0 %v2183
        %v2274 = vpop.f32.mrb[0].mxu0
        %v2275 = vadd.f32 0.0, %v2274
        %v2276 = vpop.f32.mrb[0].mxu0
        %2277 = vdwg.mxu0
        %v2278 = vsel %vm1205, %v2260, -inf
        %2279 = vmax.xlane.f32.xlu0 %v2278
        %v2280 = vpop.xlane.xlu0 %2279
        %v2281 = vsel %vm1205, %v2265, -inf
        %2282 = vmax.xlane.f32.xlu0 %v2281
        %v2283 = vpop.xlane.xlu0 %2282
        %v2284 = vsel %vm1205, %v2270, -inf
        %2285 = vmax.xlane.f32.xlu0 %v2284
        %v2286 = vpop.xlane.xlu0 %2285
        %v2287 = vsel %vm1205, %v2275, -inf
        %2288 = vmax.xlane.f32.xlu0 %v2287
        %v2289 = vpop.xlane.xlu0 %2288
        %v2290 = vsub.f32 %v2260, %v2280
        %v2291 = vsub.f32 %v2265, %v2283
        %v2292 = vsub.f32 %v2270, %v2286
        %v2293 = vsub.f32 %v2275, %v2289
        %v2294 = vmul.f32 %v2290, 1.442695
        %v2295 = vpow.pop %v2294
        %v2296 = vmul.f32 %v2291, 1.442695
        %v2297 = vpow.pop %v2296
        %v2298 = vmul.f32 %v2292, 1.442695
        %v2299 = vpow.pop %v2298
        %v2300 = vmul.f32 %v2293, 1.442695
        %v2301 = vpow.pop %v2300
        %v2302 = vsel %vm1205, %v2295, 0.0
        %2303 = vadd.xlane.f32.xlu0 %v2302
        %v2304 = vpop.xlane.xlu0 %2303
        %v2305 = vsel %vm1205, %v2297, 0.0
        %2306 = vadd.xlane.f32.xlu0 %v2305
        %v2307 = vpop.xlane.xlu0 %2306
        %v2308 = vsel %vm1205, %v2299, 0.0
        %2309 = vadd.xlane.f32.xlu0 %v2308
        %v2310 = vpop.xlane.xlu0 %2309
        %v2311 = vsel %vm1205, %v2301, 0.0
        %2312 = vadd.xlane.f32.xlu0 %v2311
        %v2313 = vpop.xlane.xlu0 %2312
        %v2314 = vrcp.pop %v2304
        %v2315 = vrcp.pop %v2307
        %v2316 = vrcp.pop %v2310
        %v2317 = vrcp.pop %v2313
        %v2318 = vmul.f32 %v2295, %v2314
        %v2319 = vmul.f32 %v2297, %v2315
        %v2320 = vmul.f32 %v2299, %v2316
        %v2321 = vmul.f32 %v2301, %v2317
        %2322 = vrot.lane.b32.xlu0 %v843, 96
        %v2323 = vpop.permute.xlu0 %2322
        %2324 = vrot.lane.b32.xlu0 %v848, 96
        %v2325 = vpop.permute.xlu0 %2324
        %2326 = vrot.lane.b32.xlu0 %v853, 96
        %v2327 = vpop.permute.xlu0 %2326
        %2328 = vrot.lane.b32.xlu0 %v858, 96
        %v2329 = vpop.permute.xlu0 %2328
        %v2335 = vsel %vm1205, %v2318, 0
        %v2338 = vsel %vm1205, %v2319, 0
        %v2341 = vsel %vm1205, %v2320, 0
        %v2344 = vsel %vm1205, %v2321, 0
        %2346 = vmatprep.subr.mxu0 0.0
        %2347 = vmatpush1.msra.mxu0 %v2323
        %2348 = vmatprep.subr.mxu0 0.0
        %2349 = vmatpush1.msra.mxu0 %v2325
        %2350 = vmatprep.subr.mxu0 0.0
        %2351 = vmatpush1.msra.mxu0 %v2327
        %2352 = vmatprep.subr.mxu0 0.0
        %2353 = vmatpush1.msra.mxu0 %v2329
        %2354 = vmatprep.subr.mxu0 0.0
        %2355 = vmatpush1.msra.mxu0 0.0
        %2356 = vmatprep.subr.mxu0 0.0
        %2357 = vmatpush1.msra.mxu0 0.0
        %2358 = vmatprep.subr.mxu0 0.0
        %2359 = vmatpush1.msra.mxu0 0.0
        %2360 = vmatprep.subr.mxu0 0.0
        %2361 = vmatpush1.msra.mxu0 0.0
        %2362 = vmatprep.subr.mxu0 0.0
        %2363 = vmatpush1.msra.mxu0 0.0
        %2364 = vmatprep.subr.mxu0 0.0
        %2365 = vmatpush1.msra.mxu0 0.0
        %2366 = vmatprep.subr.mxu0 0.0
        %2367 = vmatpush1.msra.mxu0 0.0
        %2368 = vmatprep.subr.mxu0 0.0
        %2369 = vmatpush1.msra.mxu0 0.0
        %2370 = vmatprep.subr.mxu0 0.0
        %2371 = vmatpush1.msra.mxu0 0.0
        %2372 = vmatprep.subr.mxu0 0.0
        %2373 = vmatpush1.msra.mxu0 0.0
        %2374 = vmatprep.subr.mxu0 0.0
        %2375 = vmatpush1.msra.mxu0 0.0
        %2376 = vmatprep.subr.mxu0 0.0
        %2377 = vmatpush1.msra.mxu0 0.0
        %2378 = vmatprep.subr.mxu0 0.0
        %2379 = vmatpush1.msra.mxu0 0.0
        %2380 = vmatprep.subr.mxu0 0.0
        %2381 = vmatpush1.msra.mxu0 0.0
        %2382 = vmatprep.subr.mxu0 0.0
        %2383 = vmatpush1.msra.mxu0 0.0
        %2384 = vmatprep.subr.mxu0 0.0
        %2385 = vmatpush1.msra.mxu0 0.0
        %2386 = vmatprep.subr.mxu0 0.0
        %2387 = vmatpush1.msra.mxu0 0.0
        %2388 = vmatprep.subr.mxu0 0.0
        %2389 = vmatpush1.msra.mxu0 0.0
        %2390 = vmatprep.subr.mxu0 0.0
        %2391 = vmatpush1.msra.mxu0 0.0
        %2392 = vmatprep.subr.mxu0 0.0
        %2393 = vmatpush1.msra.mxu0 0.0
        %2394 = vmatprep.subr.mxu0 0.0
        %2395 = vmatpush1.msra.mxu0 0.0
        %2396 = vmatprep.subr.mxu0 0.0
        %2397 = vmatpush1.msra.mxu0 0.0
        %2398 = vmatprep.subr.mxu0 0.0
        %2399 = vmatpush1.msra.mxu0 0.0
        %2400 = vmatprep.subr.mxu0 0.0
        %2401 = vmatpush1.msra.mxu0 0.0
        %2402 = vmatprep.subr.mxu0 0.0
        %2403 = vmatpush1.msra.mxu0 0.0
        %2404 = vmatprep.subr.mxu0 0.0
        %2405 = vmatpush1.msra.mxu0 0.0
        %2406 = vmatprep.subr.mxu0 0.0
        %2407 = vmatpush1.msra.mxu0 0.0
        %2408 = vmatprep.subr.mxu0 0.0
        %2409 = vmatpush1.msra.mxu0 0.0
        %2410 = vmatprep.mubr.f32.mxu0 0.0
        %2411 = vmatmul.mubr.f32.gmra.mrb[0].mxu0 %v2335
        %v2412 = vpop.f32.mrb[0].mxu0
        %v2413 = vadd.f32 0.0, %v2412
        %v2414 = vpop.f32.mrb[0].mxu0
        %2415 = vmatprep.mubr.f32.mxu0 0.0
        %2416 = vmatmul.mubr.f32.gmra.mrb[0].mxu0 %v2338
        %v2417 = vpop.f32.mrb[0].mxu0
        %v2418 = vadd.f32 0.0, %v2417
        %v2419 = vpop.f32.mrb[0].mxu0
        %2420 = vmatprep.mubr.f32.mxu0 0.0
        %2421 = vmatmul.mubr.f32.gmra.mrb[0].mxu0 %v2341
        %v2422 = vpop.f32.mrb[0].mxu0
        %v2423 = vadd.f32 0.0, %v2422
        %v2424 = vpop.f32.mrb[0].mxu0
        %2425 = vmatprep.mubr.f32.mxu0 0.0
        %2426 = vmatmul.mubr.f32.gmra.mrb[0].mxu0 %v2344
        %v2427 = vpop.f32.mrb[0].mxu0
        %v2428 = vadd.f32 0.0, %v2427
        %v2429 = vpop.f32.mrb[0].mxu0
        %2430 = vdwg.mxu0
        %2431 = vrot.lane.b32.xlu0 %v982, 88
        %v2432 = vpop.permute.xlu0 %2431
        %2433 = vrot.lane.b32.xlu0 %v983, 88
        %v2434 = vpop.permute.xlu0 %2433
        %2435 = vrot.lane.b32.xlu0 %v984, 88
        %v2436 = vpop.permute.xlu0 %2435
        %2437 = vrot.lane.b32.xlu0 %v985, 88
        %v2438 = vpop.permute.xlu0 %2437
        %2439 = vrot.lane.b32.xlu0 %v1091, 88
        %v2440 = vpop.permute.xlu0 %2439
        %2441 = vrot.lane.b32.xlu0 %v1092, 88
        %v2442 = vpop.permute.xlu0 %2441
        %2443 = vrot.lane.b32.xlu0 %v1093, 88
        %v2444 = vpop.permute.xlu0 %2443
        %2445 = vrot.lane.b32.xlu0 %v1094, 88
        %v2446 = vpop.permute.xlu0 %2445
        %v2447 = vsel %vm1095, %v2432, 0
        %v2449 = vsel %vm1095, %v2434, 0
        %v2451 = vsel %vm1095, %v2436, 0
        %v2453 = vsel %vm1095, %v2438, 0
        %v2455 = vsel %vm1095, %v2440, 0
        %v2457 = vsel %vm1095, %v2442, 0
        %v2459 = vsel %vm1095, %v2444, 0
        %v2461 = vsel %vm1095, %v2446, 0
        %2463 = vmatprep.subr.mxu0 0.0
        %2464 = vmatpush1.xpose.msra.mxu0 %v2455
        %2465 = vmatprep.subr.mxu0 0.0
        %2466 = vmatpush1.xpose.msra.mxu0 %v2457
        %2467 = vmatprep.subr.mxu0 0.0
        %2468 = vmatpush1.xpose.msra.mxu0 %v2459
        %2469 = vmatprep.subr.mxu0 0.0
        %2470 = vmatpush1.xpose.msra.mxu0 %v2461
        %2471 = vmatprep.subr.mxu0 0.0
        %2472 = vmatpush1.xpose.msra.mxu0 0.0
        %2473 = vmatprep.subr.mxu0 0.0
        %2474 = vmatpush1.xpose.msra.mxu0 0.0
        %2475 = vmatprep.subr.mxu0 0.0
        %2476 = vmatpush1.xpose.msra.mxu0 0.0
        %2477 = vmatprep.subr.mxu0 0.0
        %2478 = vmatpush1.xpose.msra.mxu0 0.0
        %2479 = vmatprep.subr.mxu0 0.0
        %2480 = vmatpush1.xpose.msra.mxu0 0.0
        %2481 = vmatprep.subr.mxu0 0.0
        %2482 = vmatpush1.xpose.msra.mxu0 0.0
        %2483 = vmatprep.subr.mxu0 0.0
        %2484 = vmatpush1.xpose.msra.mxu0 0.0
        %2485 = vmatprep.subr.mxu0 0.0
        %2486 = vmatpush1.xpose.msra.mxu0 0.0
        %2487 = vmatprep.subr.mxu0 0.0
        %2488 = vmatpush1.xpose.msra.mxu0 0.0
        %2489 = vmatprep.subr.mxu0 0.0
        %2490 = vmatpush1.xpose.msra.mxu0 0.0
        %2491 = vmatprep.subr.mxu0 0.0
        %2492 = vmatpush1.xpose.msra.mxu0 0.0
        %2493 = vmatprep.subr.mxu0 0.0
        %2494 = vmatpush1.xpose.msra.mxu0 0.0
        %2495 = vmatprep.subr.mxu0 0.0
        %2496 = vmatpush1.xpose.msra.mxu0 0.0
        %2497 = vmatprep.subr.mxu0 0.0
        %2498 = vmatpush1.xpose.msra.mxu0 0.0
        %2499 = vmatprep.subr.mxu0 0.0
        %2500 = vmatpush1.xpose.msra.mxu0 0.0
        %2501 = vmatprep.subr.mxu0 0.0
        %2502 = vmatpush1.xpose.msra.mxu0 0.0
        %2503 = vmatprep.subr.mxu0 0.0
        %2504 = vmatpush1.xpose.msra.mxu0 0.0
        %2505 = vmatprep.subr.mxu0 0.0
        %2506 = vmatpush1.xpose.msra.mxu0 0.0
        %2507 = vmatprep.subr.mxu0 0.0
        %2508 = vmatpush1.xpose.msra.mxu0 0.0
        %2509 = vmatprep.subr.mxu0 0.0
        %2510 = vmatpush1.xpose.msra.mxu0 0.0
        %2511 = vmatprep.subr.mxu0 0.0
        %2512 = vmatpush1.xpose.msra.mxu0 0.0
        %2513 = vmatprep.subr.mxu0 0.0
        %2514 = vmatpush1.xpose.msra.mxu0 0.0
        %2515 = vmatprep.subr.mxu0 0.0
        %2516 = vmatpush1.xpose.msra.mxu0 0.0
        %2517 = vmatprep.subr.mxu0 0.0
        %2518 = vmatpush1.xpose.msra.mxu0 0.0
        %2519 = vmatprep.subr.mxu0 0.0
        %2520 = vmatpush1.xpose.msra.mxu0 0.0
        %2521 = vmatprep.subr.mxu0 0.0
        %2522 = vmatpush1.xpose.msra.mxu0 0.0
        %2523 = vmatprep.subr.mxu0 0.0
        %2524 = vmatpush1.xpose.msra.mxu0 0.0
        %2525 = vmatprep.subr.mxu0 0.0
        %2526 = vmatpush1.xpose.msra.mxu0 0.0
        %2527 = vmatprep.mubr.f32.mxu0 0.0
        %2528 = vmatmul.mubr.f32.gmra.mrb[0].mxu0 %v2447
        %v2529 = vpop.f32.mrb[0].mxu0
        %v2530 = vadd.f32 0.0, %v2529
        %v2531 = vpop.f32.mrb[0].mxu0
        %2532 = vmatprep.mubr.f32.mxu0 0.0
        %2533 = vmatmul.mubr.f32.gmra.mrb[0].mxu0 %v2449
        %v2534 = vpop.f32.mrb[0].mxu0
        %v2535 = vadd.f32 0.0, %v2534
        %v2536 = vpop.f32.mrb[0].mxu0
        %2537 = vmatprep.mubr.f32.mxu0 0.0
        %2538 = vmatmul.mubr.f32.gmra.mrb[0].mxu0 %v2451
        %v2539 = vpop.f32.mrb[0].mxu0
        %v2540 = vadd.f32 0.0, %v2539
        %v2541 = vpop.f32.mrb[0].mxu0
        %2542 = vmatprep.mubr.f32.mxu0 0.0
        %2543 = vmatmul.mubr.f32.gmra.mrb[0].mxu0 %v2453
        %v2544 = vpop.f32.mrb[0].mxu0
        %v2545 = vadd.f32 0.0, %v2544
        %v2546 = vpop.f32.mrb[0].mxu0
        %2547 = vdwg.mxu0
        %v2548 = vsel %vm1205, %v2530, -inf
        %2549 = vmax.xlane.f32.xlu0 %v2548
        %v2550 = vpop.xlane.xlu0 %2549
        %v2551 = vsel %vm1205, %v2535, -inf
        %2552 = vmax.xlane.f32.xlu0 %v2551
        %v2553 = vpop.xlane.xlu0 %2552
        %v2554 = vsel %vm1205, %v2540, -inf
        %2555 = vmax.xlane.f32.xlu0 %v2554
        %v2556 = vpop.xlane.xlu0 %2555
        %v2557 = vsel %vm1205, %v2545, -inf
        %2558 = vmax.xlane.f32.xlu0 %v2557
        %v2559 = vpop.xlane.xlu0 %2558
        %v2560 = vsub.f32 %v2530, %v2550
        %v2561 = vsub.f32 %v2535, %v2553
        %v2562 = vsub.f32 %v2540, %v2556
        %v2563 = vsub.f32 %v2545, %v2559
        %v2564 = vmul.f32 %v2560, 1.442695
        %v2565 = vpow.pop %v2564
        %v2566 = vmul.f32 %v2561, 1.442695
        %v2567 = vpow.pop %v2566
        %v2568 = vmul.f32 %v2562, 1.442695
        %v2569 = vpow.pop %v2568
        %v2570 = vmul.f32 %v2563, 1.442695
        %v2571 = vpow.pop %v2570
        %v2572 = vsel %vm1205, %v2565, 0.0
        %2573 = vadd.xlane.f32.xlu0 %v2572
        %v2574 = vpop.xlane.xlu0 %2573
        %v2575 = vsel %vm1205, %v2567, 0.0
        %2576 = vadd.xlane.f32.xlu0 %v2575
        %v2577 = vpop.xlane.xlu0 %2576
        %v2578 = vsel %vm1205, %v2569, 0.0
        %2579 = vadd.xlane.f32.xlu0 %v2578
        %v2580 = vpop.xlane.xlu0 %2579
        %v2581 = vsel %vm1205, %v2571, 0.0
        %2582 = vadd.xlane.f32.xlu0 %v2581
        %v2583 = vpop.xlane.xlu0 %2582
        %v2584 = vrcp.pop %v2574
        %v2585 = vrcp.pop %v2577
        %v2586 = vrcp.pop %v2580
        %v2587 = vrcp.pop %v2583
        %v2588 = vmul.f32 %v2565, %v2584
        %v2589 = vmul.f32 %v2567, %v2585
        %v2590 = vmul.f32 %v2569, %v2586
        %v2591 = vmul.f32 %v2571, %v2587
        %2592 = vrot.lane.b32.xlu0 %v843, 88
        %v2593 = vpop.permute.xlu0 %2592
        %2594 = vrot.lane.b32.xlu0 %v848, 88
        %v2595 = vpop.permute.xlu0 %2594
        %2596 = vrot.lane.b32.xlu0 %v853, 88
        %v2597 = vpop.permute.xlu0 %2596
        %2598 = vrot.lane.b32.xlu0 %v858, 88
        %v2599 = vpop.permute.xlu0 %2598
        %v2605 = vsel %vm1205, %v2588, 0
        %v2608 = vsel %vm1205, %v2589, 0
        %v2611 = vsel %vm1205, %v2590, 0
        %v2614 = vsel %vm1205, %v2591, 0
        %2616 = vmatprep.subr.mxu0 0.0
        %2617 = vmatpush1.msra.mxu0 %v2593
        %2618 = vmatprep.subr.mxu0 0.0
        %2619 = vmatpush1.msra.mxu0 %v2595
        %2620 = vmatprep.subr.mxu0 0.0
        %2621 = vmatpush1.msra.mxu0 %v2597
        %2622 = vmatprep.subr.mxu0 0.0
        %2623 = vmatpush1.msra.mxu0 %v2599
        %2624 = vmatprep.subr.mxu0 0.0
        %2625 = vmatpush1.msra.mxu0 0.0
        %2626 = vmatprep.subr.mxu0 0.0
        %2627 = vmatpush1.msra.mxu0 0.0
        %2628 = vmatprep.subr.mxu0 0.0
        %2629 = vmatpush1.msra.mxu0 0.0
        %2630 = vmatprep.subr.mxu0 0.0
        %2631 = vmatpush1.msra.mxu0 0.0
        %2632 = vmatprep.subr.mxu0 0.0
        %2633 = vmatpush1.msra.mxu0 0.0
        %2634 = vmatprep.subr.mxu0 0.0
        %2635 = vmatpush1.msra.mxu0 0.0
        %2636 = vmatprep.subr.mxu0 0.0
        %2637 = vmatpush1.msra.mxu0 0.0
        %2638 = vmatprep.subr.mxu0 0.0
        %2639 = vmatpush1.msra.mxu0 0.0
        %2640 = vmatprep.subr.mxu0 0.0
        %2641 = vmatpush1.msra.mxu0 0.0
        %2642 = vmatprep.subr.mxu0 0.0
        %2643 = vmatpush1.msra.mxu0 0.0
        %2644 = vmatprep.subr.mxu0 0.0
        %2645 = vmatpush1.msra.mxu0 0.0
        %2646 = vmatprep.subr.mxu0 0.0
        %2647 = vmatpush1.msra.mxu0 0.0
        %2648 = vmatprep.subr.mxu0 0.0
        %2649 = vmatpush1.msra.mxu0 0.0
        %2650 = vmatprep.subr.mxu0 0.0
        %2651 = vmatpush1.msra.mxu0 0.0
        %2652 = vmatprep.subr.mxu0 0.0
        %2653 = vmatpush1.msra.mxu0 0.0
        %2654 = vmatprep.subr.mxu0 0.0
        %2655 = vmatpush1.msra.mxu0 0.0
        %2656 = vmatprep.subr.mxu0 0.0
        %2657 = vmatpush1.msra.mxu0 0.0
        %2658 = vmatprep.subr.mxu0 0.0
        %2659 = vmatpush1.msra.mxu0 0.0
        %2660 = vmatprep.subr.mxu0 0.0
        %2661 = vmatpush1.msra.mxu0 0.0
        %2662 = vmatprep.subr.mxu0 0.0
        %2663 = vmatpush1.msra.mxu0 0.0
        %2664 = vmatprep.subr.mxu0 0.0
        %2665 = vmatpush1.msra.mxu0 0.0
        %2666 = vmatprep.subr.mxu0 0.0
        %2667 = vmatpush1.msra.mxu0 0.0
        %2668 = vmatprep.subr.mxu0 0.0
        %2669 = vmatpush1.msra.mxu0 0.0
        %2670 = vmatprep.subr.mxu0 0.0
        %2671 = vmatpush1.msra.mxu0 0.0
        %2672 = vmatprep.subr.mxu0 0.0
        %2673 = vmatpush1.msra.mxu0 0.0
        %2674 = vmatprep.subr.mxu0 0.0
        %2675 = vmatpush1.msra.mxu0 0.0
        %2676 = vmatprep.subr.mxu0 0.0
        %2677 = vmatpush1.msra.mxu0 0.0
        %2678 = vmatprep.subr.mxu0 0.0
        %2679 = vmatpush1.msra.mxu0 0.0
        %2680 = vmatprep.mubr.f32.mxu0 0.0
        %2681 = vmatmul.mubr.f32.gmra.mrb[0].mxu0 %v2605
        %v2682 = vpop.f32.mrb[0].mxu0
        %v2683 = vadd.f32 0.0, %v2682
        %v2684 = vpop.f32.mrb[0].mxu0
        %2685 = vmatprep.mubr.f32.mxu0 0.0
        %2686 = vmatmul.mubr.f32.gmra.mrb[0].mxu0 %v2608
        %v2687 = vpop.f32.mrb[0].mxu0
        %v2688 = vadd.f32 0.0, %v2687
        %v2689 = vpop.f32.mrb[0].mxu0
        %2690 = vmatprep.mubr.f32.mxu0 0.0
        %2691 = vmatmul.mubr.f32.gmra.mrb[0].mxu0 %v2611
        %v2692 = vpop.f32.mrb[0].mxu0
        %v2693 = vadd.f32 0.0, %v2692
        %v2694 = vpop.f32.mrb[0].mxu0
        %2695 = vmatprep.mubr.f32.mxu0 0.0
        %2696 = vmatmul.mubr.f32.gmra.mrb[0].mxu0 %v2614
        %v2697 = vpop.f32.mrb[0].mxu0
        %v2698 = vadd.f32 0.0, %v2697
        %v2699 = vpop.f32.mrb[0].mxu0
        %2700 = vdwg.mxu0
        %2701 = vrot.lane.b32.xlu0 %v982, 80
        %v2702 = vpop.permute.xlu0 %2701
        %2703 = vrot.lane.b32.xlu0 %v983, 80
        %v2704 = vpop.permute.xlu0 %2703
        %2705 = vrot.lane.b32.xlu0 %v984, 80
        %v2706 = vpop.permute.xlu0 %2705
        %2707 = vrot.lane.b32.xlu0 %v985, 80
        %v2708 = vpop.permute.xlu0 %2707
        %2709 = vrot.lane.b32.xlu0 %v1091, 80
        %v2710 = vpop.permute.xlu0 %2709
        %2711 = vrot.lane.b32.xlu0 %v1092, 80
        %v2712 = vpop.permute.xlu0 %2711
        %2713 = vrot.lane.b32.xlu0 %v1093, 80
        %v2714 = vpop.permute.xlu0 %2713
        %2715 = vrot.lane.b32.xlu0 %v1094, 80
        %v2716 = vpop.permute.xlu0 %2715
        %v2717 = vsel %vm1095, %v2702, 0
        %v2719 = vsel %vm1095, %v2704, 0
        %v2721 = vsel %vm1095, %v2706, 0
        %v2723 = vsel %vm1095, %v2708, 0
        %v2725 = vsel %vm1095, %v2710, 0
        %v2727 = vsel %vm1095, %v2712, 0
        %v2729 = vsel %vm1095, %v2714, 0
        %v2731 = vsel %vm1095, %v2716, 0
        %2733 = vmatprep.subr.mxu0 0.0
        %2734 = vmatpush1.xpose.msra.mxu0 %v2725
        %2735 = vmatprep.subr.mxu0 0.0
        %2736 = vmatpush1.xpose.msra.mxu0 %v2727
        %2737 = vmatprep.subr.mxu0 0.0
        %2738 = vmatpush1.xpose.msra.mxu0 %v2729
        %2739 = vmatprep.subr.mxu0 0.0
        %2740 = vmatpush1.xpose.msra.mxu0 %v2731
        %2741 = vmatprep.subr.mxu0 0.0
        %2742 = vmatpush1.xpose.msra.mxu0 0.0
        %2743 = vmatprep.subr.mxu0 0.0
        %2744 = vmatpush1.xpose.msra.mxu0 0.0
        %2745 = vmatprep.subr.mxu0 0.0
        %2746 = vmatpush1.xpose.msra.mxu0 0.0
        %2747 = vmatprep.subr.mxu0 0.0
        %2748 = vmatpush1.xpose.msra.mxu0 0.0
        %2749 = vmatprep.subr.mxu0 0.0
        %2750 = vmatpush1.xpose.msra.mxu0 0.0
        %2751 = vmatprep.subr.mxu0 0.0
        %2752 = vmatpush1.xpose.msra.mxu0 0.0
        %2753 = vmatprep.subr.mxu0 0.0
        %2754 = vmatpush1.xpose.msra.mxu0 0.0
        %2755 = vmatprep.subr.mxu0 0.0
        %2756 = vmatpush1.xpose.msra.mxu0 0.0
        %2757 = vmatprep.subr.mxu0 0.0
        %2758 = vmatpush1.xpose.msra.mxu0 0.0
        %2759 = vmatprep.subr.mxu0 0.0
        %2760 = vmatpush1.xpose.msra.mxu0 0.0
        %2761 = vmatprep.subr.mxu0 0.0
        %2762 = vmatpush1.xpose.msra.mxu0 0.0
        %2763 = vmatprep.subr.mxu0 0.0
        %2764 = vmatpush1.xpose.msra.mxu0 0.0
        %2765 = vmatprep.subr.mxu0 0.0
        %2766 = vmatpush1.xpose.msra.mxu0 0.0
        %2767 = vmatprep.subr.mxu0 0.0
        %2768 = vmatpush1.xpose.msra.mxu0 0.0
        %2769 = vmatprep.subr.mxu0 0.0
        %2770 = vmatpush1.xpose.msra.mxu0 0.0
        %2771 = vmatprep.subr.mxu0 0.0
        %2772 = vmatpush1.xpose.msra.mxu0 0.0
        %2773 = vmatprep.subr.mxu0 0.0
        %2774 = vmatpush1.xpose.msra.mxu0 0.0
        %2775 = vmatprep.subr.mxu0 0.0
        %2776 = vmatpush1.xpose.msra.mxu0 0.0
        %2777 = vmatprep.subr.mxu0 0.0
        %2778 = vmatpush1.xpose.msra.mxu0 0.0
        %2779 = vmatprep.subr.mxu0 0.0
        %2780 = vmatpush1.xpose.msra.mxu0 0.0
        %2781 = vmatprep.subr.mxu0 0.0
        %2782 = vmatpush1.xpose.msra.mxu0 0.0
        %2783 = vmatprep.subr.mxu0 0.0
        %2784 = vmatpush1.xpose.msra.mxu0 0.0
        %2785 = vmatprep.subr.mxu0 0.0
        %2786 = vmatpush1.xpose.msra.mxu0 0.0
        %2787 = vmatprep.subr.mxu0 0.0
        %2788 = vmatpush1.xpose.msra.mxu0 0.0
        %2789 = vmatprep.subr.mxu0 0.0
        %2790 = vmatpush1.xpose.msra.mxu0 0.0
        %2791 = vmatprep.subr.mxu0 0.0
        %2792 = vmatpush1.xpose.msra.mxu0 0.0
        %2793 = vmatprep.subr.mxu0 0.0
        %2794 = vmatpush1.xpose.msra.mxu0 0.0
        %2795 = vmatprep.subr.mxu0 0.0
        %2796 = vmatpush1.xpose.msra.mxu0 0.0
        %2797 = vmatprep.mubr.f32.mxu0 0.0
        %2798 = vmatmul.mubr.f32.gmra.mrb[0].mxu0 %v2717
        %v2799 = vpop.f32.mrb[0].mxu0
        %v2800 = vadd.f32 0.0, %v2799
        %v2801 = vpop.f32.mrb[0].mxu0
        %2802 = vmatprep.mubr.f32.mxu0 0.0
        %2803 = vmatmul.mubr.f32.gmra.mrb[0].mxu0 %v2719
        %v2804 = vpop.f32.mrb[0].mxu0
        %v2805 = vadd.f32 0.0, %v2804
        %v2806 = vpop.f32.mrb[0].mxu0
        %2807 = vmatprep.mubr.f32.mxu0 0.0
        %2808 = vmatmul.mubr.f32.gmra.mrb[0].mxu0 %v2721
        %v2809 = vpop.f32.mrb[0].mxu0
        %v2810 = vadd.f32 0.0, %v2809
        %v2811 = vpop.f32.mrb[0].mxu0
        %2812 = vmatprep.mubr.f32.mxu0 0.0
        %2813 = vmatmul.mubr.f32.gmra.mrb[0].mxu0 %v2723
        %v2814 = vpop.f32.mrb[0].mxu0
        %v2815 = vadd.f32 0.0, %v2814
        %v2816 = vpop.f32.mrb[0].mxu0
        %2817 = vdwg.mxu0
        %v2818 = vsel %vm1205, %v2800, -inf
        %2819 = vmax.xlane.f32.xlu0 %v2818
        %v2820 = vpop.xlane.xlu0 %2819
        %v2821 = vsel %vm1205, %v2805, -inf
        %2822 = vmax.xlane.f32.xlu0 %v2821
        %v2823 = vpop.xlane.xlu0 %2822
        %v2824 = vsel %vm1205, %v2810, -inf
        %2825 = vmax.xlane.f32.xlu0 %v2824
        %v2826 = vpop.xlane.xlu0 %2825
        %v2827 = vsel %vm1205, %v2815, -inf
        %2828 = vmax.xlane.f32.xlu0 %v2827
        %v2829 = vpop.xlane.xlu0 %2828
        %v2830 = vsub.f32 %v2800, %v2820
        %v2831 = vsub.f32 %v2805, %v2823
        %v2832 = vsub.f32 %v2810, %v2826
        %v2833 = vsub.f32 %v2815, %v2829
        %v2834 = vmul.f32 %v2830, 1.442695
        %v2835 = vpow.pop %v2834
        %v2836 = vmul.f32 %v2831, 1.442695
        %v2837 = vpow.pop %v2836
        %v2838 = vmul.f32 %v2832, 1.442695
        %v2839 = vpow.pop %v2838
        %v2840 = vmul.f32 %v2833, 1.442695
        %v2841 = vpow.pop %v2840
        %v2842 = vsel %vm1205, %v2835, 0.0
        %2843 = vadd.xlane.f32.xlu0 %v2842
        %v2844 = vpop.xlane.xlu0 %2843
        %v2845 = vsel %vm1205, %v2837, 0.0
        %2846 = vadd.xlane.f32.xlu0 %v2845
        %v2847 = vpop.xlane.xlu0 %2846
        %v2848 = vsel %vm1205, %v2839, 0.0
        %2849 = vadd.xlane.f32.xlu0 %v2848
        %v2850 = vpop.xlane.xlu0 %2849
        %v2851 = vsel %vm1205, %v2841, 0.0
        %2852 = vadd.xlane.f32.xlu0 %v2851
        %v2853 = vpop.xlane.xlu0 %2852
        %v2854 = vrcp.pop %v2844
        %v2855 = vrcp.pop %v2847
        %v2856 = vrcp.pop %v2850
        %v2857 = vrcp.pop %v2853
        %v2858 = vmul.f32 %v2835, %v2854
        %v2859 = vmul.f32 %v2837, %v2855
        %v2860 = vmul.f32 %v2839, %v2856
        %v2861 = vmul.f32 %v2841, %v2857
        %2862 = vrot.lane.b32.xlu0 %v843, 80
        %v2863 = vpop.permute.xlu0 %2862
        %2864 = vrot.lane.b32.xlu0 %v848, 80
        %v2865 = vpop.permute.xlu0 %2864
        %2866 = vrot.lane.b32.xlu0 %v853, 80
        %v2867 = vpop.permute.xlu0 %2866
        %2868 = vrot.lane.b32.xlu0 %v858, 80
        %v2869 = vpop.permute.xlu0 %2868
        %v2875 = vsel %vm1205, %v2858, 0
        %v2878 = vsel %vm1205, %v2859, 0
        %v2881 = vsel %vm1205, %v2860, 0
        %v2884 = vsel %vm1205, %v2861, 0
        %2886 = vmatprep.subr.mxu0 0.0
        %2887 = vmatpush1.msra.mxu0 %v2863
        %2888 = vmatprep.subr.mxu0 0.0
        %2889 = vmatpush1.msra.mxu0 %v2865
        %2890 = vmatprep.subr.mxu0 0.0
        %2891 = vmatpush1.msra.mxu0 %v2867
        %2892 = vmatprep.subr.mxu0 0.0
        %2893 = vmatpush1.msra.mxu0 %v2869
        %2894 = vmatprep.subr.mxu0 0.0
        %2895 = vmatpush1.msra.mxu0 0.0
        %2896 = vmatprep.subr.mxu0 0.0
        %2897 = vmatpush1.msra.mxu0 0.0
        %2898 = vmatprep.subr.mxu0 0.0
        %2899 = vmatpush1.msra.mxu0 0.0
        %2900 = vmatprep.subr.mxu0 0.0
        %2901 = vmatpush1.msra.mxu0 0.0
        %2902 = vmatprep.subr.mxu0 0.0
        %2903 = vmatpush1.msra.mxu0 0.0
        %2904 = vmatprep.subr.mxu0 0.0
        %2905 = vmatpush1.msra.mxu0 0.0
        %2906 = vmatprep.subr.mxu0 0.0
        %2907 = vmatpush1.msra.mxu0 0.0
        %2908 = vmatprep.subr.mxu0 0.0
        %2909 = vmatpush1.msra.mxu0 0.0
        %2910 = vmatprep.subr.mxu0 0.0
        %2911 = vmatpush1.msra.mxu0 0.0
        %2912 = vmatprep.subr.mxu0 0.0
        %2913 = vmatpush1.msra.mxu0 0.0
        %2914 = vmatprep.subr.mxu0 0.0
        %2915 = vmatpush1.msra.mxu0 0.0
        %2916 = vmatprep.subr.mxu0 0.0
        %2917 = vmatpush1.msra.mxu0 0.0
        %2918 = vmatprep.subr.mxu0 0.0
        %2919 = vmatpush1.msra.mxu0 0.0
        %2920 = vmatprep.subr.mxu0 0.0
        %2921 = vmatpush1.msra.mxu0 0.0
        %2922 = vmatprep.subr.mxu0 0.0
        %2923 = vmatpush1.msra.mxu0 0.0
        %2924 = vmatprep.subr.mxu0 0.0
        %2925 = vmatpush1.msra.mxu0 0.0
        %2926 = vmatprep.subr.mxu0 0.0
        %2927 = vmatpush1.msra.mxu0 0.0
        %2928 = vmatprep.subr.mxu0 0.0
        %2929 = vmatpush1.msra.mxu0 0.0
        %2930 = vmatprep.subr.mxu0 0.0
        %2931 = vmatpush1.msra.mxu0 0.0
        %2932 = vmatprep.subr.mxu0 0.0
        %2933 = vmatpush1.msra.mxu0 0.0
        %2934 = vmatprep.subr.mxu0 0.0
        %2935 = vmatpush1.msra.mxu0 0.0
        %2936 = vmatprep.subr.mxu0 0.0
        %2937 = vmatpush1.msra.mxu0 0.0
        %2938 = vmatprep.subr.mxu0 0.0
        %2939 = vmatpush1.msra.mxu0 0.0
        %2940 = vmatprep.subr.mxu0 0.0
        %2941 = vmatpush1.msra.mxu0 0.0
        %2942 = vmatprep.subr.mxu0 0.0
        %2943 = vmatpush1.msra.mxu0 0.0
        %2944 = vmatprep.subr.mxu0 0.0
        %2945 = vmatpush1.msra.mxu0 0.0
        %2946 = vmatprep.subr.mxu0 0.0
        %2947 = vmatpush1.msra.mxu0 0.0
        %2948 = vmatprep.subr.mxu0 0.0
        %2949 = vmatpush1.msra.mxu0 0.0
        %2950 = vmatprep.mubr.f32.mxu0 0.0
        %2951 = vmatmul.mubr.f32.gmra.mrb[0].mxu0 %v2875
        %v2952 = vpop.f32.mrb[0].mxu0
        %v2953 = vadd.f32 0.0, %v2952
        %v2954 = vpop.f32.mrb[0].mxu0
        %2955 = vmatprep.mubr.f32.mxu0 0.0
        %2956 = vmatmul.mubr.f32.gmra.mrb[0].mxu0 %v2878
        %v2957 = vpop.f32.mrb[0].mxu0
        %v2958 = vadd.f32 0.0, %v2957
        %v2959 = vpop.f32.mrb[0].mxu0
        %2960 = vmatprep.mubr.f32.mxu0 0.0
        %2961 = vmatmul.mubr.f32.gmra.mrb[0].mxu0 %v2881
        %v2962 = vpop.f32.mrb[0].mxu0
        %v2963 = vadd.f32 0.0, %v2962
        %v2964 = vpop.f32.mrb[0].mxu0
        %2965 = vmatprep.mubr.f32.mxu0 0.0
        %2966 = vmatmul.mubr.f32.gmra.mrb[0].mxu0 %v2884
        %v2967 = vpop.f32.mrb[0].mxu0
        %v2968 = vadd.f32 0.0, %v2967
        %v2969 = vpop.f32.mrb[0].mxu0
        %2970 = vdwg.mxu0
        %2971 = vrot.lane.b32.xlu0 %v982, 72
        %v2972 = vpop.permute.xlu0 %2971
        %2973 = vrot.lane.b32.xlu0 %v983, 72
        %v2974 = vpop.permute.xlu0 %2973
        %2975 = vrot.lane.b32.xlu0 %v984, 72
        %v2976 = vpop.permute.xlu0 %2975
        %2977 = vrot.lane.b32.xlu0 %v985, 72
        %v2978 = vpop.permute.xlu0 %2977
        %2979 = vrot.lane.b32.xlu0 %v1091, 72
        %v2980 = vpop.permute.xlu0 %2979
        %2981 = vrot.lane.b32.xlu0 %v1092, 72
        %v2982 = vpop.permute.xlu0 %2981
        %2983 = vrot.lane.b32.xlu0 %v1093, 72
        %v2984 = vpop.permute.xlu0 %2983
        %2985 = vrot.lane.b32.xlu0 %v1094, 72
        %v2986 = vpop.permute.xlu0 %2985
        %v2987 = vsel %vm1095, %v2972, 0
        %v2989 = vsel %vm1095, %v2974, 0
        %v2991 = vsel %vm1095, %v2976, 0
        %v2993 = vsel %vm1095, %v2978, 0
        %v2995 = vsel %vm1095, %v2980, 0
        %v2997 = vsel %vm1095, %v2982, 0
        %v2999 = vsel %vm1095, %v2984, 0
        %v3001 = vsel %vm1095, %v2986, 0
        %3003 = vmatprep.subr.mxu0 0.0
        %3004 = vmatpush1.xpose.msra.mxu0 %v2995
        %3005 = vmatprep.subr.mxu0 0.0
        %3006 = vmatpush1.xpose.msra.mxu0 %v2997
        %3007 = vmatprep.subr.mxu0 0.0
        %3008 = vmatpush1.xpose.msra.mxu0 %v2999
        %3009 = vmatprep.subr.mxu0 0.0
        %3010 = vmatpush1.xpose.msra.mxu0 %v3001
        %3011 = vmatprep.subr.mxu0 0.0
        %3012 = vmatpush1.xpose.msra.mxu0 0.0
        %3013 = vmatprep.subr.mxu0 0.0
        %3014 = vmatpush1.xpose.msra.mxu0 0.0
        %3015 = vmatprep.subr.mxu0 0.0
        %3016 = vmatpush1.xpose.msra.mxu0 0.0
        %3017 = vmatprep.subr.mxu0 0.0
        %3018 = vmatpush1.xpose.msra.mxu0 0.0
        %3019 = vmatprep.subr.mxu0 0.0
        %3020 = vmatpush1.xpose.msra.mxu0 0.0
        %3021 = vmatprep.subr.mxu0 0.0
        %3022 = vmatpush1.xpose.msra.mxu0 0.0
        %3023 = vmatprep.subr.mxu0 0.0
        %3024 = vmatpush1.xpose.msra.mxu0 0.0
        %3025 = vmatprep.subr.mxu0 0.0
        %3026 = vmatpush1.xpose.msra.mxu0 0.0
        %3027 = vmatprep.subr.mxu0 0.0
        %3028 = vmatpush1.xpose.msra.mxu0 0.0
        %3029 = vmatprep.subr.mxu0 0.0
        %3030 = vmatpush1.xpose.msra.mxu0 0.0
        %3031 = vmatprep.subr.mxu0 0.0
        %3032 = vmatpush1.xpose.msra.mxu0 0.0
        %3033 = vmatprep.subr.mxu0 0.0
        %3034 = vmatpush1.xpose.msra.mxu0 0.0
        %3035 = vmatprep.subr.mxu0 0.0
        %3036 = vmatpush1.xpose.msra.mxu0 0.0
        %3037 = vmatprep.subr.mxu0 0.0
        %3038 = vmatpush1.xpose.msra.mxu0 0.0
        %3039 = vmatprep.subr.mxu0 0.0
        %3040 = vmatpush1.xpose.msra.mxu0 0.0
        %3041 = vmatprep.subr.mxu0 0.0
        %3042 = vmatpush1.xpose.msra.mxu0 0.0
        %3043 = vmatprep.subr.mxu0 0.0
        %3044 = vmatpush1.xpose.msra.mxu0 0.0
        %3045 = vmatprep.subr.mxu0 0.0
        %3046 = vmatpush1.xpose.msra.mxu0 0.0
        %3047 = vmatprep.subr.mxu0 0.0
        %3048 = vmatpush1.xpose.msra.mxu0 0.0
        %3049 = vmatprep.subr.mxu0 0.0
        %3050 = vmatpush1.xpose.msra.mxu0 0.0
        %3051 = vmatprep.subr.mxu0 0.0
        %3052 = vmatpush1.xpose.msra.mxu0 0.0
        %3053 = vmatprep.subr.mxu0 0.0
        %3054 = vmatpush1.xpose.msra.mxu0 0.0
        %3055 = vmatprep.subr.mxu0 0.0
        %3056 = vmatpush1.xpose.msra.mxu0 0.0
        %3057 = vmatprep.subr.mxu0 0.0
        %3058 = vmatpush1.xpose.msra.mxu0 0.0
        %3059 = vmatprep.subr.mxu0 0.0
        %3060 = vmatpush1.xpose.msra.mxu0 0.0
        %3061 = vmatprep.subr.mxu0 0.0
        %3062 = vmatpush1.xpose.msra.mxu0 0.0
        %3063 = vmatprep.subr.mxu0 0.0
        %3064 = vmatpush1.xpose.msra.mxu0 0.0
        %3065 = vmatprep.subr.mxu0 0.0
        %3066 = vmatpush1.xpose.msra.mxu0 0.0
        %3067 = vmatprep.mubr.f32.mxu0 0.0
        %3068 = vmatmul.mubr.f32.gmra.mrb[0].mxu0 %v2987
        %v3069 = vpop.f32.mrb[0].mxu0
        %v3070 = vadd.f32 0.0, %v3069
        %v3071 = vpop.f32.mrb[0].mxu0
        %3072 = vmatprep.mubr.f32.mxu0 0.0
        %3073 = vmatmul.mubr.f32.gmra.mrb[0].mxu0 %v2989
        %v3074 = vpop.f32.mrb[0].mxu0
        %v3075 = vadd.f32 0.0, %v3074
        %v3076 = vpop.f32.mrb[0].mxu0
        %3077 = vmatprep.mubr.f32.mxu0 0.0
        %3078 = vmatmul.mubr.f32.gmra.mrb[0].mxu0 %v2991
        %v3079 = vpop.f32.mrb[0].mxu0
        %v3080 = vadd.f32 0.0, %v3079
        %v3081 = vpop.f32.mrb[0].mxu0
        %3082 = vmatprep.mubr.f32.mxu0 0.0
        %3083 = vmatmul.mubr.f32.gmra.mrb[0].mxu0 %v2993
        %v3084 = vpop.f32.mrb[0].mxu0
        %v3085 = vadd.f32 0.0, %v3084
        %v3086 = vpop.f32.mrb[0].mxu0
        %3087 = vdwg.mxu0
        %v3088 = vsel %vm1205, %v3070, -inf
        %3089 = vmax.xlane.f32.xlu0 %v3088
        %v3090 = vpop.xlane.xlu0 %3089
        %v3091 = vsel %vm1205, %v3075, -inf
        %3092 = vmax.xlane.f32.xlu0 %v3091
        %v3093 = vpop.xlane.xlu0 %3092
        %v3094 = vsel %vm1205, %v3080, -inf
        %3095 = vmax.xlane.f32.xlu0 %v3094
        %v3096 = vpop.xlane.xlu0 %3095
        %v3097 = vsel %vm1205, %v3085, -inf
        %3098 = vmax.xlane.f32.xlu0 %v3097
        %v3099 = vpop.xlane.xlu0 %3098
        %v3100 = vsub.f32 %v3070, %v3090
        %v3101 = vsub.f32 %v3075, %v3093
        %v3102 = vsub.f32 %v3080, %v3096
        %v3103 = vsub.f32 %v3085, %v3099
        %v3104 = vmul.f32 %v3100, 1.442695
        %v3105 = vpow.pop %v3104
        %v3106 = vmul.f32 %v3101, 1.442695
        %v3107 = vpow.pop %v3106
        %v3108 = vmul.f32 %v3102, 1.442695
        %v3109 = vpow.pop %v3108
        %v3110 = vmul.f32 %v3103, 1.442695
        %v3111 = vpow.pop %v3110
        %v3112 = vsel %vm1205, %v3105, 0.0
        %3113 = vadd.xlane.f32.xlu0 %v3112
        %v3114 = vpop.xlane.xlu0 %3113
        %v3115 = vsel %vm1205, %v3107, 0.0
        %3116 = vadd.xlane.f32.xlu0 %v3115
        %v3117 = vpop.xlane.xlu0 %3116
        %v3118 = vsel %vm1205, %v3109, 0.0
        %3119 = vadd.xlane.f32.xlu0 %v3118
        %v3120 = vpop.xlane.xlu0 %3119
        %v3121 = vsel %vm1205, %v3111, 0.0
        %3122 = vadd.xlane.f32.xlu0 %v3121
        %v3123 = vpop.xlane.xlu0 %3122
        %v3124 = vrcp.pop %v3114
        %v3125 = vrcp.pop %v3117
        %v3126 = vrcp.pop %v3120
        %v3127 = vrcp.pop %v3123
        %v3128 = vmul.f32 %v3105, %v3124
        %v3129 = vmul.f32 %v3107, %v3125
        %v3130 = vmul.f32 %v3109, %v3126
        %v3131 = vmul.f32 %v3111, %v3127
        %3132 = vrot.lane.b32.xlu0 %v843, 72
        %v3133 = vpop.permute.xlu0 %3132
        %3134 = vrot.lane.b32.xlu0 %v848, 72
        %v3135 = vpop.permute.xlu0 %3134
        %3136 = vrot.lane.b32.xlu0 %v853, 72
        %v3137 = vpop.permute.xlu0 %3136
        %3138 = vrot.lane.b32.xlu0 %v858, 72
        %v3139 = vpop.permute.xlu0 %3138
        %v3145 = vsel %vm1205, %v3128, 0
        %v3148 = vsel %vm1205, %v3129, 0
        %v3151 = vsel %vm1205, %v3130, 0
        %v3154 = vsel %vm1205, %v3131, 0
        %3156 = vmatprep.subr.mxu0 0.0
        %3157 = vmatpush1.msra.mxu0 %v3133
        %3158 = vmatprep.subr.mxu0 0.0
        %3159 = vmatpush1.msra.mxu0 %v3135
        %3160 = vmatprep.subr.mxu0 0.0
        %3161 = vmatpush1.msra.mxu0 %v3137
        %3162 = vmatprep.subr.mxu0 0.0
        %3163 = vmatpush1.msra.mxu0 %v3139
        %3164 = vmatprep.subr.mxu0 0.0
        %3165 = vmatpush1.msra.mxu0 0.0
        %3166 = vmatprep.subr.mxu0 0.0
        %3167 = vmatpush1.msra.mxu0 0.0
        %3168 = vmatprep.subr.mxu0 0.0
        %3169 = vmatpush1.msra.mxu0 0.0
        %3170 = vmatprep.subr.mxu0 0.0
        %3171 = vmatpush1.msra.mxu0 0.0
        %3172 = vmatprep.subr.mxu0 0.0
        %3173 = vmatpush1.msra.mxu0 0.0
        %3174 = vmatprep.subr.mxu0 0.0
        %3175 = vmatpush1.msra.mxu0 0.0
        %3176 = vmatprep.subr.mxu0 0.0
        %3177 = vmatpush1.msra.mxu0 0.0
        %3178 = vmatprep.subr.mxu0 0.0
        %3179 = vmatpush1.msra.mxu0 0.0
        %3180 = vmatprep.subr.mxu0 0.0
        %3181 = vmatpush1.msra.mxu0 0.0
        %3182 = vmatprep.subr.mxu0 0.0
        %3183 = vmatpush1.msra.mxu0 0.0
        %3184 = vmatprep.subr.mxu0 0.0
        %3185 = vmatpush1.msra.mxu0 0.0
        %3186 = vmatprep.subr.mxu0 0.0
        %3187 = vmatpush1.msra.mxu0 0.0
        %3188 = vmatprep.subr.mxu0 0.0
        %3189 = vmatpush1.msra.mxu0 0.0
        %3190 = vmatprep.subr.mxu0 0.0
        %3191 = vmatpush1.msra.mxu0 0.0
        %3192 = vmatprep.subr.mxu0 0.0
        %3193 = vmatpush1.msra.mxu0 0.0
        %3194 = vmatprep.subr.mxu0 0.0
        %3195 = vmatpush1.msra.mxu0 0.0
        %3196 = vmatprep.subr.mxu0 0.0
        %3197 = vmatpush1.msra.mxu0 0.0
        %3198 = vmatprep.subr.mxu0 0.0
        %3199 = vmatpush1.msra.mxu0 0.0
        %3200 = vmatprep.subr.mxu0 0.0
        %3201 = vmatpush1.msra.mxu0 0.0
        %3202 = vmatprep.subr.mxu0 0.0
        %3203 = vmatpush1.msra.mxu0 0.0
        %3204 = vmatprep.subr.mxu0 0.0
        %3205 = vmatpush1.msra.mxu0 0.0
        %3206 = vmatprep.subr.mxu0 0.0
        %3207 = vmatpush1.msra.mxu0 0.0
        %3208 = vmatprep.subr.mxu0 0.0
        %3209 = vmatpush1.msra.mxu0 0.0
        %3210 = vmatprep.subr.mxu0 0.0
        %3211 = vmatpush1.msra.mxu0 0.0
        %3212 = vmatprep.subr.mxu0 0.0
        %3213 = vmatpush1.msra.mxu0 0.0
        %3214 = vmatprep.subr.mxu0 0.0
        %3215 = vmatpush1.msra.mxu0 0.0
        %3216 = vmatprep.subr.mxu0 0.0
        %3217 = vmatpush1.msra.mxu0 0.0
        %3218 = vmatprep.subr.mxu0 0.0
        %3219 = vmatpush1.msra.mxu0 0.0
        %3220 = vmatprep.mubr.f32.mxu0 0.0
        %3221 = vmatmul.mubr.f32.gmra.mrb[0].mxu0 %v3145
        %v3222 = vpop.f32.mrb[0].mxu0
        %v3223 = vadd.f32 0.0, %v3222
        %v3224 = vpop.f32.mrb[0].mxu0
        %3225 = vmatprep.mubr.f32.mxu0 0.0
        %3226 = vmatmul.mubr.f32.gmra.mrb[0].mxu0 %v3148
        %v3227 = vpop.f32.mrb[0].mxu0
        %v3228 = vadd.f32 0.0, %v3227
        %v3229 = vpop.f32.mrb[0].mxu0
        %3230 = vmatprep.mubr.f32.mxu0 0.0
        %3231 = vmatmul.mubr.f32.gmra.mrb[0].mxu0 %v3151
        %v3232 = vpop.f32.mrb[0].mxu0
        %v3233 = vadd.f32 0.0, %v3232
        %v3234 = vpop.f32.mrb[0].mxu0
        %3235 = vmatprep.mubr.f32.mxu0 0.0
        %3236 = vmatmul.mubr.f32.gmra.mrb[0].mxu0 %v3154
        %v3237 = vpop.f32.mrb[0].mxu0
        %v3238 = vadd.f32 0.0, %v3237
        %v3239 = vpop.f32.mrb[0].mxu0
        %3240 = vdwg.mxu0
        %3245 = vrot.lane.b32.xlu0 %v1603, 8
        %v3246 = vpop.permute.xlu0 %3245
        %3247 = vrot.lane.b32.xlu0 %v1608, 8
        %v3248 = vpop.permute.xlu0 %3247
        %3249 = vrot.lane.b32.xlu0 %v1613, 8
        %v3250 = vpop.permute.xlu0 %3249
        %3251 = vrot.lane.b32.xlu0 %v1618, 8
        %v3252 = vpop.permute.xlu0 %3251
        %3261 = vrot.lane.b32.xlu0 %v1873, 16
        %v3262 = vpop.permute.xlu0 %3261
        %3263 = vrot.lane.b32.xlu0 %v1878, 16
        %v3264 = vpop.permute.xlu0 %3263
        %3265 = vrot.lane.b32.xlu0 %v1883, 16
        %v3266 = vpop.permute.xlu0 %3265
        %3267 = vrot.lane.b32.xlu0 %v1888, 16
        %v3268 = vpop.permute.xlu0 %3267
        %3277 = vrot.lane.b32.xlu0 %v2143, 24
        %v3278 = vpop.permute.xlu0 %3277
        %3279 = vrot.lane.b32.xlu0 %v2148, 24
        %v3280 = vpop.permute.xlu0 %3279
        %3281 = vrot.lane.b32.xlu0 %v2153, 24
        %v3282 = vpop.permute.xlu0 %3281
        %3283 = vrot.lane.b32.xlu0 %v2158, 24
        %v3284 = vpop.permute.xlu0 %3283
        %3293 = vrot.lane.b32.xlu0 %v2413, 32
        %v3294 = vpop.permute.xlu0 %3293
        %3295 = vrot.lane.b32.xlu0 %v2418, 32
        %v3296 = vpop.permute.xlu0 %3295
        %3297 = vrot.lane.b32.xlu0 %v2423, 32
        %v3298 = vpop.permute.xlu0 %3297
        %3299 = vrot.lane.b32.xlu0 %v2428, 32
        %v3300 = vpop.permute.xlu0 %3299
        %3309 = vrot.lane.b32.xlu0 %v2683, 40
        %v3310 = vpop.permute.xlu0 %3309
        %3311 = vrot.lane.b32.xlu0 %v2688, 40
        %v3312 = vpop.permute.xlu0 %3311
        %3313 = vrot.lane.b32.xlu0 %v2693, 40
        %v3314 = vpop.permute.xlu0 %3313
        %3315 = vrot.lane.b32.xlu0 %v2698, 40
        %v3316 = vpop.permute.xlu0 %3315
        %3325 = vrot.lane.b32.xlu0 %v2953, 48
        %v3326 = vpop.permute.xlu0 %3325
        %3327 = vrot.lane.b32.xlu0 %v2958, 48
        %v3328 = vpop.permute.xlu0 %3327
        %3329 = vrot.lane.b32.xlu0 %v2963, 48
        %v3330 = vpop.permute.xlu0 %3329
        %3331 = vrot.lane.b32.xlu0 %v2968, 48
        %v3332 = vpop.permute.xlu0 %3331
        %3341 = vrot.lane.b32.xlu0 %v3223, 56
        %v3342 = vpop.permute.xlu0 %3341
        %3343 = vrot.lane.b32.xlu0 %v3228, 56
        %v3344 = vpop.permute.xlu0 %3343
        %3345 = vrot.lane.b32.xlu0 %v3233, 56
        %v3346 = vpop.permute.xlu0 %3345
        %3347 = vrot.lane.b32.xlu0 %v3238, 56
        %v3348 = vpop.permute.xlu0 %3347
        %v3353 = vsel %vm1095, %v1329, %v3246
        %v3354 = vsel %vm1095, %v1334, %v3248
        %v3355 = vsel %vm1095, %v1339, %v3250
        %v3356 = vsel %vm1095, %v1344, %v3252
        %vm3357 = vcmask 130048
        %v3358 = vsel %vm3357, %v3353, %v3262
        %v3359 = vsel %vm3357, %v3354, %v3264
        %v3360 = vsel %vm3357, %v3355, %v3266
        %v3361 = vsel %vm3357, %v3356, %v3268
        %vm3362 = vcmask 195584
        %v3363 = vsel %vm3362, %v3358, %v3278
        %v3364 = vsel %vm3362, %v3359, %v3280
        %v3365 = vsel %vm3362, %v3360, %v3282
        %v3366 = vsel %vm3362, %v3361, %v3284
        %v3367 = vsel %vm1205, %v3363, %v3294
        %v3368 = vsel %vm1205, %v3364, %v3296
        %v3369 = vsel %vm1205, %v3365, %v3298
        %v3370 = vsel %vm1205, %v3366, %v3300
        %vm3371 = vcmask 326656
        %v3372 = vsel %vm3371, %v3367, %v3310
        %v3373 = vsel %vm3371, %v3368, %v3312
        %v3374 = vsel %vm3371, %v3369, %v3314
        %v3375 = vsel %vm3371, %v3370, %v3316
        %vm3376 = vcmask 392192
        %v3377 = vsel %vm3376, %v3372, %v3326
        %v3378 = vsel %vm3376, %v3373, %v3328
        %v3379 = vsel %vm3376, %v3374, %v3330
        %v3380 = vsel %vm3376, %v3375, %v3332
        %vm3381 = vcmask 457728
        %v3382 = vsel %vm3381, %v3377, %v3342
        %v3383 = vsel %vm3381, %v3378, %v3344
        %v3384 = vsel %vm3381, %v3379, %v3346
        %v3385 = vsel %vm3381, %v3380, %v3348
        %v3386 = vld [vmem:[#allocation11] sm:$0xff]
        %v3387 = vld [vmem:[#allocation11 + $0x8] sm:$0xff]
        %v3388 = vld [vmem:[#allocation11 + $0x10] sm:$0xff]
        %v3389 = vld [vmem:[#allocation11 + $0x18] sm:$0xff]
        %v3390 = vld [vmem:[#allocation11 + $0x20] sm:$0xff]
        %v3391 = vld [vmem:[#allocation11 + $0x28] sm:$0xff]
        %v3392 = vld [vmem:[#allocation11 + $0x30] sm:$0xff]
        %v3393 = vld [vmem:[#allocation11 + $0x38] sm:$0xff]
        %v3394 = vld [vmem:[#allocation13] sm:$0x1]
        %v3396 = vlaneseq
        %v3397 = vshrl.u32 %v3396, 7
        %v3398 = vsub.s32 0, %v3397
        %v3399 = vrot.slane %v3394, %v3398
        %v3402 = vsel %vm563, %v3382, 0
        %v3405 = vsel %vm563, %v3383, 0
        %v3408 = vsel %vm563, %v3384, 0
        %v3411 = vsel %vm563, %v3385, 0
        %3413 = vmatprep.subr.mxu0 0.0
        %3414 = vmatpush1.msra.mxu0 %v3386
        %3415 = vmatprep.subr.mxu0 0.0
        %3416 = vmatpush1.msra.mxu0 %v3387
        %3417 = vmatprep.subr.mxu0 0.0
        %3418 = vmatpush1.msra.mxu0 %v3388
        %3419 = vmatprep.subr.mxu0 0.0
        %3420 = vmatpush1.msra.mxu0 %v3389
        %3421 = vmatprep.subr.mxu0 0.0
        %3422 = vmatpush1.msra.mxu0 %v3390
        %3423 = vmatprep.subr.mxu0 0.0
        %3424 = vmatpush1.msra.mxu0 %v3391
        %3425 = vmatprep.subr.mxu0 0.0
        %3426 = vmatpush1.msra.mxu0 %v3392
        %3427 = vmatprep.subr.mxu0 0.0
        %3428 = vmatpush1.msra.mxu0 %v3393
        %3429 = vmatprep.subr.mxu0 0.0
        %3430 = vmatpush1.msra.mxu0 0.0
        %3431 = vmatprep.subr.mxu0 0.0
        %3432 = vmatpush1.msra.mxu0 0.0
        %3433 = vmatprep.subr.mxu0 0.0
        %3434 = vmatpush1.msra.mxu0 0.0
        %3435 = vmatprep.subr.mxu0 0.0
        %3436 = vmatpush1.msra.mxu0 0.0
        %3437 = vmatprep.subr.mxu0 0.0
        %3438 = vmatpush1.msra.mxu0 0.0
        %3439 = vmatprep.subr.mxu0 0.0
        %3440 = vmatpush1.msra.mxu0 0.0
        %3441 = vmatprep.subr.mxu0 0.0
        %3442 = vmatpush1.msra.mxu0 0.0
        %3443 = vmatprep.subr.mxu0 0.0
        %3444 = vmatpush1.msra.mxu0 0.0
        %3445 = vmatprep.subr.mxu0 0.0
        %3446 = vmatpush1.msra.mxu0 0.0
        %3447 = vmatprep.subr.mxu0 0.0
        %3448 = vmatpush1.msra.mxu0 0.0
        %3449 = vmatprep.subr.mxu0 0.0
        %3450 = vmatpush1.msra.mxu0 0.0
        %3451 = vmatprep.subr.mxu0 0.0
        %3452 = vmatpush1.msra.mxu0 0.0
        %3453 = vmatprep.subr.mxu0 0.0
        %3454 = vmatpush1.msra.mxu0 0.0
        %3455 = vmatprep.subr.mxu0 0.0
        %3456 = vmatpush1.msra.mxu0 0.0
        %3457 = vmatprep.subr.mxu0 0.0
        %3458 = vmatpush1.msra.mxu0 0.0
        %3459 = vmatprep.subr.mxu0 0.0
        %3460 = vmatpush1.msra.mxu0 0.0
        %3461 = vmatprep.subr.mxu0 0.0
        %3462 = vmatpush1.msra.mxu0 0.0
        %3463 = vmatprep.subr.mxu0 0.0
        %3464 = vmatpush1.msra.mxu0 0.0
        %3465 = vmatprep.subr.mxu0 0.0
        %3466 = vmatpush1.msra.mxu0 0.0
        %3467 = vmatprep.subr.mxu0 0.0
        %3468 = vmatpush1.msra.mxu0 0.0
        %3469 = vmatprep.subr.mxu0 0.0
        %3470 = vmatpush1.msra.mxu0 0.0
        %3471 = vmatprep.subr.mxu0 0.0
        %3472 = vmatpush1.msra.mxu0 0.0
        %3473 = vmatprep.subr.mxu0 0.0
        %3474 = vmatpush1.msra.mxu0 0.0
        %3475 = vmatprep.subr.mxu0 0.0
        %3476 = vmatpush1.msra.mxu0 0.0
        %3477 = vmatprep.mubr.f32.mxu0 0.0
        %3478 = vmatmul.mubr.f32.gmra.mrb[0].mxu0 %v3402
        %v3479 = vpop.f32.mrb[0].mxu0
        %v3480 = vadd.f32 %v3399, %v3479
        %v3481 = vpop.f32.mrb[0].mxu0
        %3482 = vmatprep.mubr.f32.mxu0 0.0
        %3483 = vmatmul.mubr.f32.gmra.mrb[0].mxu0 %v3405
        %v3484 = vpop.f32.mrb[0].mxu0
        %v3485 = vadd.f32 %v3399, %v3484
        %v3486 = vpop.f32.mrb[0].mxu0
        %3487 = vmatprep.mubr.f32.mxu0 0.0
        %3488 = vmatmul.mubr.f32.gmra.mrb[0].mxu0 %v3408
        %v3489 = vpop.f32.mrb[0].mxu0
        %v3490 = vadd.f32 %v3399, %v3489
        %v3491 = vpop.f32.mrb[0].mxu0
        %3492 = vmatprep.mubr.f32.mxu0 0.0
        %3493 = vmatmul.mubr.f32.gmra.mrb[0].mxu0 %v3411
        %v3494 = vpop.f32.mrb[0].mxu0
        %v3495 = vadd.f32 %v3399, %v3494
        %v3496 = vpop.f32.mrb[0].mxu0
        %3497 = vdwg.mxu0
        %3498 = vst.msk [vmem:[%s543] sm:$0xff] %vm563, %v3480
        %3499 = vst.msk [vmem:[%s543 + $0x8] sm:$0xff] %vm563, %v3485
        %3500 = vst.msk [vmem:[%s543 + $0x10] sm:$0xff] %vm563, %v3490
        %3501 = vst.msk [vmem:[%s543 + $0x18] sm:$0xff] %vm563, %v3495
        %s3502 = sand.u32 %s298, 1
        %s3503 = scalar_lea.sflag [#allocation4], %s3502
        %s3504 = sand.u32 %s298, 1
        %s3505 = smul.addr %s3504, 32
        %s3506 = scalar_lea.vmem [#allocation17], %s3505
        // Predicated region
        $region105: #{tpu_custom_call.1} parent=67 // pred_check
          %p3507 = pneg %p308
        $region106: #{tpu_custom_call.1} parent=67 // pred_check_branch
          %3509 = sbr.rel (%p3507) target = $region108
        $region107: #{tpu_custom_call.1} parent=67 // pred_region
          %s3511 = ssub.s32 512, 512
          %3512 = vsyncadd %s3503, %s3511
          %s3513 = smul.addr %s33, 4
          %s3514 = smul.addr %s3513, 128
          %s3515 = scalar_lea.hbm %s12, %s3514
          %s3516 = sshll.u32 %s3506, 4
          %s3517 = int_to_ptr.vmem [resolvable:$true] %s3516
          %3522 = dma.vmem_to_hbm [thread:$0]  %s3517, 512, %s3515, %s3503, 128, 128, 8
        $region108: #{tpu_custom_call.1} parent=67 // pred_fallthru
          _
      $region68: #{tpu_custom_call.1} parent=5 // pred_fallthru
        _
      %p3523 = scmp.le.s32.totalorder 2, %s28
      // Predicated region
      $region109: #{tpu_custom_call.1} parent=5 // pred_check
        %p3524 = pneg %p3523
      $region110: #{tpu_custom_call.1} parent=5 // pred_check_branch
        %3526 = sbr.rel (%p3524) target = $region112
      $region111: #{tpu_custom_call.1} parent=5 // pred_region
        %s3527 = ssub.s32 %s28, 2
        // Predicated region
        $region113: #{tpu_custom_call.1} parent=111 // pred_check
          %p3528 = pneg %p314
        $region114: #{tpu_custom_call.1} parent=111 // pred_check_branch
          %3530 = sbr.rel (%p3528) target = $region116
        $region115: #{tpu_custom_call.1} parent=111 // pred_region
          %s3531 = sand.u32 %s299, 1
          %s3532 = scalar_lea.sflag [#allocation4], %s3531
          %s3533 = sand.u32 %s299, 1
          %s3534 = smul.addr %s3533, 32
          %s3535 = scalar_lea.vmem [#allocation17], %s3534
          %3536 = dma.done %s3532, 512
        $region116: #{tpu_custom_call.1} parent=111 // pred_fallthru
          _
      $region112: #{tpu_custom_call.1} parent=5 // pred_fallthru
        _
    $region6: #{tpu_custom_call.1} parent=1 // loop_footer
      %s32 = sadd.s32 1, %s28
    $region7: #{tpu_custom_call.1} parent=1 // loop_footer_branch
      %27 = sbr.rel target = $region3
    $region8: #{tpu_custom_call.1} parent=1 // loop_exit
      _
    %3537 = vsyncpa [#allocation3], 1
    %s3538 = scalar_lea.sflag [#allocation3], 1
    %3539 = vsyncpa %s3538, 1
    %3540 = vsyncpa [#allocation6], 1
    %3541 = vsyncpa [#allocation9], 1
    %3542 = vsyncpa [#allocation12], 1
    %3543 = vsyncpa [#allocation15], 1
    %3544 = vsyncpa [#allocation4], 1
    %s3545 = scalar_lea.sflag [#allocation4], 1
    %3546 = vsyncpa %s3545, 1

</llo_original>
